<compile_context>
chip_gen: v7x
topology: tpu7x:2x2x1
jax: 0.10.0
libtpu: 0.0.40
codegen_flags: <defaults>
</compile_context>

<pallas_src>
import jax
import jax.numpy as jnp
import numpy as np
from jax.experimental import pallas as pl
from jax.experimental.pallas import tpu as pltpu


def convgru_kernel(hx_ref, h_ref, w1_ref, b1_ref, w2_ref, out_ref,
                   rh_pad_ref, col_ref):
    """One (batch, H-strip) grid step.

    hx_ref : (1, 1, (Hs+2)*W, 9*Cin) bf16  im2col of cat([h, x]) on the halo'd strip
    h_ref  : (1, 1, (Hs+2)*W, Ch)    f32   h on the halo'd strip (zero rows off-image)
    w1_ref : (9*Cin, Cp)             bf16  fused [z | r | q_x | 0-pad] conv weights
    b1_ref : (1, Cp)                 f32   fused [bz | br | bq | 0] biases
    w2_ref : (9*Ch, Ch)              bf16  q-conv weights acting on r*h
    out_ref: (1, Hs, W, Ch)          f32
    scratch: rh_pad_ref (Hs+2, W+2, Ch) f32 ; col_ref (Hs*W, 9*Ch) f32
    """
    Hs, W, Ch = out_ref.shape[1], out_ref.shape[2], out_ref.shape[3]

    # ---- fused z / r / q_x conv: a single MXU pass, lane-dense (rows, 128) result ----
    full = jnp.dot(hx_ref[0, 0], w1_ref[...],
                   preferred_element_type=jnp.float32) + b1_ref[...]
    sig = jax.nn.sigmoid(full)                       # z lanes [0:Ch], r lanes [Ch:2Ch]

    h_all = h_ref[0, 0]                              # ((Hs+2)*W, Ch) f32
    rh = sig[:, Ch:2 * Ch] * h_all                   # r*h ; zero on off-image halo rows

    # ---- zero-padded r*h strip in VMEM (only the two W-halo columns need zeroing;
    #      the H-halo rows arrive through h == 0 / the neighbouring strip) ----
    zcol = jnp.zeros((Hs + 2, 1, Ch), jnp.float32)
    rh_pad_ref[:, 0:1, :] = zcol
    rh_pad_ref[:, W + 1:W + 2, :] = zcol
    rh_pad_ref[:, 1:W + 1, :] = rh.reshape(Hs + 2, W, Ch)

    # ---- q-conv over r*h: fold the 9 taps into the contraction dim (in-VMEM im2col,
    #      one K = 9*Ch matmul).  The loop is pure data movement, no carried values. ----
    for t in range(9):
        dy, dx = divmod(t, 3)
        col_ref[:, t * Ch:(t + 1) * Ch] = (
            rh_pad_ref[dy:dy + Hs, dx:dx + W, :].reshape(Hs * W, Ch))
    qh = jnp.dot(col_ref[...].astype(jnp.bfloat16), w2_ref[...],
                 preferred_element_type=jnp.float32)          # (Hs*W, Ch)

    # ---- GRU blend on the Hs interior rows of the strip ----
    lo, hi = W, W + Hs * W
    z = sig[lo:hi, :Ch]
    qx = full[lo:hi, 2 * Ch:3 * Ch]                  # q_x part (+ bq, already in b1)
    h_in = h_all[lo:hi, :]
    q = jnp.tanh(qx + qh)
    h_new = h_in + z * (q - h_in)                    # == (1 - z) * h + z * q
    # TODO(synk): lane-dense (Hs, W*Ch) store needs a minor-dim-changing reshape; kept
    # the safe (Hs, W, Ch) layout (minor dim unchanged).
    out_ref[0] = h_new.reshape(Hs, W, Ch).astype(out_ref.dtype)


def convgru_base(h, x, params, *, strip_rows=8):
    """ConvGRU_base.forward.  h: (N, Ch, H, W), x: (N, Cx, H, W)  (NCHW) -> NCHW."""
    N, Ch, H, W = h.shape
    Cx = x.shape[1]
    Cin = Ch + Cx
    Hs = strip_rows if (strip_rows < H and H % strip_rows == 0) else H
    S = H // Hs
    rows = (Hs + 2) * W
    Cp = ((3 * Ch + 127) // 128) * 128               # fused Cout padded to lane width

    h_nhwc = jnp.transpose(h, (0, 2, 3, 1))
    x_nhwc = jnp.transpose(x, (0, 2, 3, 1))
    hx = jnp.concatenate([h_nhwc, x_nhwc], axis=-1)                 # (N, H, W, Cin)

    # im2col of the 3x3 / pad-1 conv, evaluated on H+2 "extended" output rows
    # (rows -1 .. H), so every H-strip carries its 1-row halo for the r*h conv.
    hx_p = jnp.pad(hx, ((0, 0), (2, 2), (1, 1), (0, 0)))
    taps = [hx_p[:, dy:dy + H + 2, dx:dx + W, :]
            for dy in range(3) for dx in range(3)]
    col = jnp.stack(taps, axis=3).reshape(N, H + 2, W, 9 * Cin)

    def strips(a):                                   # (N, H+2, W, C) -> (N, S, rows, C)
        st = jnp.stack([a[:, s * Hs:s * Hs + Hs + 2] for s in range(S)], axis=1)
        return st.reshape(N, S, rows, a.shape[-1])

    hx_col = strips(col).astype(jnp.bfloat16)                       # (N, S, rows, 9*Cin)
    h_str = strips(jnp.pad(h_nhwc, ((0, 0), (1, 1), (0, 0), (0, 0))))   # f32, zero halo

    # Fused first-conv weights [z | r | q(x-part only) | 0-pad], rows ordered (tap, cin).
    def flat(w):                                     # OIHW -> (9*Cin, Cout)
        return jnp.transpose(w, (2, 3, 1, 0)).reshape(9 * Cin, -1)
    wq_f = flat(params["wq"])
    x_row = (jnp.arange(9 * Cin) % Cin >= Ch).astype(wq_f.dtype)[:, None]
    w1 = jnp.concatenate([flat(params["wz"]), flat(params["wr"]), wq_f * x_row], axis=1)
    w1 = jnp.pad(w1, ((0, 0), (0, Cp - 3 * Ch))).astype(jnp.bfloat16)
    b1 = jnp.pad(jnp.concatenate([params["bz"], params["br"], params["bq"]]),
                 (0, Cp - 3 * Ch)).reshape(1, Cp).astype(jnp.float32)

    # q-conv weights acting on r*h (the first Ch input channels), rows ordered (tap, ch).
    w2 = jnp.transpose(params["wq"][:, :Ch], (2, 3, 1, 0)).reshape(9 * Ch, Ch)
    w2 = w2.astype(jnp.bfloat16)

    out = pl.pallas_call(
        convgru_kernel,
        out_shape=jax.ShapeDtypeStruct((N, H, W, Ch), h.dtype),
        grid_spec=pltpu.PrefetchScalarGridSpec(
            num_scalar_prefetch=0,
            grid=(N, S),
            in_specs=[
                pl.BlockSpec((1, 1, rows, 9 * Cin), lambda n, s: (n, s, 0, 0)),
                pl.BlockSpec((1, 1, rows, Ch), lambda n, s: (n, s, 0, 0)),
                # Grid-invariant weights/biases.  (pl.Buffered(1) would single-buffer
                # these; only worth it for large Ch on v7x's 64 MiB VMEM.)
                pl.BlockSpec((9 * Cin, Cp), lambda n, s: (0, 0)),
                pl.BlockSpec((1, Cp), lambda n, s: (0, 0)),
                pl.BlockSpec((9 * Ch, Ch), lambda n, s: (0, 0)),
            ],
            out_specs=pl.BlockSpec((1, Hs, W, Ch), lambda n, s: (n, s, 0, 0)),
            scratch_shapes=[
                pltpu.VMEM((Hs + 2, W + 2, Ch), jnp.float32),   # padded r*h strip
                pltpu.VMEM((Hs * W, 9 * Ch), jnp.float32),      # r*h im2col buffer
            ],
        ),
        compiler_params=pltpu.CompilerParams(
            dimension_semantics=("parallel", "parallel")),
    )(hx_col, h_str, w1, b1, w2)

    return jnp.transpose(out, (0, 3, 1, 2))          # NHWC -> NCHW


def init_params(key, hidden_dim, input_dim):
    """Deterministic init mimicking torch Conv2d default (uniform, fan-in based)."""
    cin = hidden_dim + input_dim
    bound = 1.0 / float(np.sqrt(cin * 9))
    ks = jax.random.split(key, 6)
    u = lambda k, s: jax.random.uniform(k, s, jnp.float32, -bound, bound)
    return {
        "wz": u(ks[0], (hidden_dim, cin, 3, 3)), "bz": u(ks[1], (hidden_dim,)),
        "wr": u(ks[2], (hidden_dim, cin, 3, 3)), "br": u(ks[3], (hidden_dim,)),
        "wq": u(ks[4], (hidden_dim, cin, 3, 3)), "bq": u(ks[5], (hidden_dim,)),
    }


def ref_forward(h, x, params):
    """Pure-JAX reference mirroring the PyTorch module (NCHW / OIHW)."""
    def conv(inp, w, b):
        out = jax.lax.conv_general_dilated(
            inp, w, window_strides=(1, 1), padding=((1, 1), (1, 1)),
            dimension_numbers=("NCHW", "OIHW", "NCHW"))
        return out + b[None, :, None, None]

    hx = jnp.concatenate([h, x], axis=1)
    z = jax.nn.sigmoid(conv(hx, params["wz"], params["bz"]))
    r = jax.nn.sigmoid(conv(hx, params["wr"], params["br"]))
    q = jnp.tanh(conv(jnp.concatenate([r * h, x], axis=1), params["wq"], params["bq"]))
    return (1.0 - z) * h + z * q


if __name__ == "__main__":
    key = jax.random.PRNGKey(0)
    N, Ch, Cx, H, W = 2, 32, 64, 16, 16   # batch=2, hidden_dim=32, input_dim=64, 16x16
    kp, kh, kx = jax.random.split(key, 3)

    params = init_params(kp, Ch, Cx)
    h = jax.random.normal(kh, (N, Ch, H, W), jnp.float32)
    x = jax.random.normal(kx, (N, Cx, H, W), jnp.float32)

    out = jax.block_until_ready(jax.jit(convgru_base)(h, x, params))

    ref = ref_forward(h, x, params)
    # bf16 MXU operands with f32 accumulation -> looser tolerance than f32 reference.
    np.testing.assert_allclose(np.asarray(out), np.asarray(ref), atol=5e-2, rtol=5e-2)

    print("KERNEL_OK")
</pallas_src>

<mosaic_0001>
module attributes {stable_mosaic.version = 11 : i64} {
  func.func @convgru_kernel(%arg0: i32, %arg1: i32, %arg2: memref<1x1x160x864xbf16, #tpu.memory_space<vmem>>, %arg3: memref<1x1x160x32xf32, #tpu.memory_space<vmem>>, %arg4: memref<864x128xbf16, #tpu.memory_space<vmem>>, %arg5: memref<1x128xf32, #tpu.memory_space<vmem>>, %arg6: memref<288x32xbf16, #tpu.memory_space<vmem>>, %arg7: memref<1x8x16x32xf32, #tpu.memory_space<vmem>>, %arg8: memref<10x18x32xf32, #tpu.memory_space<vmem>>, %arg9: memref<128x288xf32, #tpu.memory_space<vmem>>) attributes {dimension_semantics = [#tpu.dimension_semantics<parallel>, #tpu.dimension_semantics<parallel>], iteration_bounds = array<i64: 2, 2>, scalar_prefetch = 0 : i64, scratch_operands = 2 : i64, tpu.core_type = #tpu.core_type<tc>, window_params = [{transform_indices = @transform_0, window_bounds = array<i64: 1, 1, 160, 864>}, {transform_indices = @transform_1, window_bounds = array<i64: 1, 1, 160, 32>}, {pipeline_mode = #tpu.pipeline_mode<synchronous>, transform_indices = @transform_2, window_bounds = array<i64: 864, 128>}, {pipeline_mode = #tpu.pipeline_mode<synchronous>, transform_indices = @transform_3, window_bounds = array<i64: 1, 128>}, {pipeline_mode = #tpu.pipeline_mode<synchronous>, transform_indices = @transform_4, window_bounds = array<i64: 288, 32>}, {transform_indices = @transform_5, window_bounds = array<i64: 1, 8, 16, 32>}]} {
    %c0 = arith.constant 0 : index
    %c0_0 = arith.constant 0 : index
    %c0_1 = arith.constant 0 : index
    %c0_2 = arith.constant 0 : index
    %0 = vector.load %arg2[%c0, %c0_0, %c0_1, %c0_2] : memref<1x1x160x864xbf16, #tpu.memory_space<vmem>>, vector<1x1x160x864xbf16>
    %1 = vector.shape_cast %0 : vector<1x1x160x864xbf16> to vector<160x864xbf16>
    %c0_3 = arith.constant 0 : index
    %c0_4 = arith.constant 0 : index
    %2 = vector.load %arg4[%c0_3, %c0_4] : memref<864x128xbf16, #tpu.memory_space<vmem>>, vector<864x128xbf16>
    %cst = arith.constant dense<0.000000e+00> : vector<160x128xf32>
    %3 = tpu.matmul %1, %2, %cst {dimension_numbers = #tpu.dot_dimension_numbers<[1], [0], [0], [1], [0, 0, 1, 1], [], []>} : vector<160x864xbf16>, vector<864x128xbf16>, vector<160x128xf32> -> vector<160x128xf32>
    %c0_5 = arith.constant 0 : index
    %c0_6 = arith.constant 0 : index
    %4 = vector.load %arg5[%c0_5, %c0_6] : memref<1x128xf32, #tpu.memory_space<vmem>>, vector<1x128xf32>
    %5 = vector.broadcast %4 : vector<1x128xf32> to vector<160x128xf32>
    %6 = arith.addf %3, %5 : vector<160x128xf32>
    %7 = arith.negf %6 : vector<160x128xf32>
    %8 = math.exp %7 : vector<160x128xf32>
    %cst_7 = arith.constant 1.000000e+00 : f32
    %9 = vector.broadcast %cst_7 : f32 to vector<160x128xf32>
    %10 = arith.addf %9, %8 : vector<160x128xf32>
    %11 = arith.divf %9, %10 : vector<160x128xf32>
    %c0_8 = arith.constant 0 : index
    %c0_9 = arith.constant 0 : index
    %c0_10 = arith.constant 0 : index
    %c0_11 = arith.constant 0 : index
    %12 = vector.load %arg3[%c0_8, %c0_9, %c0_10, %c0_11] : memref<1x1x160x32xf32, #tpu.memory_space<vmem>>, vector<1x1x160x32xf32>
    %13 = vector.shape_cast %12 : vector<1x1x160x32xf32> to vector<160x32xf32>
    %14 = vector.extract_strided_slice %11 {offsets = [0, 32], sizes = [160, 32], strides = [1, 1]} : vector<160x128xf32> to vector<160x32xf32>
    %15 = arith.mulf %14, %13 : vector<160x32xf32>
    %cst_12 = arith.constant 0.000000e+00 : f32
    %16 = vector.broadcast %cst_12 : f32 to vector<10x1x32xf32>
    %c0_13 = arith.constant 0 : index
    %c0_14 = arith.constant 0 : index
    %c0_15 = arith.constant 0 : index
    %17 = vector.load %arg8[%c0_13, %c0_14, %c0_15] : memref<10x18x32xf32, #tpu.memory_space<vmem>>, vector<10x1x32xf32>
    tpu.vector_store %arg8[%c0_13, %c0_14, %c0_15], %16 {strides = array<i32>} : memref<10x18x32xf32, #tpu.memory_space<vmem>>, vector<10x1x32xf32>,
    %c0_16 = arith.constant 0 : index
    %c17 = arith.constant 17 : index
    %c0_17 = arith.constant 0 : index
    %18 = vector.load %arg8[%c0_16, %c17, %c0_17] : memref<10x18x32xf32, #tpu.memory_space<vmem>>, vector<10x1x32xf32>
    tpu.vector_store %arg8[%c0_16, %c17, %c0_17], %16 {strides = array<i32>} : memref<10x18x32xf32, #tpu.memory_space<vmem>>, vector<10x1x32xf32>,
    %19 = vector.shape_cast %15 : vector<160x32xf32> to vector<10x16x32xf32>
    %c0_18 = arith.constant 0 : index
    %c1 = arith.constant 1 : index
    %c0_19 = arith.constant 0 : index
    %20 = vector.load %arg8[%c0_18, %c1, %c0_19] : memref<10x18x32xf32, #tpu.memory_space<vmem>>, vector<10x16x32xf32>
    tpu.vector_store %arg8[%c0_18, %c1, %c0_19], %19 {strides = array<i32>} : memref<10x18x32xf32, #tpu.memory_space<vmem>>, vector<10x16x32xf32>,
    %c0_20 = arith.constant 0 : index
    %c0_21 = arith.constant 0 : index
    %c0_22 = arith.constant 0 : index
    %21 = vector.load %arg8[%c0_20, %c0_21, %c0_22] : memref<10x18x32xf32, #tpu.memory_space<vmem>>, vector<8x16x32xf32>
    %22 = vector.shape_cast %21 : vector<8x16x32xf32> to vector<128x32xf32>
    %c0_23 = arith.constant 0 : index
    %c0_24 = arith.constant 0 : index
    %23 = vector.load %arg9[%c0_23, %c0_24] : memref<128x288xf32, #tpu.memory_space<vmem>>, vector<128x32xf32>
    tpu.vector_store %arg9[%c0_23, %c0_24], %22 {strides = array<i32>} : memref<128x288xf32, #tpu.memory_space<vmem>>, vector<128x32xf32>,
    %c0_25 = arith.constant 0 : index
    %c1_26 = arith.constant 1 : index
    %c0_27 = arith.constant 0 : index
    %24 = vector.load %arg8[%c0_25, %c1_26, %c0_27] : memref<10x18x32xf32, #tpu.memory_space<vmem>>, vector<8x16x32xf32>
    %25 = vector.shape_cast %24 : vector<8x16x32xf32> to vector<128x32xf32>
    %c0_28 = arith.constant 0 : index
    %c32 = arith.constant 32 : index
    %26 = vector.load %arg9[%c0_28, %c32] : memref<128x288xf32, #tpu.memory_space<vmem>>, vector<128x32xf32>
    tpu.vector_store %arg9[%c0_28, %c32], %25 {strides = array<i32>} : memref<128x288xf32, #tpu.memory_space<vmem>>, vector<128x32xf32>,
    %c0_29 = arith.constant 0 : index
    %c2 = arith.constant 2 : index
    %c0_30 = arith.constant 0 : index
    %27 = vector.load %arg8[%c0_29, %c2, %c0_30] : memref<10x18x32xf32, #tpu.memory_space<vmem>>, vector<8x16x32xf32>
    %28 = vector.shape_cast %27 : vector<8x16x32xf32> to vector<128x32xf32>
    %c0_31 = arith.constant 0 : index
    %c64 = arith.constant 64 : index
    %29 = vector.load %arg9[%c0_31, %c64] : memref<128x288xf32, #tpu.memory_space<vmem>>, vector<128x32xf32>
    tpu.vector_store %arg9[%c0_31, %c64], %28 {strides = array<i32>} : memref<128x288xf32, #tpu.memory_space<vmem>>, vector<128x32xf32>,
    %c1_32 = arith.constant 1 : index
    %c0_33 = arith.constant 0 : index
    %c0_34 = arith.constant 0 : index
    %30 = vector.load %arg8[%c1_32, %c0_33, %c0_34] : memref<10x18x32xf32, #tpu.memory_space<vmem>>, vector<8x16x32xf32>
    %31 = vector.shape_cast %30 : vector<8x16x32xf32> to vector<128x32xf32>
    %c0_35 = arith.constant 0 : index
    %c96 = arith.constant 96 : index
    %32 = vector.load %arg9[%c0_35, %c96] : memref<128x288xf32, #tpu.memory_space<vmem>>, vector<128x32xf32>
    tpu.vector_store %arg9[%c0_35, %c96], %31 {strides = array<i32>} : memref<128x288xf32, #tpu.memory_space<vmem>>, vector<128x32xf32>,
    %c1_36 = arith.constant 1 : index
    %c1_37 = arith.constant 1 : index
    %c0_38 = arith.constant 0 : index
    %33 = vector.load %arg8[%c1_36, %c1_37, %c0_38] : memref<10x18x32xf32, #tpu.memory_space<vmem>>, vector<8x16x32xf32>
    %34 = vector.shape_cast %33 : vector<8x16x32xf32> to vector<128x32xf32>
    %c0_39 = arith.constant 0 : index
    %c128 = arith.constant 128 : index
    %35 = vector.load %arg9[%c0_39, %c128] : memref<128x288xf32, #tpu.memory_space<vmem>>, vector<128x32xf32>
    tpu.vector_store %arg9[%c0_39, %c128], %34 {strides = array<i32>} : memref<128x288xf32, #tpu.memory_space<vmem>>, vector<128x32xf32>,
    %c1_40 = arith.constant 1 : index
    %c2_41 = arith.constant 2 : index
    %c0_42 = arith.constant 0 : index
    %36 = vector.load %arg8[%c1_40, %c2_41, %c0_42] : memref<10x18x32xf32, #tpu.memory_space<vmem>>, vector<8x16x32xf32>
    %37 = vector.shape_cast %36 : vector<8x16x32xf32> to vector<128x32xf32>
    %c0_43 = arith.constant 0 : index
    %c160 = arith.constant 160 : index
    %38 = vector.load %arg9[%c0_43, %c160] : memref<128x288xf32, #tpu.memory_space<vmem>>, vector<128x32xf32>
    tpu.vector_store %arg9[%c0_43, %c160], %37 {strides = array<i32>} : memref<128x288xf32, #tpu.memory_space<vmem>>, vector<128x32xf32>,
    %c2_44 = arith.constant 2 : index
    %c0_45 = arith.constant 0 : index
    %c0_46 = arith.constant 0 : index
    %39 = vector.load %arg8[%c2_44, %c0_45, %c0_46] : memref<10x18x32xf32, #tpu.memory_space<vmem>>, vector<8x16x32xf32>
    %40 = vector.shape_cast %39 : vector<8x16x32xf32> to vector<128x32xf32>
    %c0_47 = arith.constant 0 : index
    %c192 = arith.constant 192 : index
    %41 = vector.load %arg9[%c0_47, %c192] : memref<128x288xf32, #tpu.memory_space<vmem>>, vector<128x32xf32>
    tpu.vector_store %arg9[%c0_47, %c192], %40 {strides = array<i32>} : memref<128x288xf32, #tpu.memory_space<vmem>>, vector<128x32xf32>,
    %c2_48 = arith.constant 2 : index
    %c1_49 = arith.constant 1 : index
    %c0_50 = arith.constant 0 : index
    %42 = vector.load %arg8[%c2_48, %c1_49, %c0_50] : memref<10x18x32xf32, #tpu.memory_space<vmem>>, vector<8x16x32xf32>
    %43 = vector.shape_cast %42 : vector<8x16x32xf32> to vector<128x32xf32>
    %c0_51 = arith.constant 0 : index
    %c224 = arith.constant 224 : index
    %44 = vector.load %arg9[%c0_51, %c224] : memref<128x288xf32, #tpu.memory_space<vmem>>, vector<128x32xf32>
    tpu.vector_store %arg9[%c0_51, %c224], %43 {strides = array<i32>} : memref<128x288xf32, #tpu.memory_space<vmem>>, vector<128x32xf32>,
    %c2_52 = arith.constant 2 : index
    %c2_53 = arith.constant 2 : index
    %c0_54 = arith.constant 0 : index
    %45 = vector.load %arg8[%c2_52, %c2_53, %c0_54] : memref<10x18x32xf32, #tpu.memory_space<vmem>>, vector<8x16x32xf32>
    %46 = vector.shape_cast %45 : vector<8x16x32xf32> to vector<128x32xf32>
    %c0_55 = arith.constant 0 : index
    %c256 = arith.constant 256 : index
    %47 = vector.load %arg9[%c0_55, %c256] : memref<128x288xf32, #tpu.memory_space<vmem>>, vector<128x32xf32>
    tpu.vector_store %arg9[%c0_55, %c256], %46 {strides = array<i32>} : memref<128x288xf32, #tpu.memory_space<vmem>>, vector<128x32xf32>,
    %c0_56 = arith.constant 0 : index
    %c0_57 = arith.constant 0 : index
    %48 = vector.load %arg9[%c0_56, %c0_57] : memref<128x288xf32, #tpu.memory_space<vmem>>, vector<128x288xf32>
    %49 = arith.truncf %48 : vector<128x288xf32> to vector<128x288xbf16>
    %c0_58 = arith.constant 0 : index
    %c0_59 = arith.constant 0 : index
    %50 = vector.load %arg6[%c0_58, %c0_59] : memref<288x32xbf16, #tpu.memory_space<vmem>>, vector<288x32xbf16>
    %cst_60 = arith.constant dense<0.000000e+00> : vector<128x32xf32>
    %51 = tpu.matmul %49, %50, %cst_60 {dimension_numbers = #tpu.dot_dimension_numbers<[1], [0], [0], [1], [0, 0, 1, 1], [], []>} : vector<128x288xbf16>, vector<288x32xbf16>, vector<128x32xf32> -> vector<128x32xf32>
    %52 = vector.extract_strided_slice %11 {offsets = [16, 0], sizes = [128, 32], strides = [1, 1]} : vector<160x128xf32> to vector<128x32xf32>
    %53 = vector.extract_strided_slice %6 {offsets = [16, 64], sizes = [128, 32], strides = [1, 1]} : vector<160x128xf32> to vector<128x32xf32>
    %54 = vector.extract_strided_slice %13 {offsets = [16, 0], sizes = [128, 32], strides = [1, 1]} : vector<160x32xf32> to vector<128x32xf32>
    %55 = arith.addf %53, %51 : vector<128x32xf32>
    %56 = math.tanh %55 : vector<128x32xf32>
    %57 = arith.subf %56, %54 : vector<128x32xf32>
    %58 = arith.mulf %52, %57 : vector<128x32xf32>
    %59 = arith.addf %54, %58 : vector<128x32xf32>
    %60 = vector.shape_cast %59 : vector<128x32xf32> to vector<8x16x32xf32>
    %c0_61 = arith.constant 0 : index
    %c0_62 = arith.constant 0 : index
    %c0_63 = arith.constant 0 : index
    %c0_64 = arith.constant 0 : index
    %61 = vector.load %arg7[%c0_61, %c0_62, %c0_63, %c0_64] : memref<1x8x16x32xf32, #tpu.memory_space<vmem>>, vector<1x8x16x32xf32>
    %62 = vector.shape_cast %61 : vector<1x8x16x32xf32> to vector<8x16x32xf32>
    %63 = vector.shape_cast %60 : vector<8x16x32xf32> to vector<1x8x16x32xf32>
    tpu.vector_store %arg7[%c0_61, %c0_62, %c0_63, %c0_64], %63 {strides = array<i32>} : memref<1x8x16x32xf32, #tpu.memory_space<vmem>>, vector<1x8x16x32xf32>,
    return
  }
  func.func @transform_0(%arg0: i32, %arg1: i32) -> (i32, i32, i32, i32) {
    %c0_i32 = arith.constant 0 : i32
    %c0_i32_0 = arith.constant 0 : i32
    %c0_i32_1 = arith.constant 0 : i32
    return %arg0, %arg1, %c0_i32, %c0_i32_0 : i32, i32, i32, i32
  }
  func.func @transform_1(%arg0: i32, %arg1: i32) -> (i32, i32, i32, i32) {
    %c0_i32 = arith.constant 0 : i32
    %c0_i32_0 = arith.constant 0 : i32
    %c0_i32_1 = arith.constant 0 : i32
    return %arg0, %arg1, %c0_i32, %c0_i32_0 : i32, i32, i32, i32
  }
  func.func @transform_2(%arg0: i32, %arg1: i32) -> (i32, i32) {
    %c0_i32 = arith.constant 0 : i32
    %c0_i32_0 = arith.constant 0 : i32
    %c0_i32_1 = arith.constant 0 : i32
    return %c0_i32, %c0_i32_0 : i32, i32
  }
  func.func @transform_3(%arg0: i32, %arg1: i32) -> (i32, i32) {
    %c0_i32 = arith.constant 0 : i32
    %c0_i32_0 = arith.constant 0 : i32
    %c0_i32_1 = arith.constant 0 : i32
    return %c0_i32, %c0_i32_0 : i32, i32
  }
  func.func @transform_4(%arg0: i32, %arg1: i32) -> (i32, i32) {
    %c0_i32 = arith.constant 0 : i32
    %c0_i32_0 = arith.constant 0 : i32
    %c0_i32_1 = arith.constant 0 : i32
    return %c0_i32, %c0_i32_0 : i32, i32
  }
  func.func @transform_5(%arg0: i32, %arg1: i32) -> (i32, i32, i32, i32) {
    %c0_i32 = arith.constant 0 : i32
    %c0_i32_0 = arith.constant 0 : i32
    %c0_i32_1 = arith.constant 0 : i32
    return %arg0, %arg1, %c0_i32, %c0_i32_0 : i32, i32, i32, i32
  }
}

</mosaic_0001>

<llo_original>
// kernel: convgru_base.1
$region0: #{convgru_base.1}
  #allocation0 [shape = 'u32[]', space=smem, size = 0x4, offset = 0x4, fixed_abs, tag = 'smem constant byte address 0x4 - core index']
  #allocation1 [shape = 'u32[144,128]{1,0:T(1,128)}', space=vmem, size = 0x12000, scoped, tag = 'internal scratch']
  #allocation2 [shape = 'f32[10,18,32]{2,1,0:T(8,128)}', space=vmem, size = 0x1e000, scoped, tag = 'scratch operand']
  #allocation3 [shape = 'f32[128,288]{1,0:T(8,128)}', space=vmem, size = 0x30000, scoped, tag = 'scratch operand']
  %s0 = inlined_call_operand.vmem [shape: bf16[2,2,160,864], index: 0, kind: input, shape index: {}]
  %s1 = inlined_call_operand.vmem [shape: f32[2,2,160,32], index: 1, kind: input, shape index: {}]
  %s2 = inlined_call_operand.vmem [shape: bf16[864,128], index: 2, kind: input, shape index: {}]
  %s3 = inlined_call_operand.vmem [shape: f32[1,128], index: 3, kind: input, shape index: {}]
  %s4 = inlined_call_operand.vmem [shape: bf16[288,32], index: 4, kind: input, shape index: {}]
  %s5 = inlined_call_operand.hbm [shape: f32[2,16,16,32], index: 5, kind: output, shape index: {}]
  %s6 = sld [smem:[#allocation0]]
  $region53: #{convgru_base.1} parent=0
    _
  %s8 = ssub.s32 1, %s6
  %s9 = scalar_select 0, %s8, %s6
  $region1: #{convgru_base.1} parent=0
    #allocation4 [shape = 'u8[131072]{0}', space=vmem, size = 0x20000, scoped, tag = 'output window, operand 0']
    #allocation5 [shape = 's32[2]{0}', space=sflag, size = 0x8, scoped, tag = 'scoped memory for convgru_base.1']
    %10 = vsyncpa [#allocation5], 0
    %s11 = scalar_lea.sflag [#allocation5], 1
    %12 = vsyncpa %s11, 0
    loop: start=0, step=1, limit=6
    $region2: #{convgru_base.1} parent=1 // loop_pre_header
      _
    $region3: #{convgru_base.1} parent=1 // loop_header
      %s14 = sphi 0, %s18
      %p15 = scmp.ge.s32.totalorder %s14, 6
      %s21 = sphi 0, %s33
      %s22 = sphi 0, %s29
      %s23 = sphi 0, %s21
      %s24 = sphi 0, %s22
      %s25 = sphi 0, %s23
      %s26 = sphi 0, %s24
      %s38 = sphi 0, %s40
      %s41 = sphi 0, %s38
      %s42 = sphi 0, %s41
      %s58 = sphi 0, %s42
      %s66 = sphi 0, %s68
      %s69 = sphi 0, %s66
      %s70 = sphi 0, %s69
      %s86 = sphi 0, %s70
      %s90 = sphi 0, %s90
      %s92 = sphi 0, %s90
      %s93 = sphi 0, %s92
      %s107 = sphi 0, %s93
      %s111 = sphi 0, %s111
      %s113 = sphi 0, %s111
      %s114 = sphi 0, %s113
      %s128 = sphi 0, %s114
      %s132 = sphi 0, %s132
      %s134 = sphi 0, %s132
      %s135 = sphi 0, %s134
      %s149 = sphi 0, %s135
      %s157 = sphi 0, %s159
      %s160 = sphi 0, %s157
      %s161 = sphi 0, %s160
      %s177 = sphi 0, %s161
    $region4: #{convgru_base.1} parent=1 // loop_header_branch
      %17 = sbr.rel (%p15) target = $region8
    $region5: #{convgru_base.1} parent=1 // loop_body
      %s19 = ssub.s32 %s14, 1
      %s20 = ssub.s32 %s14, 2
      %s27 = sadd.s32 1, %s22
      %p28 = scmp.ge.s32.totalorder %s27, 2
      %s29 = scalar_select %p28, 0, %s27
      %s30 = sadd.s32 1, %s21
      %s31 = scalar_select %p28, %s30, %s21
      %p32 = scmp.ge.s32.totalorder %s31, 2
      %s33 = scalar_select %p32, 0, %s31
      %s34 = ssub.s32 %s21, %s33
      %s35 = ssub.s32 %s22, %s29
      %s36 = sor.u32 %s34, %s35
      %p37 = scmp.eq.s32.totalorder %s36, 0
      %s39 = sadd.s32 %s38, 1
      %s40 = scalar_select %p37, %s38, %s39
      %p43 = pneg %p37
      %p44 = scmp.eq.s32.totalorder %s14, 3
      %p45 = por %p43, %p44
      %p46 = scmp.ne.s32.totalorder %s38, %s41
      %p47 = scmp.eq.s32.totalorder %s14, 0
      %p48 = por %p46, %p47
      %p49 = scmp.ne.s32.totalorder %s38, %s41
      %p50 = scmp.eq.s32.totalorder %s19, 3
      %p51 = por %p49, %p50
      %p52 = scmp.ne.s32.totalorder %s41, %s42
      %p53 = scmp.eq.s32.totalorder %s19, 0
      %p54 = por %p52, %p53
      %p55 = scmp.ne.s32.totalorder %s41, %s42
      %p56 = scmp.eq.s32.totalorder %s20, 3
      %p57 = por %p55, %p56
      %p59 = scmp.ne.s32.totalorder %s42, %s58
      %p60 = scmp.eq.s32.totalorder %s20, 0
      %p61 = por %p59, %p60
      %s62 = ssub.s32 %s21, %s33
      %s63 = ssub.s32 %s22, %s29
      %s64 = sor.u32 %s62, %s63
      %p65 = scmp.eq.s32.totalorder %s64, 0
      %s67 = sadd.s32 %s66, 1
      %s68 = scalar_select %p65, %s66, %s67
      %p71 = pneg %p65
      %p72 = scmp.eq.s32.totalorder %s14, 3
      %p73 = por %p71, %p72
      %p74 = scmp.ne.s32.totalorder %s66, %s69
      %p75 = scmp.eq.s32.totalorder %s14, 0
      %p76 = por %p74, %p75
      %p77 = scmp.ne.s32.totalorder %s66, %s69
      %p78 = scmp.eq.s32.totalorder %s19, 3
      %p79 = por %p77, %p78
      %p80 = scmp.ne.s32.totalorder %s69, %s70
      %p81 = scmp.eq.s32.totalorder %s19, 0
      %p82 = por %p80, %p81
      %p83 = scmp.ne.s32.totalorder %s69, %s70
      %p84 = scmp.eq.s32.totalorder %s20, 3
      %p85 = por %p83, %p84
      %p87 = scmp.ne.s32.totalorder %s70, %s86
      %p88 = scmp.eq.s32.totalorder %s20, 0
      %p89 = por %p87, %p88
      %s91 = sadd.s32 %s90, 1
      %p94 = scmp.eq.s32.totalorder %s14, 3
      %p95 = scmp.ne.s32.totalorder %s90, %s92
      %p96 = scmp.eq.s32.totalorder %s14, 0
      %p97 = por %p95, %p96
      %p98 = scmp.ne.s32.totalorder %s90, %s92
      %p99 = scmp.eq.s32.totalorder %s19, 3
      %p100 = por %p98, %p99
      %p101 = scmp.ne.s32.totalorder %s92, %s93
      %p102 = scmp.eq.s32.totalorder %s19, 0
      %p103 = por %p101, %p102
      %p104 = scmp.ne.s32.totalorder %s92, %s93
      %p105 = scmp.eq.s32.totalorder %s20, 3
      %p106 = por %p104, %p105
      %p108 = scmp.ne.s32.totalorder %s93, %s107
      %p109 = scmp.eq.s32.totalorder %s20, 0
      %p110 = por %p108, %p109
      %s112 = sadd.s32 %s111, 1
      %p115 = scmp.eq.s32.totalorder %s14, 3
      %p116 = scmp.ne.s32.totalorder %s111, %s113
      %p117 = scmp.eq.s32.totalorder %s14, 0
      %p118 = por %p116, %p117
      %p119 = scmp.ne.s32.totalorder %s111, %s113
      %p120 = scmp.eq.s32.totalorder %s19, 3
      %p121 = por %p119, %p120
      %p122 = scmp.ne.s32.totalorder %s113, %s114
      %p123 = scmp.eq.s32.totalorder %s19, 0
      %p124 = por %p122, %p123
      %p125 = scmp.ne.s32.totalorder %s113, %s114
      %p126 = scmp.eq.s32.totalorder %s20, 3
      %p127 = por %p125, %p126
      %p129 = scmp.ne.s32.totalorder %s114, %s128
      %p130 = scmp.eq.s32.totalorder %s20, 0
      %p131 = por %p129, %p130
      %s133 = sadd.s32 %s132, 1
      %p136 = scmp.eq.s32.totalorder %s14, 3
      %p137 = scmp.ne.s32.totalorder %s132, %s134
      %p138 = scmp.eq.s32.totalorder %s14, 0
      %p139 = por %p137, %p138
      %p140 = scmp.ne.s32.totalorder %s132, %s134
      %p141 = scmp.eq.s32.totalorder %s19, 3
      %p142 = por %p140, %p141
      %p143 = scmp.ne.s32.totalorder %s134, %s135
      %p144 = scmp.eq.s32.totalorder %s19, 0
      %p145 = por %p143, %p144
      %p146 = scmp.ne.s32.totalorder %s134, %s135
      %p147 = scmp.eq.s32.totalorder %s20, 3
      %p148 = por %p146, %p147
      %p150 = scmp.ne.s32.totalorder %s135, %s149
      %p151 = scmp.eq.s32.totalorder %s20, 0
      %p152 = por %p150, %p151
      %s153 = ssub.s32 %s21, %s33
      %s154 = ssub.s32 %s22, %s29
      %s155 = sor.u32 %s153, %s154
      %p156 = scmp.eq.s32.totalorder %s155, 0
      %s158 = sadd.s32 %s157, 1
      %s159 = scalar_select %p156, %s157, %s158
      %p162 = pneg %p156
      %p163 = scmp.eq.s32.totalorder %s14, 3
      %p164 = por %p162, %p163
      %p165 = scmp.ne.s32.totalorder %s157, %s160
      %p166 = scmp.eq.s32.totalorder %s14, 0
      %p167 = por %p165, %p166
      %p168 = scmp.ne.s32.totalorder %s157, %s160
      %p169 = scmp.eq.s32.totalorder %s19, 3
      %p170 = por %p168, %p169
      %p171 = scmp.ne.s32.totalorder %s160, %s161
      %p172 = scmp.eq.s32.totalorder %s19, 0
      %p173 = por %p171, %p172
      %p174 = scmp.ne.s32.totalorder %s160, %s161
      %p175 = scmp.eq.s32.totalorder %s20, 3
      %p176 = por %p174, %p175
      %p178 = scmp.ne.s32.totalorder %s161, %s177
      %p179 = scmp.eq.s32.totalorder %s20, 0
      %p180 = por %p178, %p179
      %p181 = scmp.le.s32.totalorder 1, %s14
      %p182 = scmp.lt.s32.totalorder %s14, 5
      %p183 = pnand %p181, %p182
      %p184 = pneg %p183
      // Predicated region
      $region9: #{convgru_base.1} parent=5 // pred_check
        _
      $region10: #{convgru_base.1} parent=5 // pred_check_branch
        %186 = sbr.rel (%p183) target = $region12
      $region11: #{convgru_base.1} parent=5 // pred_region
        %s187 = ssub.s32 %s14, 1
        // Predicated region
        $region13: #{convgru_base.1} parent=11 // pred_check
          %p188 = pneg %p103
        $region14: #{convgru_base.1} parent=11 // pred_check_branch
          %190 = sbr.rel (%p188) target = $region16
        $region15: #{convgru_base.1} parent=11 // pred_region
          _
        $region16: #{convgru_base.1} parent=11 // pred_fallthru
          _
        // Predicated region
        $region17: #{convgru_base.1} parent=11 // pred_check
          %p191 = pneg %p124
        $region18: #{convgru_base.1} parent=11 // pred_check_branch
          %193 = sbr.rel (%p191) target = $region20
        $region19: #{convgru_base.1} parent=11 // pred_region
          _
        $region20: #{convgru_base.1} parent=11 // pred_fallthru
          _
        // Predicated region
        $region21: #{convgru_base.1} parent=11 // pred_check
          %p194 = pneg %p145
        $region22: #{convgru_base.1} parent=11 // pred_check_branch
          %196 = sbr.rel (%p194) target = $region24
        $region23: #{convgru_base.1} parent=11 // pred_region
          _
        $region24: #{convgru_base.1} parent=11 // pred_fallthru
          _
      $region12: #{convgru_base.1} parent=5 // pred_fallthru
        _
      %p197 = scmp.lt.s32.totalorder %s14, 4
      // Predicated region
      $region25: #{convgru_base.1} parent=5 // pred_check
        %p198 = pneg %p197
      $region26: #{convgru_base.1} parent=5 // pred_check_branch
        %200 = sbr.rel (%p198) target = $region28
      $region27: #{convgru_base.1} parent=5 // pred_region
        // Predicated region
        $region29: #{convgru_base.1} parent=27 // pred_check
          %p201 = pneg %p48
        $region30: #{convgru_base.1} parent=27 // pred_check_branch
          %203 = sbr.rel (%p201) target = $region32
        $region31: #{convgru_base.1} parent=27 // pred_region
          %p204 = scmp.lt.s32.totalorder %s21, 1
          %s205 = scalar_select %p204, %s21, 1
          %p206 = scmp.lt.s32.totalorder %s22, 1
          %s207 = scalar_select %p206, %s22, 1
          %s208 = smul.addr %s207, 140
          %s209 = smul.addr %s205, 280
          %s210 = sadd.s32 %s208, %s209
          %s211 = smul.addr %s210, 4
          %s212 = scalar_lea.vmem %s0, %s211
        $region32: #{convgru_base.1} parent=27 // pred_fallthru
          _
        // Predicated region
        $region33: #{convgru_base.1} parent=27 // pred_check
          %p213 = pneg %p76
        $region34: #{convgru_base.1} parent=27 // pred_check_branch
          %215 = sbr.rel (%p213) target = $region36
        $region35: #{convgru_base.1} parent=27 // pred_region
          %p216 = scmp.lt.s32.totalorder %s21, 1
          %s217 = scalar_select %p216, %s21, 1
          %p218 = scmp.lt.s32.totalorder %s22, 1
          %s219 = scalar_select %p218, %s22, 1
          %s220 = smul.addr %s219, 20
          %s221 = smul.addr %s217, 40
          %s222 = sadd.s32 %s220, %s221
          %s223 = smul.addr %s222, 8
          %s224 = scalar_lea.vmem %s1, %s223
        $region36: #{convgru_base.1} parent=27 // pred_fallthru
          _
      $region28: #{convgru_base.1} parent=5 // pred_fallthru
        _
      %p225 = scmp.le.s32.totalorder 1, %s14
      %p226 = scmp.lt.s32.totalorder %s14, 5
      %p227 = pnand %p225, %p226
      %p228 = pneg %p227
      // Predicated region
      $region37: #{convgru_base.1} parent=5 // pred_check
        _
      $region38: #{convgru_base.1} parent=5 // pred_check_branch
        %230 = sbr.rel (%p227) target = $region40
      $region39: #{convgru_base.1} parent=5 // pred_region
        %s231 = ssub.s32 %s14, 1
        %p232 = scmp.lt.s32.totalorder %s23, 1
        %s233 = scalar_select %p232, %s23, 1
        %p234 = scmp.lt.s32.totalorder %s24, 1
        %s235 = scalar_select %p234, %s24, 1
        %s236 = smul.addr %s235, 140
        %s237 = smul.addr %s233, 280
        %s238 = sadd.s32 %s236, %s237
        %s239 = smul.addr %s238, 4
        %s240 = scalar_lea.vmem %s0, %s239
        %p241 = pneg %p54
        %p242 = pneg %p51
        %p243 = scmp.lt.s32.totalorder %s23, 1
        %s244 = scalar_select %p243, %s23, 1
        %p245 = scmp.lt.s32.totalorder %s24, 1
        %s246 = scalar_select %p245, %s24, 1
        %s247 = smul.addr %s246, 20
        %s248 = smul.addr %s244, 40
        %s249 = sadd.s32 %s247, %s248
        %s250 = smul.addr %s249, 8
        %s251 = scalar_lea.vmem %s1, %s250
        %p252 = pneg %p82
        %p253 = pneg %p79
        %p254 = pneg %p103
        %p255 = pneg %p100
        %p256 = pneg %p124
        %p257 = pneg %p121
        %p258 = pneg %p145
        %p259 = pneg %p142
        %p260 = pneg %p173
        %p261 = pneg %p170
        %s262 = sand.u32 %s160, 1
        %s263 = scalar_lea.sflag [#allocation5], %s262
        %s264 = sand.u32 %s160, 1
        %s265 = smul.addr %s264, 128
        %s266 = scalar_lea.vmem [#allocation4], %s265
        %p267 = scmp.lt.s32.totalorder %s23, 1
        %s268 = scalar_select %p267, %s23, 1
        %p269 = scmp.lt.s32.totalorder %s24, 1
        %s270 = scalar_select %p269, %s24, 1
        %s271 = smul.addr %s270, 140
        %s272 = smul.addr %s268, 280
        %s273 = sadd.s32 %s271, %s272
        %s274 = smul.addr %s273, 4
        %s275 = scalar_lea.vmem %s0, %s274
        %p276 = scmp.lt.s32.totalorder %s23, 1
        %s277 = scalar_select %p276, %s23, 1
        %p278 = scmp.lt.s32.totalorder %s24, 1
        %s279 = scalar_select %p278, %s24, 1
        %s280 = smul.addr %s279, 20
        %s281 = smul.addr %s277, 40
        %s282 = sadd.s32 %s280, %s281
        %s283 = smul.addr %s282, 8
        %s284 = scalar_lea.vmem %s1, %s283
        %s285 = smul.u32 8, %s24
        %v287 = vld [vmem:[%s275] sm:$0xff]
        %v288 = vld [vmem:[%s275 + $0x8] sm:$0xff]
        %v289 = vld [vmem:[%s275 + $0x10] sm:$0xff]
        %v290 = vld [vmem:[%s275 + $0x18] sm:$0xf]
        %v291 = vld [vmem:[%s275 + $0x1c] sm:$0xff]
        %v292 = vld [vmem:[%s275 + $0x24] sm:$0xff]
        %v293 = vld [vmem:[%s275 + $0x2c] sm:$0xff]
        %v294 = vld [vmem:[%s275 + $0x34] sm:$0xf]
        %v295 = vld [vmem:[%s275 + $0x38] sm:$0xff]
        %v296 = vld [vmem:[%s275 + $0x40] sm:$0xff]
        %v297 = vld [vmem:[%s275 + $0x48] sm:$0xff]
        %v298 = vld [vmem:[%s275 + $0x50] sm:$0xf]
        %v299 = vld [vmem:[%s275 + $0x54] sm:$0xff]
        %v300 = vld [vmem:[%s275 + $0x5c] sm:$0xff]
        %v301 = vld [vmem:[%s275 + $0x64] sm:$0xff]
        %v302 = vld [vmem:[%s275 + $0x6c] sm:$0xf]
        %v303 = vld [vmem:[%s275 + $0x70] sm:$0xff]
        %v304 = vld [vmem:[%s275 + $0x78] sm:$0xff]
        %v305 = vld [vmem:[%s275 + $0x80] sm:$0xff]
        %v306 = vld [vmem:[%s275 + $0x88] sm:$0xf]
        %v307 = vld [vmem:[%s275 + $0x8c] sm:$0xff]
        %v308 = vld [vmem:[%s275 + $0x94] sm:$0xff]
        %v309 = vld [vmem:[%s275 + $0x9c] sm:$0xff]
        %v310 = vld [vmem:[%s275 + $0xa4] sm:$0xf]
        %v311 = vld [vmem:[%s275 + $0xa8] sm:$0xff]
        %v312 = vld [vmem:[%s275 + $0xb0] sm:$0xff]
        %v313 = vld [vmem:[%s275 + $0xb8] sm:$0xff]
        %v314 = vld [vmem:[%s275 + $0xc0] sm:$0xf]
        %v315 = vld [vmem:[%s275 + $0xc4] sm:$0xff]
        %v316 = vld [vmem:[%s275 + $0xcc] sm:$0xff]
        %v317 = vld [vmem:[%s275 + $0xd4] sm:$0xff]
        %v318 = vld [vmem:[%s275 + $0xdc] sm:$0xf]
        %v319 = vld [vmem:[%s275 + $0xe0] sm:$0xff]
        %v320 = vld [vmem:[%s275 + $0xe8] sm:$0xff]
        %v321 = vld [vmem:[%s275 + $0xf0] sm:$0xff]
        %v322 = vld [vmem:[%s275 + $0xf8] sm:$0xf]
        %v323 = vld [vmem:[%s275 + $0xfc] sm:$0xff]
        %v324 = vld [vmem:[%s275 + $0x104] sm:$0xff]
        %v325 = vld [vmem:[%s275 + $0x10c] sm:$0xff]
        %v326 = vld [vmem:[%s275 + $0x114] sm:$0xf]
        %v327 = vld [vmem:[%s275 + $0x118] sm:$0xff]
        %v328 = vld [vmem:[%s275 + $0x120] sm:$0xff]
        %v329 = vld [vmem:[%s275 + $0x128] sm:$0xff]
        %v330 = vld [vmem:[%s275 + $0x130] sm:$0xf]
        %v331 = vld [vmem:[%s275 + $0x134] sm:$0xff]
        %v332 = vld [vmem:[%s275 + $0x13c] sm:$0xff]
        %v333 = vld [vmem:[%s275 + $0x144] sm:$0xff]
        %v334 = vld [vmem:[%s275 + $0x14c] sm:$0xf]
        %v335 = vld [vmem:[%s275 + $0x150] sm:$0xff]
        %v336 = vld [vmem:[%s275 + $0x158] sm:$0xff]
        %v337 = vld [vmem:[%s275 + $0x160] sm:$0xff]
        %v338 = vld [vmem:[%s275 + $0x168] sm:$0xf]
        %v339 = vld [vmem:[%s275 + $0x16c] sm:$0xff]
        %v340 = vld [vmem:[%s275 + $0x174] sm:$0xff]
        %v341 = vld [vmem:[%s275 + $0x17c] sm:$0xff]
        %v342 = vld [vmem:[%s275 + $0x184] sm:$0xf]
        %v343 = vld [vmem:[%s275 + $0x188] sm:$0xff]
        %v344 = vld [vmem:[%s275 + $0x190] sm:$0xff]
        %v345 = vld [vmem:[%s275 + $0x198] sm:$0xff]
        %v346 = vld [vmem:[%s275 + $0x1a0] sm:$0xf]
        %v347 = vld [vmem:[%s275 + $0x1a4] sm:$0xff]
        %v348 = vld [vmem:[%s275 + $0x1ac] sm:$0xff]
        %v349 = vld [vmem:[%s275 + $0x1b4] sm:$0xff]
        %v350 = vld [vmem:[%s275 + $0x1bc] sm:$0xf]
        %v351 = vld [vmem:[%s275 + $0x1c0] sm:$0xff]
        %v352 = vld [vmem:[%s275 + $0x1c8] sm:$0xff]
        %v353 = vld [vmem:[%s275 + $0x1d0] sm:$0xff]
        %v354 = vld [vmem:[%s275 + $0x1d8] sm:$0xf]
        %v355 = vld [vmem:[%s275 + $0x1dc] sm:$0xff]
        %v356 = vld [vmem:[%s275 + $0x1e4] sm:$0xff]
        %v357 = vld [vmem:[%s275 + $0x1ec] sm:$0xff]
        %v358 = vld [vmem:[%s275 + $0x1f4] sm:$0xf]
        %v359 = vld [vmem:[%s275 + $0x1f8] sm:$0xff]
        %v360 = vld [vmem:[%s275 + $0x200] sm:$0xff]
        %v361 = vld [vmem:[%s275 + $0x208] sm:$0xff]
        %v362 = vld [vmem:[%s275 + $0x210] sm:$0xf]
        %v363 = vld [vmem:[%s275 + $0x214] sm:$0xff]
        %v364 = vld [vmem:[%s275 + $0x21c] sm:$0xff]
        %v365 = vld [vmem:[%s275 + $0x224] sm:$0xff]
        %v366 = vld [vmem:[%s275 + $0x22c] sm:$0xf]
        %v367 = vld [vmem:[%s2] sm:$0xf]
        %v368 = vld [vmem:[%s2 + $0x4] sm:$0xf]
        %v369 = vld [vmem:[%s2 + $0x8] sm:$0xf]
        %v370 = vld [vmem:[%s2 + $0xc] sm:$0xf]
        %v371 = vld [vmem:[%s2 + $0x10] sm:$0xf]
        %v372 = vld [vmem:[%s2 + $0x14] sm:$0xf]
        %v373 = vld [vmem:[%s2 + $0x18] sm:$0xf]
        %v374 = vld [vmem:[%s2 + $0x1c] sm:$0xf]
        %v375 = vld [vmem:[%s2 + $0x20] sm:$0xf]
        %v376 = vld [vmem:[%s2 + $0x24] sm:$0xf]
        %v377 = vld [vmem:[%s2 + $0x28] sm:$0xf]
        %v378 = vld [vmem:[%s2 + $0x2c] sm:$0xf]
        %v379 = vld [vmem:[%s2 + $0x30] sm:$0xf]
        %v380 = vld [vmem:[%s2 + $0x34] sm:$0xf]
        %v381 = vld [vmem:[%s2 + $0x38] sm:$0xf]
        %v382 = vld [vmem:[%s2 + $0x3c] sm:$0xf]
        %v383 = vld [vmem:[%s2 + $0x40] sm:$0xf]
        %v384 = vld [vmem:[%s2 + $0x44] sm:$0xf]
        %v385 = vld [vmem:[%s2 + $0x48] sm:$0xf]
        %v386 = vld [vmem:[%s2 + $0x4c] sm:$0xf]
        %v387 = vld [vmem:[%s2 + $0x50] sm:$0xf]
        %v388 = vld [vmem:[%s2 + $0x54] sm:$0xf]
        %v389 = vld [vmem:[%s2 + $0x58] sm:$0xf]
        %v390 = vld [vmem:[%s2 + $0x5c] sm:$0xf]
        %v391 = vld [vmem:[%s2 + $0x60] sm:$0xf]
        %v392 = vld [vmem:[%s2 + $0x64] sm:$0xf]
        %v393 = vld [vmem:[%s2 + $0x68] sm:$0xf]
        %v394 = vld [vmem:[%s2 + $0x6c] sm:$0xf]
        %v395 = vld [vmem:[%s2 + $0x70] sm:$0xf]
        %v396 = vld [vmem:[%s2 + $0x74] sm:$0xf]
        %v397 = vld [vmem:[%s2 + $0x78] sm:$0xf]
        %v398 = vld [vmem:[%s2 + $0x7c] sm:$0xf]
        %v399 = vld [vmem:[%s2 + $0x80] sm:$0xf]
        %v400 = vld [vmem:[%s2 + $0x84] sm:$0xf]
        %v401 = vld [vmem:[%s2 + $0x88] sm:$0xf]
        %v402 = vld [vmem:[%s2 + $0x8c] sm:$0xf]
        %v403 = vld [vmem:[%s2 + $0x90] sm:$0xf]
        %v404 = vld [vmem:[%s2 + $0x94] sm:$0xf]
        %v405 = vld [vmem:[%s2 + $0x98] sm:$0xf]
        %v406 = vld [vmem:[%s2 + $0x9c] sm:$0xf]
        %v407 = vld [vmem:[%s2 + $0xa0] sm:$0xf]
        %v408 = vld [vmem:[%s2 + $0xa4] sm:$0xf]
        %v409 = vld [vmem:[%s2 + $0xa8] sm:$0xf]
        %v410 = vld [vmem:[%s2 + $0xac] sm:$0xf]
        %v411 = vld [vmem:[%s2 + $0xb0] sm:$0xf]
        %v412 = vld [vmem:[%s2 + $0xb4] sm:$0xf]
        %v413 = vld [vmem:[%s2 + $0xb8] sm:$0xf]
        %v414 = vld [vmem:[%s2 + $0xbc] sm:$0xf]
        %v415 = vld [vmem:[%s2 + $0xc0] sm:$0xf]
        %v416 = vld [vmem:[%s2 + $0xc4] sm:$0xf]
        %v417 = vld [vmem:[%s2 + $0xc8] sm:$0xf]
        %v418 = vld [vmem:[%s2 + $0xcc] sm:$0xf]
        %v419 = vld [vmem:[%s2 + $0xd0] sm:$0xf]
        %v420 = vld [vmem:[%s2 + $0xd4] sm:$0xf]
        %v421 = vld [vmem:[%s2 + $0xd8] sm:$0xf]
        %v422 = vld [vmem:[%s2 + $0xdc] sm:$0xf]
        %v423 = vld [vmem:[%s2 + $0xe0] sm:$0xf]
        %v424 = vld [vmem:[%s2 + $0xe4] sm:$0xf]
        %v425 = vld [vmem:[%s2 + $0xe8] sm:$0xf]
        %v426 = vld [vmem:[%s2 + $0xec] sm:$0xf]
        %v427 = vld [vmem:[%s2 + $0xf0] sm:$0xf]
        %v428 = vld [vmem:[%s2 + $0xf4] sm:$0xf]
        %v429 = vld [vmem:[%s2 + $0xf8] sm:$0xf]
        %v430 = vld [vmem:[%s2 + $0xfc] sm:$0xf]
        %v431 = vld [vmem:[%s2 + $0x100] sm:$0xf]
        %v432 = vld [vmem:[%s2 + $0x104] sm:$0xf]
        %v433 = vld [vmem:[%s2 + $0x108] sm:$0xf]
        %v434 = vld [vmem:[%s2 + $0x10c] sm:$0xf]
        %v435 = vld [vmem:[%s2 + $0x110] sm:$0xf]
        %v436 = vld [vmem:[%s2 + $0x114] sm:$0xf]
        %v437 = vld [vmem:[%s2 + $0x118] sm:$0xf]
        %v438 = vld [vmem:[%s2 + $0x11c] sm:$0xf]
        %v439 = vld [vmem:[%s2 + $0x120] sm:$0xf]
        %v440 = vld [vmem:[%s2 + $0x124] sm:$0xf]
        %v441 = vld [vmem:[%s2 + $0x128] sm:$0xf]
        %v442 = vld [vmem:[%s2 + $0x12c] sm:$0xf]
        %v443 = vld [vmem:[%s2 + $0x130] sm:$0xf]
        %v444 = vld [vmem:[%s2 + $0x134] sm:$0xf]
        %v445 = vld [vmem:[%s2 + $0x138] sm:$0xf]
        %v446 = vld [vmem:[%s2 + $0x13c] sm:$0xf]
        %v447 = vld [vmem:[%s2 + $0x140] sm:$0xf]
        %v448 = vld [vmem:[%s2 + $0x144] sm:$0xf]
        %v449 = vld [vmem:[%s2 + $0x148] sm:$0xf]
        %v450 = vld [vmem:[%s2 + $0x14c] sm:$0xf]
        %v451 = vld [vmem:[%s2 + $0x150] sm:$0xf]
        %v452 = vld [vmem:[%s2 + $0x154] sm:$0xf]
        %v453 = vld [vmem:[%s2 + $0x158] sm:$0xf]
        %v454 = vld [vmem:[%s2 + $0x15c] sm:$0xf]
        %v455 = vld [vmem:[%s2 + $0x160] sm:$0xf]
        %v456 = vld [vmem:[%s2 + $0x164] sm:$0xf]
        %v457 = vld [vmem:[%s2 + $0x168] sm:$0xf]
        %v458 = vld [vmem:[%s2 + $0x16c] sm:$0xf]
        %v459 = vld [vmem:[%s2 + $0x170] sm:$0xf]
        %v460 = vld [vmem:[%s2 + $0x174] sm:$0xf]
        %v461 = vld [vmem:[%s2 + $0x178] sm:$0xf]
        %v462 = vld [vmem:[%s2 + $0x17c] sm:$0xf]
        %v463 = vld [vmem:[%s2 + $0x180] sm:$0xf]
        %v464 = vld [vmem:[%s2 + $0x184] sm:$0xf]
        %v465 = vld [vmem:[%s2 + $0x188] sm:$0xf]
        %v466 = vld [vmem:[%s2 + $0x18c] sm:$0xf]
        %v467 = vld [vmem:[%s2 + $0x190] sm:$0xf]
        %v468 = vld [vmem:[%s2 + $0x194] sm:$0xf]
        %v469 = vld [vmem:[%s2 + $0x198] sm:$0xf]
        %v470 = vld [vmem:[%s2 + $0x19c] sm:$0xf]
        %v471 = vld [vmem:[%s2 + $0x1a0] sm:$0xf]
        %v472 = vld [vmem:[%s2 + $0x1a4] sm:$0xf]
        %v473 = vld [vmem:[%s2 + $0x1a8] sm:$0xf]
        %v474 = vld [vmem:[%s2 + $0x1ac] sm:$0xf]
        %v475 = vld [vmem:[%s3] sm:$0x1]
        %v477 = vlaneseq
        %v478 = vshrl.u32 %v477, 7
        %v479 = vsub.s32 0, %v478
        %v480 = vrot.slane %v475, %v479
        %v562 = vunpack.c.l.b16 %v287
        %v563 = vunpack.c.h.b16 %v287
        %v564 = vunpack.c.l.b16 %v288
        %v565 = vunpack.c.h.b16 %v288
        %v566 = vunpack.c.l.b16 %v289
        %v567 = vunpack.c.h.b16 %v289
        %v568 = vunpack.c.l.b16 %v290
        %v569 = vunpack.c.l.b16 %v291
        %v570 = vunpack.c.h.b16 %v291
        %v571 = vunpack.c.l.b16 %v292
        %v572 = vunpack.c.h.b16 %v292
        %v573 = vunpack.c.l.b16 %v293
        %v574 = vunpack.c.h.b16 %v293
        %v575 = vunpack.c.l.b16 %v294
        %v576 = vunpack.c.l.b16 %v295
        %v577 = vunpack.c.h.b16 %v295
        %v578 = vunpack.c.l.b16 %v296
        %v579 = vunpack.c.h.b16 %v296
        %v580 = vunpack.c.l.b16 %v297
        %v581 = vunpack.c.h.b16 %v297
        %v582 = vunpack.c.l.b16 %v298
        %v583 = vunpack.c.l.b16 %v299
        %v584 = vunpack.c.h.b16 %v299
        %v585 = vunpack.c.l.b16 %v300
        %v586 = vunpack.c.h.b16 %v300
        %v587 = vunpack.c.l.b16 %v301
        %v588 = vunpack.c.h.b16 %v301
        %v589 = vunpack.c.l.b16 %v302
        %v590 = vunpack.c.l.b16 %v303
        %v591 = vunpack.c.h.b16 %v303
        %v592 = vunpack.c.l.b16 %v304
        %v593 = vunpack.c.h.b16 %v304
        %v594 = vunpack.c.l.b16 %v305
        %v595 = vunpack.c.h.b16 %v305
        %v596 = vunpack.c.l.b16 %v306
        %v597 = vunpack.c.l.b16 %v307
        %v598 = vunpack.c.h.b16 %v307
        %v599 = vunpack.c.l.b16 %v308
        %v600 = vunpack.c.h.b16 %v308
        %v601 = vunpack.c.l.b16 %v309
        %v602 = vunpack.c.h.b16 %v309
        %v603 = vunpack.c.l.b16 %v310
        %v604 = vunpack.c.l.b16 %v311
        %v605 = vunpack.c.h.b16 %v311
        %v606 = vunpack.c.l.b16 %v312
        %v607 = vunpack.c.h.b16 %v312
        %v608 = vunpack.c.l.b16 %v313
        %v609 = vunpack.c.h.b16 %v313
        %v610 = vunpack.c.l.b16 %v314
        %v611 = vunpack.c.l.b16 %v315
        %v612 = vunpack.c.h.b16 %v315
        %v613 = vunpack.c.l.b16 %v316
        %v614 = vunpack.c.h.b16 %v316
        %v615 = vunpack.c.l.b16 %v317
        %v616 = vunpack.c.h.b16 %v317
        %v617 = vunpack.c.l.b16 %v318
        %v618 = vunpack.c.l.b16 %v319
        %v619 = vunpack.c.h.b16 %v319
        %v620 = vunpack.c.l.b16 %v320
        %v621 = vunpack.c.h.b16 %v320
        %v622 = vunpack.c.l.b16 %v321
        %v623 = vunpack.c.h.b16 %v321
        %v624 = vunpack.c.l.b16 %v322
        %v625 = vunpack.c.l.b16 %v323
        %v626 = vunpack.c.h.b16 %v323
        %v627 = vunpack.c.l.b16 %v324
        %v628 = vunpack.c.h.b16 %v324
        %v629 = vunpack.c.l.b16 %v325
        %v630 = vunpack.c.h.b16 %v325
        %v631 = vunpack.c.l.b16 %v326
        %v632 = vunpack.c.l.b16 %v327
        %v633 = vunpack.c.h.b16 %v327
        %v634 = vunpack.c.l.b16 %v328
        %v635 = vunpack.c.h.b16 %v328
        %v636 = vunpack.c.l.b16 %v329
        %v637 = vunpack.c.h.b16 %v329
        %v638 = vunpack.c.l.b16 %v330
        %v639 = vunpack.c.l.b16 %v331
        %v640 = vunpack.c.h.b16 %v331
        %v641 = vunpack.c.l.b16 %v332
        %v642 = vunpack.c.h.b16 %v332
        %v643 = vunpack.c.l.b16 %v333
        %v644 = vunpack.c.h.b16 %v333
        %v645 = vunpack.c.l.b16 %v334
        %v646 = vunpack.c.l.b16 %v335
        %v647 = vunpack.c.h.b16 %v335
        %v648 = vunpack.c.l.b16 %v336
        %v649 = vunpack.c.h.b16 %v336
        %v650 = vunpack.c.l.b16 %v337
        %v651 = vunpack.c.h.b16 %v337
        %v652 = vunpack.c.l.b16 %v338
        %v653 = vunpack.c.l.b16 %v339
        %v654 = vunpack.c.h.b16 %v339
        %v655 = vunpack.c.l.b16 %v340
        %v656 = vunpack.c.h.b16 %v340
        %v657 = vunpack.c.l.b16 %v341
        %v658 = vunpack.c.h.b16 %v341
        %v659 = vunpack.c.l.b16 %v342
        %v660 = vunpack.c.l.b16 %v343
        %v661 = vunpack.c.h.b16 %v343
        %v662 = vunpack.c.l.b16 %v344
        %v663 = vunpack.c.h.b16 %v344
        %v664 = vunpack.c.l.b16 %v345
        %v665 = vunpack.c.h.b16 %v345
        %v666 = vunpack.c.l.b16 %v346
        %v667 = vunpack.c.l.b16 %v347
        %v668 = vunpack.c.h.b16 %v347
        %v669 = vunpack.c.l.b16 %v348
        %v670 = vunpack.c.h.b16 %v348
        %v671 = vunpack.c.l.b16 %v349
        %v672 = vunpack.c.h.b16 %v349
        %v673 = vunpack.c.l.b16 %v350
        %v674 = vunpack.c.l.b16 %v351
        %v675 = vunpack.c.h.b16 %v351
        %v676 = vunpack.c.l.b16 %v352
        %v677 = vunpack.c.h.b16 %v352
        %v678 = vunpack.c.l.b16 %v353
        %v679 = vunpack.c.h.b16 %v353
        %v680 = vunpack.c.l.b16 %v354
        %v681 = vunpack.c.l.b16 %v355
        %v682 = vunpack.c.h.b16 %v355
        %v683 = vunpack.c.l.b16 %v356
        %v684 = vunpack.c.h.b16 %v356
        %v685 = vunpack.c.l.b16 %v357
        %v686 = vunpack.c.h.b16 %v357
        %v687 = vunpack.c.l.b16 %v358
        %v688 = vunpack.c.l.b16 %v359
        %v689 = vunpack.c.h.b16 %v359
        %v690 = vunpack.c.l.b16 %v360
        %v691 = vunpack.c.h.b16 %v360
        %v692 = vunpack.c.l.b16 %v361
        %v693 = vunpack.c.h.b16 %v361
        %v694 = vunpack.c.l.b16 %v362
        %v695 = vunpack.c.l.b16 %v363
        %v696 = vunpack.c.h.b16 %v363
        %v697 = vunpack.c.l.b16 %v364
        %v698 = vunpack.c.h.b16 %v364
        %v699 = vunpack.c.l.b16 %v365
        %v700 = vunpack.c.h.b16 %v365
        %v701 = vunpack.c.l.b16 %v366
        %v702 = vpack.c.b16 %v569, %v562
        %v703 = vpack.c.b16 %v570, %v563
        %v704 = vpack.c.b16 %v571, %v564
        %v705 = vpack.c.b16 %v572, %v565
        %v706 = vpack.c.b16 %v573, %v566
        %v707 = vpack.c.b16 %v574, %v567
        %v708 = vpack.c.b16 %v575, %v568
        %v709 = vpack.c.b16 %v583, %v576
        %v710 = vpack.c.b16 %v584, %v577
        %v711 = vpack.c.b16 %v585, %v578
        %v712 = vpack.c.b16 %v586, %v579
        %v713 = vpack.c.b16 %v587, %v580
        %v714 = vpack.c.b16 %v588, %v581
        %v715 = vpack.c.b16 %v589, %v582
        %v716 = vpack.c.b16 %v597, %v590
        %v717 = vpack.c.b16 %v598, %v591
        %v718 = vpack.c.b16 %v599, %v592
        %v719 = vpack.c.b16 %v600, %v593
        %v720 = vpack.c.b16 %v601, %v594
        %v721 = vpack.c.b16 %v602, %v595
        %v722 = vpack.c.b16 %v603, %v596
        %v723 = vpack.c.b16 %v611, %v604
        %v724 = vpack.c.b16 %v612, %v605
        %v725 = vpack.c.b16 %v613, %v606
        %v726 = vpack.c.b16 %v614, %v607
        %v727 = vpack.c.b16 %v615, %v608
        %v728 = vpack.c.b16 %v616, %v609
        %v729 = vpack.c.b16 %v617, %v610
        %v730 = vpack.c.b16 %v625, %v618
        %v731 = vpack.c.b16 %v626, %v619
        %v732 = vpack.c.b16 %v627, %v620
        %v733 = vpack.c.b16 %v628, %v621
        %v734 = vpack.c.b16 %v629, %v622
        %v735 = vpack.c.b16 %v630, %v623
        %v736 = vpack.c.b16 %v631, %v624
        %v737 = vpack.c.b16 %v639, %v632
        %v738 = vpack.c.b16 %v640, %v633
        %v739 = vpack.c.b16 %v641, %v634
        %v740 = vpack.c.b16 %v642, %v635
        %v741 = vpack.c.b16 %v643, %v636
        %v742 = vpack.c.b16 %v644, %v637
        %v743 = vpack.c.b16 %v645, %v638
        %v744 = vpack.c.b16 %v653, %v646
        %v745 = vpack.c.b16 %v654, %v647
        %v746 = vpack.c.b16 %v655, %v648
        %v747 = vpack.c.b16 %v656, %v649
        %v748 = vpack.c.b16 %v657, %v650
        %v749 = vpack.c.b16 %v658, %v651
        %v750 = vpack.c.b16 %v659, %v652
        %v751 = vpack.c.b16 %v667, %v660
        %v752 = vpack.c.b16 %v668, %v661
        %v753 = vpack.c.b16 %v669, %v662
        %v754 = vpack.c.b16 %v670, %v663
        %v755 = vpack.c.b16 %v671, %v664
        %v756 = vpack.c.b16 %v672, %v665
        %v757 = vpack.c.b16 %v673, %v666
        %v758 = vpack.c.b16 %v681, %v674
        %v759 = vpack.c.b16 %v682, %v675
        %v760 = vpack.c.b16 %v683, %v676
        %v761 = vpack.c.b16 %v684, %v677
        %v762 = vpack.c.b16 %v685, %v678
        %v763 = vpack.c.b16 %v686, %v679
        %v764 = vpack.c.b16 %v687, %v680
        %v765 = vpack.c.b16 %v695, %v688
        %v766 = vpack.c.b16 %v696, %v689
        %v767 = vpack.c.b16 %v697, %v690
        %v768 = vpack.c.b16 %v698, %v691
        %v769 = vpack.c.b16 %v699, %v692
        %v770 = vpack.c.b16 %v700, %v693
        %v771 = vpack.c.b16 %v701, %v694
        %v940 = vunpack.c.l.b16 %v367
        %v941 = vunpack.c.l.b16 %v368
        %v942 = vunpack.c.l.b16 %v369
        %v943 = vunpack.c.l.b16 %v370
        %v944 = vunpack.c.l.b16 %v371
        %v945 = vunpack.c.l.b16 %v372
        %v946 = vunpack.c.l.b16 %v373
        %v947 = vunpack.c.l.b16 %v374
        %v948 = vunpack.c.l.b16 %v375
        %v949 = vunpack.c.l.b16 %v376
        %v950 = vunpack.c.l.b16 %v377
        %v951 = vunpack.c.l.b16 %v378
        %v952 = vunpack.c.l.b16 %v379
        %v953 = vunpack.c.l.b16 %v380
        %v954 = vunpack.c.l.b16 %v381
        %v955 = vunpack.c.l.b16 %v382
        %v956 = vunpack.c.l.b16 %v383
        %v957 = vunpack.c.l.b16 %v384
        %v958 = vunpack.c.l.b16 %v385
        %v959 = vunpack.c.l.b16 %v386
        %v960 = vunpack.c.l.b16 %v387
        %v961 = vunpack.c.l.b16 %v388
        %v962 = vunpack.c.l.b16 %v389
        %v963 = vunpack.c.l.b16 %v390
        %v964 = vunpack.c.l.b16 %v391
        %v965 = vunpack.c.l.b16 %v392
        %v966 = vunpack.c.l.b16 %v393
        %v967 = vunpack.c.l.b16 %v394
        %v968 = vunpack.c.l.b16 %v395
        %v969 = vunpack.c.l.b16 %v396
        %v970 = vunpack.c.l.b16 %v397
        %v971 = vunpack.c.l.b16 %v398
        %v972 = vunpack.c.l.b16 %v399
        %v973 = vunpack.c.l.b16 %v400
        %v974 = vunpack.c.l.b16 %v401
        %v975 = vunpack.c.l.b16 %v402
        %v976 = vunpack.c.l.b16 %v403
        %v977 = vunpack.c.l.b16 %v404
        %v978 = vunpack.c.l.b16 %v405
        %v979 = vunpack.c.l.b16 %v406
        %v980 = vunpack.c.l.b16 %v407
        %v981 = vunpack.c.l.b16 %v408
        %v982 = vunpack.c.l.b16 %v409
        %v983 = vunpack.c.l.b16 %v410
        %v984 = vunpack.c.l.b16 %v411
        %v985 = vunpack.c.l.b16 %v412
        %v986 = vunpack.c.l.b16 %v413
        %v987 = vunpack.c.l.b16 %v414
        %v988 = vunpack.c.l.b16 %v415
        %v989 = vunpack.c.l.b16 %v416
        %v990 = vunpack.c.l.b16 %v417
        %v991 = vunpack.c.l.b16 %v418
        %v992 = vunpack.c.l.b16 %v419
        %v993 = vunpack.c.l.b16 %v420
        %v994 = vunpack.c.l.b16 %v421
        %v995 = vunpack.c.l.b16 %v422
        %v996 = vunpack.c.l.b16 %v423
        %v997 = vunpack.c.l.b16 %v424
        %v998 = vunpack.c.l.b16 %v425
        %v999 = vunpack.c.l.b16 %v426
        %v1000 = vunpack.c.l.b16 %v427
        %v1001 = vunpack.c.l.b16 %v428
        %v1002 = vunpack.c.l.b16 %v429
        %v1003 = vunpack.c.l.b16 %v430
        %v1004 = vunpack.c.l.b16 %v431
        %v1005 = vunpack.c.l.b16 %v432
        %v1006 = vunpack.c.l.b16 %v433
        %v1007 = vunpack.c.l.b16 %v434
        %v1008 = vunpack.c.l.b16 %v435
        %v1009 = vunpack.c.l.b16 %v436
        %v1010 = vunpack.c.l.b16 %v437
        %v1011 = vunpack.c.l.b16 %v438
        %v1012 = vunpack.c.l.b16 %v439
        %v1013 = vunpack.c.l.b16 %v440
        %v1014 = vunpack.c.l.b16 %v441
        %v1015 = vunpack.c.l.b16 %v442
        %v1016 = vunpack.c.l.b16 %v443
        %v1017 = vunpack.c.l.b16 %v444
        %v1018 = vunpack.c.l.b16 %v445
        %v1019 = vunpack.c.l.b16 %v446
        %v1020 = vunpack.c.l.b16 %v447
        %v1021 = vunpack.c.l.b16 %v448
        %v1022 = vunpack.c.l.b16 %v449
        %v1023 = vunpack.c.l.b16 %v450
        %v1024 = vunpack.c.l.b16 %v451
        %v1025 = vunpack.c.l.b16 %v452
        %v1026 = vunpack.c.l.b16 %v453
        %v1027 = vunpack.c.l.b16 %v454
        %v1028 = vunpack.c.l.b16 %v455
        %v1029 = vunpack.c.l.b16 %v456
        %v1030 = vunpack.c.l.b16 %v457
        %v1031 = vunpack.c.l.b16 %v458
        %v1032 = vunpack.c.l.b16 %v459
        %v1033 = vunpack.c.l.b16 %v460
        %v1034 = vunpack.c.l.b16 %v461
        %v1035 = vunpack.c.l.b16 %v462
        %v1036 = vunpack.c.l.b16 %v463
        %v1037 = vunpack.c.l.b16 %v464
        %v1038 = vunpack.c.l.b16 %v465
        %v1039 = vunpack.c.l.b16 %v466
        %v1040 = vunpack.c.l.b16 %v467
        %v1041 = vunpack.c.l.b16 %v468
        %v1042 = vunpack.c.l.b16 %v469
        %v1043 = vunpack.c.l.b16 %v470
        %v1044 = vunpack.c.l.b16 %v471
        %v1045 = vunpack.c.l.b16 %v472
        %v1046 = vunpack.c.l.b16 %v473
        %v1047 = vunpack.c.l.b16 %v474
        %v1048 = vpack.c.b16 %v941, %v940
        %v1049 = vpack.c.b16 %v943, %v942
        %v1050 = vpack.c.b16 %v945, %v944
        %v1051 = vpack.c.b16 %v947, %v946
        %v1052 = vpack.c.b16 %v949, %v948
        %v1053 = vpack.c.b16 %v951, %v950
        %v1054 = vpack.c.b16 %v953, %v952
        %v1055 = vpack.c.b16 %v955, %v954
        %v1056 = vpack.c.b16 %v957, %v956
        %v1057 = vpack.c.b16 %v959, %v958
        %v1058 = vpack.c.b16 %v961, %v960
        %v1059 = vpack.c.b16 %v963, %v962
        %v1060 = vpack.c.b16 %v965, %v964
        %v1061 = vpack.c.b16 %v967, %v966
        %v1062 = vpack.c.b16 %v969, %v968
        %v1063 = vpack.c.b16 %v971, %v970
        %v1064 = vpack.c.b16 %v973, %v972
        %v1065 = vpack.c.b16 %v975, %v974
        %v1066 = vpack.c.b16 %v977, %v976
        %v1067 = vpack.c.b16 %v979, %v978
        %v1068 = vpack.c.b16 %v981, %v980
        %v1069 = vpack.c.b16 %v983, %v982
        %v1070 = vpack.c.b16 %v985, %v984
        %v1071 = vpack.c.b16 %v987, %v986
        %v1072 = vpack.c.b16 %v989, %v988
        %v1073 = vpack.c.b16 %v991, %v990
        %v1074 = vpack.c.b16 %v993, %v992
        %v1075 = vpack.c.b16 %v995, %v994
        %v1076 = vpack.c.b16 %v997, %v996
        %v1077 = vpack.c.b16 %v999, %v998
        %v1078 = vpack.c.b16 %v1001, %v1000
        %v1079 = vpack.c.b16 %v1003, %v1002
        %v1080 = vpack.c.b16 %v1005, %v1004
        %v1081 = vpack.c.b16 %v1007, %v1006
        %v1082 = vpack.c.b16 %v1009, %v1008
        %v1083 = vpack.c.b16 %v1011, %v1010
        %v1084 = vpack.c.b16 %v1013, %v1012
        %v1085 = vpack.c.b16 %v1015, %v1014
        %v1086 = vpack.c.b16 %v1017, %v1016
        %v1087 = vpack.c.b16 %v1019, %v1018
        %v1088 = vpack.c.b16 %v1021, %v1020
        %v1089 = vpack.c.b16 %v1023, %v1022
        %v1090 = vpack.c.b16 %v1025, %v1024
        %v1091 = vpack.c.b16 %v1027, %v1026
        %v1092 = vpack.c.b16 %v1029, %v1028
        %v1093 = vpack.c.b16 %v1031, %v1030
        %v1094 = vpack.c.b16 %v1033, %v1032
        %v1095 = vpack.c.b16 %v1035, %v1034
        %v1096 = vpack.c.b16 %v1037, %v1036
        %v1097 = vpack.c.b16 %v1039, %v1038
        %v1098 = vpack.c.b16 %v1041, %v1040
        %v1099 = vpack.c.b16 %v1043, %v1042
        %v1100 = vpack.c.b16 %v1045, %v1044
        %v1101 = vpack.c.b16 %v1047, %v1046
        %vm1156 = vcmask 785408
        %v1158 = vsel %vm1156, %v708, 0
        %v1161 = vsel %vm1156, %v715, 0
        %v1164 = vsel %vm1156, %v722, 0
        %v1167 = vsel %vm1156, %v729, 0
        %v1170 = vsel %vm1156, %v736, 0
        %v1173 = vsel %vm1156, %v743, 0
        %v1176 = vsel %vm1156, %v750, 0
        %v1179 = vsel %vm1156, %v757, 0
        %v1182 = vsel %vm1156, %v764, 0
        %v1185 = vsel %vm1156, %v771, 0
        %1187 = vmatprep.subr.bf16.mxu0 0
        %1188 = vmatpush1.bf16.msra.mxu0 %v1048
        %1189 = vmatprep.subr.bf16.mxu0 0
        %1190 = vmatpush1.bf16.msra.mxu0 %v1049
        %1191 = vmatprep.subr.bf16.mxu0 0
        %1192 = vmatpush1.bf16.msra.mxu0 %v1050
        %1193 = vmatprep.subr.bf16.mxu0 0
        %1194 = vmatpush1.bf16.msra.mxu0 %v1051
        %1195 = vmatprep.subr.bf16.mxu0 0
        %1196 = vmatpush1.bf16.msra.mxu0 %v1052
        %1197 = vmatprep.subr.bf16.mxu0 0
        %1198 = vmatpush1.bf16.msra.mxu0 %v1053
        %1199 = vmatprep.subr.bf16.mxu0 0
        %1200 = vmatpush1.bf16.msra.mxu0 %v1054
        %1201 = vmatprep.subr.bf16.mxu0 0
        %1202 = vmatpush1.bf16.msra.mxu0 %v1055
        %1203 = vmatprep.subr.bf16.mxu0 0
        %1204 = vmatpush1.bf16.msra.mxu0 %v1056
        %1205 = vmatprep.subr.bf16.mxu0 0
        %1206 = vmatpush1.bf16.msra.mxu0 %v1057
        %1207 = vmatprep.subr.bf16.mxu0 0
        %1208 = vmatpush1.bf16.msra.mxu0 %v1058
        %1209 = vmatprep.subr.bf16.mxu0 0
        %1210 = vmatpush1.bf16.msra.mxu0 %v1059
        %1211 = vmatprep.subr.bf16.mxu0 0
        %1212 = vmatpush1.bf16.msra.mxu0 %v1060
        %1213 = vmatprep.subr.bf16.mxu0 0
        %1214 = vmatpush1.bf16.msra.mxu0 %v1061
        %1215 = vmatprep.subr.bf16.mxu0 0
        %1216 = vmatpush1.bf16.msra.mxu0 %v1062
        %1217 = vmatprep.subr.bf16.mxu0 0
        %1218 = vmatpush1.bf16.msra.mxu0 %v1063
        %1219 = vmatprep.mubr.bf16.mxu0 %v703
        %1220 = vmatmul.mubr.bf16.gmra.mrb[0].mxu0 %v702
        %v1221 = vpop.f32.mrb[0].mxu0
        %v1222 = vadd.f32 %v480, %v1221
        %v1223 = vpop.f32.mrb[0].mxu0
        %v1224 = vpop.f32.mrb[0].mxu0
        %v1225 = vadd.f32 %v480, %v1224
        %v1226 = vpop.f32.mrb[0].mxu0
        %1227 = vmatprep.mubr.bf16.mxu0 %v710
        %1228 = vmatmul.mubr.bf16.gmra.mrb[0].mxu0 %v709
        %v1229 = vpop.f32.mrb[0].mxu0
        %v1230 = vadd.f32 %v480, %v1229
        %v1231 = vpop.f32.mrb[0].mxu0
        %v1232 = vpop.f32.mrb[0].mxu0
        %v1233 = vadd.f32 %v480, %v1232
        %v1234 = vpop.f32.mrb[0].mxu0
        %1235 = vmatprep.mubr.bf16.mxu0 %v717
        %1236 = vmatmul.mubr.bf16.gmra.mrb[0].mxu0 %v716
        %v1237 = vpop.f32.mrb[0].mxu0
        %v1238 = vadd.f32 %v480, %v1237
        %v1239 = vpop.f32.mrb[0].mxu0
        %v1240 = vpop.f32.mrb[0].mxu0
        %v1241 = vadd.f32 %v480, %v1240
        %v1242 = vpop.f32.mrb[0].mxu0
        %1243 = vmatprep.mubr.bf16.mxu0 %v724
        %1244 = vmatmul.mubr.bf16.gmra.mrb[0].mxu0 %v723
        %v1245 = vpop.f32.mrb[0].mxu0
        %v1246 = vadd.f32 %v480, %v1245
        %v1247 = vpop.f32.mrb[0].mxu0
        %v1248 = vpop.f32.mrb[0].mxu0
        %v1249 = vadd.f32 %v480, %v1248
        %v1250 = vpop.f32.mrb[0].mxu0
        %1251 = vmatprep.mubr.bf16.mxu0 %v731
        %1252 = vmatmul.mubr.bf16.gmra.mrb[0].mxu0 %v730
        %v1253 = vpop.f32.mrb[0].mxu0
        %v1254 = vadd.f32 %v480, %v1253
        %v1255 = vpop.f32.mrb[0].mxu0
        %v1256 = vpop.f32.mrb[0].mxu0
        %v1257 = vadd.f32 %v480, %v1256
        %v1258 = vpop.f32.mrb[0].mxu0
        %1259 = vmatprep.mubr.bf16.mxu0 %v738
        %1260 = vmatmul.mubr.bf16.gmra.mrb[0].mxu0 %v737
        %v1261 = vpop.f32.mrb[0].mxu0
        %v1262 = vadd.f32 %v480, %v1261
        %v1263 = vpop.f32.mrb[0].mxu0
        %v1264 = vpop.f32.mrb[0].mxu0
        %v1265 = vadd.f32 %v480, %v1264
        %v1266 = vpop.f32.mrb[0].mxu0
        %1267 = vmatprep.mubr.bf16.mxu0 %v745
        %1268 = vmatmul.mubr.bf16.gmra.mrb[0].mxu0 %v744
        %v1269 = vpop.f32.mrb[0].mxu0
        %v1270 = vadd.f32 %v480, %v1269
        %v1271 = vpop.f32.mrb[0].mxu0
        %v1272 = vpop.f32.mrb[0].mxu0
        %v1273 = vadd.f32 %v480, %v1272
        %v1274 = vpop.f32.mrb[0].mxu0
        %1275 = vmatprep.mubr.bf16.mxu0 %v752
        %1276 = vmatmul.mubr.bf16.gmra.mrb[0].mxu0 %v751
        %v1277 = vpop.f32.mrb[0].mxu0
        %v1278 = vadd.f32 %v480, %v1277
        %v1279 = vpop.f32.mrb[0].mxu0
        %v1280 = vpop.f32.mrb[0].mxu0
        %v1281 = vadd.f32 %v480, %v1280
        %v1282 = vpop.f32.mrb[0].mxu0
        %1283 = vmatprep.mubr.bf16.mxu0 %v759
        %1284 = vmatmul.mubr.bf16.gmra.mrb[0].mxu0 %v758
        %v1285 = vpop.f32.mrb[0].mxu0
        %v1286 = vadd.f32 %v480, %v1285
        %v1287 = vpop.f32.mrb[0].mxu0
        %v1288 = vpop.f32.mrb[0].mxu0
        %v1289 = vadd.f32 %v480, %v1288
        %v1290 = vpop.f32.mrb[0].mxu0
        %1291 = vmatprep.mubr.bf16.mxu0 %v766
        %1292 = vmatmul.mubr.bf16.gmra.mrb[0].mxu0 %v765
        %v1293 = vpop.f32.mrb[0].mxu0
        %v1294 = vadd.f32 %v480, %v1293
        %v1295 = vpop.f32.mrb[0].mxu0
        %v1296 = vpop.f32.mrb[0].mxu0
        %v1297 = vadd.f32 %v480, %v1296
        %v1298 = vpop.f32.mrb[0].mxu0
        %1299 = vdwg.mxu0
        %1300 = vmatprep.subr.bf16.mxu0 0
        %1301 = vmatpush1.bf16.msra.mxu0 %v1064
        %1302 = vmatprep.subr.bf16.mxu0 0
        %1303 = vmatpush1.bf16.msra.mxu0 %v1065
        %1304 = vmatprep.subr.bf16.mxu0 0
        %1305 = vmatpush1.bf16.msra.mxu0 %v1066
        %1306 = vmatprep.subr.bf16.mxu0 0
        %1307 = vmatpush1.bf16.msra.mxu0 %v1067
        %1308 = vmatprep.subr.bf16.mxu0 0
        %1309 = vmatpush1.bf16.msra.mxu0 %v1068
        %1310 = vmatprep.subr.bf16.mxu0 0
        %1311 = vmatpush1.bf16.msra.mxu0 %v1069
        %1312 = vmatprep.subr.bf16.mxu0 0
        %1313 = vmatpush1.bf16.msra.mxu0 %v1070
        %1314 = vmatprep.subr.bf16.mxu0 0
        %1315 = vmatpush1.bf16.msra.mxu0 %v1071
        %1316 = vmatprep.subr.bf16.mxu0 0
        %1317 = vmatpush1.bf16.msra.mxu0 %v1072
        %1318 = vmatprep.subr.bf16.mxu0 0
        %1319 = vmatpush1.bf16.msra.mxu0 %v1073
        %1320 = vmatprep.subr.bf16.mxu0 0
        %1321 = vmatpush1.bf16.msra.mxu0 %v1074
        %1322 = vmatprep.subr.bf16.mxu0 0
        %1323 = vmatpush1.bf16.msra.mxu0 %v1075
        %1324 = vmatprep.subr.bf16.mxu0 0
        %1325 = vmatpush1.bf16.msra.mxu0 %v1076
        %1326 = vmatprep.subr.bf16.mxu0 0
        %1327 = vmatpush1.bf16.msra.mxu0 %v1077
        %1328 = vmatprep.subr.bf16.mxu0 0
        %1329 = vmatpush1.bf16.msra.mxu0 %v1078
        %1330 = vmatprep.subr.bf16.mxu0 0
        %1331 = vmatpush1.bf16.msra.mxu0 %v1079
        %1332 = vmatprep.mubr.bf16.mxu0 %v705
        %1333 = vmatmul.mubr.bf16.gmra.mrb[0].mxu0 %v704
        %v1334 = vpop.f32.mrb[0].mxu0
        %v1335 = vadd.f32 %v1222, %v1334
        %v1336 = vpop.f32.mrb[0].mxu0
        %v1337 = vpop.f32.mrb[0].mxu0
        %v1338 = vadd.f32 %v1225, %v1337
        %v1339 = vpop.f32.mrb[0].mxu0
        %1340 = vmatprep.mubr.bf16.mxu0 %v712
        %1341 = vmatmul.mubr.bf16.gmra.mrb[0].mxu0 %v711
        %v1342 = vpop.f32.mrb[0].mxu0
        %v1343 = vadd.f32 %v1230, %v1342
        %v1344 = vpop.f32.mrb[0].mxu0
        %v1345 = vpop.f32.mrb[0].mxu0
        %v1346 = vadd.f32 %v1233, %v1345
        %v1347 = vpop.f32.mrb[0].mxu0
        %1348 = vmatprep.mubr.bf16.mxu0 %v719
        %1349 = vmatmul.mubr.bf16.gmra.mrb[0].mxu0 %v718
        %v1350 = vpop.f32.mrb[0].mxu0
        %v1351 = vadd.f32 %v1238, %v1350
        %v1352 = vpop.f32.mrb[0].mxu0
        %v1353 = vpop.f32.mrb[0].mxu0
        %v1354 = vadd.f32 %v1241, %v1353
        %v1355 = vpop.f32.mrb[0].mxu0
        %1356 = vmatprep.mubr.bf16.mxu0 %v726
        %1357 = vmatmul.mubr.bf16.gmra.mrb[0].mxu0 %v725
        %v1358 = vpop.f32.mrb[0].mxu0
        %v1359 = vadd.f32 %v1246, %v1358
        %v1360 = vpop.f32.mrb[0].mxu0
        %v1361 = vpop.f32.mrb[0].mxu0
        %v1362 = vadd.f32 %v1249, %v1361
        %v1363 = vpop.f32.mrb[0].mxu0
        %1364 = vmatprep.mubr.bf16.mxu0 %v733
        %1365 = vmatmul.mubr.bf16.gmra.mrb[0].mxu0 %v732
        %v1366 = vpop.f32.mrb[0].mxu0
        %v1367 = vadd.f32 %v1254, %v1366
        %v1368 = vpop.f32.mrb[0].mxu0
        %v1369 = vpop.f32.mrb[0].mxu0
        %v1370 = vadd.f32 %v1257, %v1369
        %v1371 = vpop.f32.mrb[0].mxu0
        %1372 = vmatprep.mubr.bf16.mxu0 %v740
        %1373 = vmatmul.mubr.bf16.gmra.mrb[0].mxu0 %v739
        %v1374 = vpop.f32.mrb[0].mxu0
        %v1375 = vadd.f32 %v1262, %v1374
        %v1376 = vpop.f32.mrb[0].mxu0
        %v1377 = vpop.f32.mrb[0].mxu0
        %v1378 = vadd.f32 %v1265, %v1377
        %v1379 = vpop.f32.mrb[0].mxu0
        %1380 = vmatprep.mubr.bf16.mxu0 %v747
        %1381 = vmatmul.mubr.bf16.gmra.mrb[0].mxu0 %v746
        %v1382 = vpop.f32.mrb[0].mxu0
        %v1383 = vadd.f32 %v1270, %v1382
        %v1384 = vpop.f32.mrb[0].mxu0
        %v1385 = vpop.f32.mrb[0].mxu0
        %v1386 = vadd.f32 %v1273, %v1385
        %v1387 = vpop.f32.mrb[0].mxu0
        %1388 = vmatprep.mubr.bf16.mxu0 %v754
        %1389 = vmatmul.mubr.bf16.gmra.mrb[0].mxu0 %v753
        %v1390 = vpop.f32.mrb[0].mxu0
        %v1391 = vadd.f32 %v1278, %v1390
        %v1392 = vpop.f32.mrb[0].mxu0
        %v1393 = vpop.f32.mrb[0].mxu0
        %v1394 = vadd.f32 %v1281, %v1393
        %v1395 = vpop.f32.mrb[0].mxu0
        %1396 = vmatprep.mubr.bf16.mxu0 %v761
        %1397 = vmatmul.mubr.bf16.gmra.mrb[0].mxu0 %v760
        %v1398 = vpop.f32.mrb[0].mxu0
        %v1399 = vadd.f32 %v1286, %v1398
        %v1400 = vpop.f32.mrb[0].mxu0
        %v1401 = vpop.f32.mrb[0].mxu0
        %v1402 = vadd.f32 %v1289, %v1401
        %v1403 = vpop.f32.mrb[0].mxu0
        %1404 = vmatprep.mubr.bf16.mxu0 %v768
        %1405 = vmatmul.mubr.bf16.gmra.mrb[0].mxu0 %v767
        %v1406 = vpop.f32.mrb[0].mxu0
        %v1407 = vadd.f32 %v1294, %v1406
        %v1408 = vpop.f32.mrb[0].mxu0
        %v1409 = vpop.f32.mrb[0].mxu0
        %v1410 = vadd.f32 %v1297, %v1409
        %v1411 = vpop.f32.mrb[0].mxu0
        %1412 = vdwg.mxu0
        %1413 = vmatprep.subr.bf16.mxu0 0
        %1414 = vmatpush1.bf16.msra.mxu0 %v1080
        %1415 = vmatprep.subr.bf16.mxu0 0
        %1416 = vmatpush1.bf16.msra.mxu0 %v1081
        %1417 = vmatprep.subr.bf16.mxu0 0
        %1418 = vmatpush1.bf16.msra.mxu0 %v1082
        %1419 = vmatprep.subr.bf16.mxu0 0
        %1420 = vmatpush1.bf16.msra.mxu0 %v1083
        %1421 = vmatprep.subr.bf16.mxu0 0
        %1422 = vmatpush1.bf16.msra.mxu0 %v1084
        %1423 = vmatprep.subr.bf16.mxu0 0
        %1424 = vmatpush1.bf16.msra.mxu0 %v1085
        %1425 = vmatprep.subr.bf16.mxu0 0
        %1426 = vmatpush1.bf16.msra.mxu0 %v1086
        %1427 = vmatprep.subr.bf16.mxu0 0
        %1428 = vmatpush1.bf16.msra.mxu0 %v1087
        %1429 = vmatprep.subr.bf16.mxu0 0
        %1430 = vmatpush1.bf16.msra.mxu0 %v1088
        %1431 = vmatprep.subr.bf16.mxu0 0
        %1432 = vmatpush1.bf16.msra.mxu0 %v1089
        %1433 = vmatprep.subr.bf16.mxu0 0
        %1434 = vmatpush1.bf16.msra.mxu0 %v1090
        %1435 = vmatprep.subr.bf16.mxu0 0
        %1436 = vmatpush1.bf16.msra.mxu0 %v1091
        %1437 = vmatprep.subr.bf16.mxu0 0
        %1438 = vmatpush1.bf16.msra.mxu0 %v1092
        %1439 = vmatprep.subr.bf16.mxu0 0
        %1440 = vmatpush1.bf16.msra.mxu0 %v1093
        %1441 = vmatprep.subr.bf16.mxu0 0
        %1442 = vmatpush1.bf16.msra.mxu0 %v1094
        %1443 = vmatprep.subr.bf16.mxu0 0
        %1444 = vmatpush1.bf16.msra.mxu0 %v1095
        %1445 = vmatprep.mubr.bf16.mxu0 %v707
        %1446 = vmatmul.mubr.bf16.gmra.mrb[0].mxu0 %v706
        %v1447 = vpop.f32.mrb[0].mxu0
        %v1448 = vadd.f32 %v1335, %v1447
        %v1449 = vpop.f32.mrb[0].mxu0
        %v1450 = vpop.f32.mrb[0].mxu0
        %v1451 = vadd.f32 %v1338, %v1450
        %v1452 = vpop.f32.mrb[0].mxu0
        %1453 = vmatprep.mubr.bf16.mxu0 %v714
        %1454 = vmatmul.mubr.bf16.gmra.mrb[0].mxu0 %v713
        %v1455 = vpop.f32.mrb[0].mxu0
        %v1456 = vadd.f32 %v1343, %v1455
        %v1457 = vpop.f32.mrb[0].mxu0
        %v1458 = vpop.f32.mrb[0].mxu0
        %v1459 = vadd.f32 %v1346, %v1458
        %v1460 = vpop.f32.mrb[0].mxu0
        %1461 = vmatprep.mubr.bf16.mxu0 %v721
        %1462 = vmatmul.mubr.bf16.gmra.mrb[0].mxu0 %v720
        %v1463 = vpop.f32.mrb[0].mxu0
        %v1464 = vadd.f32 %v1351, %v1463
        %v1465 = vpop.f32.mrb[0].mxu0
        %v1466 = vpop.f32.mrb[0].mxu0
        %v1467 = vadd.f32 %v1354, %v1466
        %v1468 = vpop.f32.mrb[0].mxu0
        %1469 = vmatprep.mubr.bf16.mxu0 %v728
        %1470 = vmatmul.mubr.bf16.gmra.mrb[0].mxu0 %v727
        %v1471 = vpop.f32.mrb[0].mxu0
        %v1472 = vadd.f32 %v1359, %v1471
        %v1473 = vpop.f32.mrb[0].mxu0
        %v1474 = vpop.f32.mrb[0].mxu0
        %v1475 = vadd.f32 %v1362, %v1474
        %v1476 = vpop.f32.mrb[0].mxu0
        %1477 = vmatprep.mubr.bf16.mxu0 %v735
        %1478 = vmatmul.mubr.bf16.gmra.mrb[0].mxu0 %v734
        %v1479 = vpop.f32.mrb[0].mxu0
        %v1480 = vadd.f32 %v1367, %v1479
        %v1481 = vpop.f32.mrb[0].mxu0
        %v1482 = vpop.f32.mrb[0].mxu0
        %v1483 = vadd.f32 %v1370, %v1482
        %v1484 = vpop.f32.mrb[0].mxu0
        %1485 = vmatprep.mubr.bf16.mxu0 %v742
        %1486 = vmatmul.mubr.bf16.gmra.mrb[0].mxu0 %v741
        %v1487 = vpop.f32.mrb[0].mxu0
        %v1488 = vadd.f32 %v1375, %v1487
        %v1489 = vpop.f32.mrb[0].mxu0
        %v1490 = vpop.f32.mrb[0].mxu0
        %v1491 = vadd.f32 %v1378, %v1490
        %v1492 = vpop.f32.mrb[0].mxu0
        %1493 = vmatprep.mubr.bf16.mxu0 %v749
        %1494 = vmatmul.mubr.bf16.gmra.mrb[0].mxu0 %v748
        %v1495 = vpop.f32.mrb[0].mxu0
        %v1496 = vadd.f32 %v1383, %v1495
        %v1497 = vpop.f32.mrb[0].mxu0
        %v1498 = vpop.f32.mrb[0].mxu0
        %v1499 = vadd.f32 %v1386, %v1498
        %v1500 = vpop.f32.mrb[0].mxu0
        %1501 = vmatprep.mubr.bf16.mxu0 %v756
        %1502 = vmatmul.mubr.bf16.gmra.mrb[0].mxu0 %v755
        %v1503 = vpop.f32.mrb[0].mxu0
        %v1504 = vadd.f32 %v1391, %v1503
        %v1505 = vpop.f32.mrb[0].mxu0
        %v1506 = vpop.f32.mrb[0].mxu0
        %v1507 = vadd.f32 %v1394, %v1506
        %v1508 = vpop.f32.mrb[0].mxu0
        %1509 = vmatprep.mubr.bf16.mxu0 %v763
        %1510 = vmatmul.mubr.bf16.gmra.mrb[0].mxu0 %v762
        %v1511 = vpop.f32.mrb[0].mxu0
        %v1512 = vadd.f32 %v1399, %v1511
        %v1513 = vpop.f32.mrb[0].mxu0
        %v1514 = vpop.f32.mrb[0].mxu0
        %v1515 = vadd.f32 %v1402, %v1514
        %v1516 = vpop.f32.mrb[0].mxu0
        %1517 = vmatprep.mubr.bf16.mxu0 %v770
        %1518 = vmatmul.mubr.bf16.gmra.mrb[0].mxu0 %v769
        %v1519 = vpop.f32.mrb[0].mxu0
        %v1520 = vadd.f32 %v1407, %v1519
        %v1521 = vpop.f32.mrb[0].mxu0
        %v1522 = vpop.f32.mrb[0].mxu0
        %v1523 = vadd.f32 %v1410, %v1522
        %v1524 = vpop.f32.mrb[0].mxu0
        %1525 = vdwg.mxu0
        %1526 = vmatprep.subr.bf16.mxu0 0
        %1527 = vmatpush1.bf16.msra.mxu0 %v1096
        %1528 = vmatprep.subr.bf16.mxu0 0
        %1529 = vmatpush1.bf16.msra.mxu0 %v1097
        %1530 = vmatprep.subr.bf16.mxu0 0
        %1531 = vmatpush1.bf16.msra.mxu0 %v1098
        %1532 = vmatprep.subr.bf16.mxu0 0
        %1533 = vmatpush1.bf16.msra.mxu0 %v1099
        %1534 = vmatprep.subr.bf16.mxu0 0
        %1535 = vmatpush1.bf16.msra.mxu0 %v1100
        %1536 = vmatprep.subr.bf16.mxu0 0
        %1537 = vmatpush1.bf16.msra.mxu0 %v1101
        %1538 = vmatprep.subr.bf16.mxu0 0
        %1539 = vmatpush1.bf16.msra.mxu0 0
        %1540 = vmatprep.subr.bf16.mxu0 0
        %1541 = vmatpush1.bf16.msra.mxu0 0
        %1542 = vmatprep.subr.bf16.mxu0 0
        %1543 = vmatpush1.bf16.msra.mxu0 0
        %1544 = vmatprep.subr.bf16.mxu0 0
        %1545 = vmatpush1.bf16.msra.mxu0 0
        %1546 = vmatprep.subr.bf16.mxu0 0
        %1547 = vmatpush1.bf16.msra.mxu0 0
        %1548 = vmatprep.subr.bf16.mxu0 0
        %1549 = vmatpush1.bf16.msra.mxu0 0
        %1550 = vmatprep.subr.bf16.mxu0 0
        %1551 = vmatpush1.bf16.msra.mxu0 0
        %1552 = vmatprep.subr.bf16.mxu0 0
        %1553 = vmatpush1.bf16.msra.mxu0 0
        %1554 = vmatprep.subr.bf16.mxu0 0
        %1555 = vmatpush1.bf16.msra.mxu0 0
        %1556 = vmatprep.subr.bf16.mxu0 0
        %1557 = vmatpush1.bf16.msra.mxu0 0
        %1558 = vmatprep.mubr.bf16.mxu0 0
        %1559 = vmatmul.mubr.bf16.gmra.mrb[0].mxu0 %v1158
        %v1560 = vpop.f32.mrb[0].mxu0
        %v1561 = vadd.f32 %v1448, %v1560
        %v1562 = vpop.f32.mrb[0].mxu0
        %v1563 = vpop.f32.mrb[0].mxu0
        %v1564 = vadd.f32 %v1451, %v1563
        %v1565 = vpop.f32.mrb[0].mxu0
        %1566 = vmatprep.mubr.bf16.mxu0 0
        %1567 = vmatmul.mubr.bf16.gmra.mrb[0].mxu0 %v1161
        %v1568 = vpop.f32.mrb[0].mxu0
        %v1569 = vadd.f32 %v1456, %v1568
        %v1570 = vpop.f32.mrb[0].mxu0
        %v1571 = vpop.f32.mrb[0].mxu0
        %v1572 = vadd.f32 %v1459, %v1571
        %v1573 = vpop.f32.mrb[0].mxu0
        %1574 = vmatprep.mubr.bf16.mxu0 0
        %1575 = vmatmul.mubr.bf16.gmra.mrb[0].mxu0 %v1164
        %v1576 = vpop.f32.mrb[0].mxu0
        %v1577 = vadd.f32 %v1464, %v1576
        %v1578 = vpop.f32.mrb[0].mxu0
        %v1579 = vpop.f32.mrb[0].mxu0
        %v1580 = vadd.f32 %v1467, %v1579
        %v1581 = vpop.f32.mrb[0].mxu0
        %1582 = vmatprep.mubr.bf16.mxu0 0
        %1583 = vmatmul.mubr.bf16.gmra.mrb[0].mxu0 %v1167
        %v1584 = vpop.f32.mrb[0].mxu0
        %v1585 = vadd.f32 %v1472, %v1584
        %v1586 = vpop.f32.mrb[0].mxu0
        %v1587 = vpop.f32.mrb[0].mxu0
        %v1588 = vadd.f32 %v1475, %v1587
        %v1589 = vpop.f32.mrb[0].mxu0
        %1590 = vmatprep.mubr.bf16.mxu0 0
        %1591 = vmatmul.mubr.bf16.gmra.mrb[0].mxu0 %v1170
        %v1592 = vpop.f32.mrb[0].mxu0
        %v1593 = vadd.f32 %v1480, %v1592
        %v1594 = vpop.f32.mrb[0].mxu0
        %v1595 = vpop.f32.mrb[0].mxu0
        %v1596 = vadd.f32 %v1483, %v1595
        %v1597 = vpop.f32.mrb[0].mxu0
        %1598 = vmatprep.mubr.bf16.mxu0 0
        %1599 = vmatmul.mubr.bf16.gmra.mrb[0].mxu0 %v1173
        %v1600 = vpop.f32.mrb[0].mxu0
        %v1601 = vadd.f32 %v1488, %v1600
        %v1602 = vpop.f32.mrb[0].mxu0
        %v1603 = vpop.f32.mrb[0].mxu0
        %v1604 = vadd.f32 %v1491, %v1603
        %v1605 = vpop.f32.mrb[0].mxu0
        %1606 = vmatprep.mubr.bf16.mxu0 0
        %1607 = vmatmul.mubr.bf16.gmra.mrb[0].mxu0 %v1176
        %v1608 = vpop.f32.mrb[0].mxu0
        %v1609 = vadd.f32 %v1496, %v1608
        %v1610 = vpop.f32.mrb[0].mxu0
        %v1611 = vpop.f32.mrb[0].mxu0
        %v1612 = vadd.f32 %v1499, %v1611
        %v1613 = vpop.f32.mrb[0].mxu0
        %1614 = vmatprep.mubr.bf16.mxu0 0
        %1615 = vmatmul.mubr.bf16.gmra.mrb[0].mxu0 %v1179
        %v1616 = vpop.f32.mrb[0].mxu0
        %v1617 = vadd.f32 %v1504, %v1616
        %v1618 = vpop.f32.mrb[0].mxu0
        %v1619 = vpop.f32.mrb[0].mxu0
        %v1620 = vadd.f32 %v1507, %v1619
        %v1621 = vpop.f32.mrb[0].mxu0
        %1622 = vmatprep.mubr.bf16.mxu0 0
        %1623 = vmatmul.mubr.bf16.gmra.mrb[0].mxu0 %v1182
        %v1624 = vpop.f32.mrb[0].mxu0
        %v1625 = vadd.f32 %v1512, %v1624
        %v1626 = vpop.f32.mrb[0].mxu0
        %v1627 = vpop.f32.mrb[0].mxu0
        %v1628 = vadd.f32 %v1515, %v1627
        %v1629 = vpop.f32.mrb[0].mxu0
        %1630 = vmatprep.mubr.bf16.mxu0 0
        %1631 = vmatmul.mubr.bf16.gmra.mrb[0].mxu0 %v1185
        %v1632 = vpop.f32.mrb[0].mxu0
        %v1633 = vadd.f32 %v1520, %v1632
        %v1634 = vpop.f32.mrb[0].mxu0
        %v1635 = vpop.f32.mrb[0].mxu0
        %v1636 = vadd.f32 %v1523, %v1635
        %v1637 = vpop.f32.mrb[0].mxu0
        %1638 = vdwg.mxu0
        %v1639 = vxor.u32 %v1561, 2147483648
        %v1640 = vxor.u32 %v1564, 2147483648
        %v1641 = vxor.u32 %v1569, 2147483648
        %v1642 = vxor.u32 %v1572, 2147483648
        %v1643 = vxor.u32 %v1577, 2147483648
        %v1644 = vxor.u32 %v1580, 2147483648
        %v1645 = vxor.u32 %v1585, 2147483648
        %v1646 = vxor.u32 %v1588, 2147483648
        %v1647 = vxor.u32 %v1593, 2147483648
        %v1648 = vxor.u32 %v1596, 2147483648
        %v1649 = vxor.u32 %v1601, 2147483648
        %v1650 = vxor.u32 %v1604, 2147483648
        %v1651 = vxor.u32 %v1609, 2147483648
        %v1652 = vxor.u32 %v1612, 2147483648
        %v1653 = vxor.u32 %v1617, 2147483648
        %v1654 = vxor.u32 %v1620, 2147483648
        %v1655 = vxor.u32 %v1625, 2147483648
        %v1656 = vxor.u32 %v1628, 2147483648
        %v1657 = vxor.u32 %v1633, 2147483648
        %v1658 = vxor.u32 %v1636, 2147483648
        %v1659 = vmul.f32 %v1639, 1.442695
        %v1660 = vpow.pop %v1659
        %v1661 = vmul.f32 %v1640, 1.442695
        %v1662 = vpow.pop %v1661
        %v1663 = vmul.f32 %v1641, 1.442695
        %v1664 = vpow.pop %v1663
        %v1665 = vmul.f32 %v1642, 1.442695
        %v1666 = vpow.pop %v1665
        %v1667 = vmul.f32 %v1643, 1.442695
        %v1668 = vpow.pop %v1667
        %v1669 = vmul.f32 %v1644, 1.442695
        %v1670 = vpow.pop %v1669
        %v1671 = vmul.f32 %v1645, 1.442695
        %v1672 = vpow.pop %v1671
        %v1673 = vmul.f32 %v1646, 1.442695
        %v1674 = vpow.pop %v1673
        %v1675 = vmul.f32 %v1647, 1.442695
        %v1676 = vpow.pop %v1675
        %v1677 = vmul.f32 %v1648, 1.442695
        %v1678 = vpow.pop %v1677
        %v1679 = vmul.f32 %v1649, 1.442695
        %v1680 = vpow.pop %v1679
        %v1681 = vmul.f32 %v1650, 1.442695
        %v1682 = vpow.pop %v1681
        %v1683 = vmul.f32 %v1651, 1.442695
        %v1684 = vpow.pop %v1683
        %v1685 = vmul.f32 %v1652, 1.442695
        %v1686 = vpow.pop %v1685
        %v1687 = vmul.f32 %v1653, 1.442695
        %v1688 = vpow.pop %v1687
        %v1689 = vmul.f32 %v1654, 1.442695
        %v1690 = vpow.pop %v1689
        %v1691 = vmul.f32 %v1655, 1.442695
        %v1692 = vpow.pop %v1691
        %v1693 = vmul.f32 %v1656, 1.442695
        %v1694 = vpow.pop %v1693
        %v1695 = vmul.f32 %v1657, 1.442695
        %v1696 = vpow.pop %v1695
        %v1697 = vmul.f32 %v1658, 1.442695
        %v1698 = vpow.pop %v1697
        %v1699 = vadd.f32 %v1660, 1.0
        %v1700 = vadd.f32 %v1662, 1.0
        %v1701 = vadd.f32 %v1664, 1.0
        %v1702 = vadd.f32 %v1666, 1.0
        %v1703 = vadd.f32 %v1668, 1.0
        %v1704 = vadd.f32 %v1670, 1.0
        %v1705 = vadd.f32 %v1672, 1.0
        %v1706 = vadd.f32 %v1674, 1.0
        %v1707 = vadd.f32 %v1676, 1.0
        %v1708 = vadd.f32 %v1678, 1.0
        %v1709 = vadd.f32 %v1680, 1.0
        %v1710 = vadd.f32 %v1682, 1.0
        %v1711 = vadd.f32 %v1684, 1.0
        %v1712 = vadd.f32 %v1686, 1.0
        %v1713 = vadd.f32 %v1688, 1.0
        %v1714 = vadd.f32 %v1690, 1.0
        %v1715 = vadd.f32 %v1692, 1.0
        %v1716 = vadd.f32 %v1694, 1.0
        %v1717 = vadd.f32 %v1696, 1.0
        %v1718 = vadd.f32 %v1698, 1.0
        %v1719 = vrcp.pop %v1699
        %v1720 = vmul.f32 1.0, %v1719
        %v1721 = vrcp.pop %v1700
        %v1722 = vmul.f32 1.0, %v1721
        %v1723 = vrcp.pop %v1701
        %v1724 = vmul.f32 1.0, %v1723
        %v1725 = vrcp.pop %v1702
        %v1726 = vmul.f32 1.0, %v1725
        %v1727 = vrcp.pop %v1703
        %v1728 = vmul.f32 1.0, %v1727
        %v1729 = vrcp.pop %v1704
        %v1730 = vmul.f32 1.0, %v1729
        %v1731 = vrcp.pop %v1705
        %v1732 = vmul.f32 1.0, %v1731
        %v1733 = vrcp.pop %v1706
        %v1734 = vmul.f32 1.0, %v1733
        %v1735 = vrcp.pop %v1707
        %v1736 = vmul.f32 1.0, %v1735
        %v1737 = vrcp.pop %v1708
        %v1738 = vmul.f32 1.0, %v1737
        %v1739 = vrcp.pop %v1709
        %v1740 = vmul.f32 1.0, %v1739
        %v1741 = vrcp.pop %v1710
        %v1742 = vmul.f32 1.0, %v1741
        %v1743 = vrcp.pop %v1711
        %v1744 = vmul.f32 1.0, %v1743
        %v1745 = vrcp.pop %v1712
        %v1746 = vmul.f32 1.0, %v1745
        %v1747 = vrcp.pop %v1713
        %v1748 = vmul.f32 1.0, %v1747
        %v1749 = vrcp.pop %v1714
        %v1750 = vmul.f32 1.0, %v1749
        %v1751 = vrcp.pop %v1715
        %v1752 = vmul.f32 1.0, %v1751
        %v1753 = vrcp.pop %v1716
        %v1754 = vmul.f32 1.0, %v1753
        %v1755 = vrcp.pop %v1717
        %v1756 = vmul.f32 1.0, %v1755
        %v1757 = vrcp.pop %v1718
        %v1758 = vmul.f32 1.0, %v1757
        %v1759 = vld [vmem:[%s284] sm:$0xff]
        %v1760 = vld [vmem:[%s284 + $0x8] sm:$0xff]
        %v1761 = vld [vmem:[%s284 + $0x10] sm:$0xff]
        %v1762 = vld [vmem:[%s284 + $0x18] sm:$0xff]
        %v1763 = vld [vmem:[%s284 + $0x20] sm:$0xff]
        %v1764 = vld [vmem:[%s284 + $0x28] sm:$0xff]
        %v1765 = vld [vmem:[%s284 + $0x30] sm:$0xff]
        %v1766 = vld [vmem:[%s284 + $0x38] sm:$0xff]
        %v1767 = vld [vmem:[%s284 + $0x40] sm:$0xff]
        %v1768 = vld [vmem:[%s284 + $0x48] sm:$0xff]
        %v1769 = vld [vmem:[%s284 + $0x50] sm:$0xff]
        %v1770 = vld [vmem:[%s284 + $0x58] sm:$0xff]
        %v1771 = vld [vmem:[%s284 + $0x60] sm:$0xff]
        %v1772 = vld [vmem:[%s284 + $0x68] sm:$0xff]
        %v1773 = vld [vmem:[%s284 + $0x70] sm:$0xff]
        %v1774 = vld [vmem:[%s284 + $0x78] sm:$0xff]
        %v1775 = vld [vmem:[%s284 + $0x80] sm:$0xff]
        %v1776 = vld [vmem:[%s284 + $0x88] sm:$0xff]
        %v1777 = vld [vmem:[%s284 + $0x90] sm:$0xff]
        %v1778 = vld [vmem:[%s284 + $0x98] sm:$0xff]
        %1799 = vrot.lane.b32.xlu0 %v1759, 32
        %v1800 = vpop.permute.xlu0 %1799
        %1801 = vrot.lane.b32.xlu0 %v1760, 32
        %v1802 = vpop.permute.xlu0 %1801
        %1803 = vrot.lane.b32.xlu0 %v1761, 32
        %v1804 = vpop.permute.xlu0 %1803
        %1805 = vrot.lane.b32.xlu0 %v1762, 32
        %v1806 = vpop.permute.xlu0 %1805
        %1807 = vrot.lane.b32.xlu0 %v1763, 32
        %v1808 = vpop.permute.xlu0 %1807
        %1809 = vrot.lane.b32.xlu0 %v1764, 32
        %v1810 = vpop.permute.xlu0 %1809
        %1811 = vrot.lane.b32.xlu0 %v1765, 32
        %v1812 = vpop.permute.xlu0 %1811
        %1813 = vrot.lane.b32.xlu0 %v1766, 32
        %v1814 = vpop.permute.xlu0 %1813
        %1815 = vrot.lane.b32.xlu0 %v1767, 32
        %v1816 = vpop.permute.xlu0 %1815
        %1817 = vrot.lane.b32.xlu0 %v1768, 32
        %v1818 = vpop.permute.xlu0 %1817
        %1819 = vrot.lane.b32.xlu0 %v1769, 32
        %v1820 = vpop.permute.xlu0 %1819
        %1821 = vrot.lane.b32.xlu0 %v1770, 32
        %v1822 = vpop.permute.xlu0 %1821
        %1823 = vrot.lane.b32.xlu0 %v1771, 32
        %v1824 = vpop.permute.xlu0 %1823
        %1825 = vrot.lane.b32.xlu0 %v1772, 32
        %v1826 = vpop.permute.xlu0 %1825
        %1827 = vrot.lane.b32.xlu0 %v1773, 32
        %v1828 = vpop.permute.xlu0 %1827
        %1829 = vrot.lane.b32.xlu0 %v1774, 32
        %v1830 = vpop.permute.xlu0 %1829
        %1831 = vrot.lane.b32.xlu0 %v1775, 32
        %v1832 = vpop.permute.xlu0 %1831
        %1833 = vrot.lane.b32.xlu0 %v1776, 32
        %v1834 = vpop.permute.xlu0 %1833
        %1835 = vrot.lane.b32.xlu0 %v1777, 32
        %v1836 = vpop.permute.xlu0 %1835
        %1837 = vrot.lane.b32.xlu0 %v1778, 32
        %v1838 = vpop.permute.xlu0 %1837
        %v1859 = vmul.f32 %v1720, %v1800
        %v1860 = vmul.f32 %v1722, %v1802
        %v1861 = vmul.f32 %v1724, %v1804
        %v1862 = vmul.f32 %v1726, %v1806
        %v1863 = vmul.f32 %v1728, %v1808
        %v1864 = vmul.f32 %v1730, %v1810
        %v1865 = vmul.f32 %v1732, %v1812
        %v1866 = vmul.f32 %v1734, %v1814
        %v1867 = vmul.f32 %v1736, %v1816
        %v1868 = vmul.f32 %v1738, %v1818
        %v1869 = vmul.f32 %v1740, %v1820
        %v1870 = vmul.f32 %v1742, %v1822
        %v1871 = vmul.f32 %v1744, %v1824
        %v1872 = vmul.f32 %v1746, %v1826
        %v1873 = vmul.f32 %v1748, %v1828
        %v1874 = vmul.f32 %v1750, %v1830
        %v1875 = vmul.f32 %v1752, %v1832
        %v1876 = vmul.f32 %v1754, %v1834
        %v1877 = vmul.f32 %v1756, %v1836
        %v1878 = vmul.f32 %v1758, %v1838
        %vm1879 = vcmask 253952
        %1880 = vst.msk [vmem:[#allocation2] sm:$0x1] %vm1879, 0.0
        %1881 = vst.msk [vmem:[#allocation2 + $0x18] sm:$0x1] %vm1879, 0.0
        %1882 = vst.msk [vmem:[#allocation2 + $0x30] sm:$0x1] %vm1879, 0.0
        %1883 = vst.msk [vmem:[#allocation2 + $0x48] sm:$0x1] %vm1879, 0.0
        %1884 = vst.msk [vmem:[#allocation2 + $0x60] sm:$0x1] %vm1879, 0.0
        %1885 = vst.msk [vmem:[#allocation2 + $0x78] sm:$0x1] %vm1879, 0.0
        %1886 = vst.msk [vmem:[#allocation2 + $0x90] sm:$0x1] %vm1879, 0.0
        %1887 = vst.msk [vmem:[#allocation2 + $0xa8] sm:$0x1] %vm1879, 0.0
        %1888 = vst.msk [vmem:[#allocation2 + $0xc0] sm:$0x1] %vm1879, 0.0
        %1889 = vst.msk [vmem:[#allocation2 + $0xd8] sm:$0x1] %vm1879, 0.0
        %1890 = vst.msk [vmem:[#allocation2 + $0x11] sm:$0x1] %vm1879, 0.0
        %1891 = vst.msk [vmem:[#allocation2 + $0x29] sm:$0x1] %vm1879, 0.0
        %1892 = vst.msk [vmem:[#allocation2 + $0x41] sm:$0x1] %vm1879, 0.0
        %1893 = vst.msk [vmem:[#allocation2 + $0x59] sm:$0x1] %vm1879, 0.0
        %1894 = vst.msk [vmem:[#allocation2 + $0x71] sm:$0x1] %vm1879, 0.0
        %1895 = vst.msk [vmem:[#allocation2 + $0x89] sm:$0x1] %vm1879, 0.0
        %1896 = vst.msk [vmem:[#allocation2 + $0xa1] sm:$0x1] %vm1879, 0.0
        %1897 = vst.msk [vmem:[#allocation2 + $0xb9] sm:$0x1] %vm1879, 0.0
        %1898 = vst.msk [vmem:[#allocation2 + $0xd1] sm:$0x1] %vm1879, 0.0
        %1899 = vst.msk [vmem:[#allocation2 + $0xe9] sm:$0x1] %vm1879, 0.0
        %1920 = vrot.lane.b32.xlu0 %v1859, 96
        %v1921 = vpop.permute.xlu0 %1920
        %1922 = vrot.lane.b32.xlu0 %v1860, 96
        %v1923 = vpop.permute.xlu0 %1922
        %1924 = vrot.lane.b32.xlu0 %v1861, 96
        %v1925 = vpop.permute.xlu0 %1924
        %1926 = vrot.lane.b32.xlu0 %v1862, 96
        %v1927 = vpop.permute.xlu0 %1926
        %1928 = vrot.lane.b32.xlu0 %v1863, 96
        %v1929 = vpop.permute.xlu0 %1928
        %1930 = vrot.lane.b32.xlu0 %v1864, 96
        %v1931 = vpop.permute.xlu0 %1930
        %1932 = vrot.lane.b32.xlu0 %v1865, 96
        %v1933 = vpop.permute.xlu0 %1932
        %1934 = vrot.lane.b32.xlu0 %v1866, 96
        %v1935 = vpop.permute.xlu0 %1934
        %1936 = vrot.lane.b32.xlu0 %v1867, 96
        %v1937 = vpop.permute.xlu0 %1936
        %1938 = vrot.lane.b32.xlu0 %v1868, 96
        %v1939 = vpop.permute.xlu0 %1938
        %1940 = vrot.lane.b32.xlu0 %v1869, 96
        %v1941 = vpop.permute.xlu0 %1940
        %1942 = vrot.lane.b32.xlu0 %v1870, 96
        %v1943 = vpop.permute.xlu0 %1942
        %1944 = vrot.lane.b32.xlu0 %v1871, 96
        %v1945 = vpop.permute.xlu0 %1944
        %1946 = vrot.lane.b32.xlu0 %v1872, 96
        %v1947 = vpop.permute.xlu0 %1946
        %1948 = vrot.lane.b32.xlu0 %v1873, 96
        %v1949 = vpop.permute.xlu0 %1948
        %1950 = vrot.lane.b32.xlu0 %v1874, 96
        %v1951 = vpop.permute.xlu0 %1950
        %1952 = vrot.lane.b32.xlu0 %v1875, 96
        %v1953 = vpop.permute.xlu0 %1952
        %1954 = vrot.lane.b32.xlu0 %v1876, 96
        %v1955 = vpop.permute.xlu0 %1954
        %1956 = vrot.lane.b32.xlu0 %v1877, 96
        %v1957 = vpop.permute.xlu0 %1956
        %1958 = vrot.lane.b32.xlu0 %v1878, 96
        %v1959 = vpop.permute.xlu0 %1958
        %vm1980 = vcmask 261120
        %1981 = vst.msk [vmem:[#allocation2 + $0x1] sm:$0xff] %vm1980, %v1921
        %1982 = vst.msk [vmem:[#allocation2 + $0x9] sm:$0xff] %vm1980, %v1923
        %1983 = vst.msk [vmem:[#allocation2 + $0x19] sm:$0xff] %vm1980, %v1925
        %1984 = vst.msk [vmem:[#allocation2 + $0x21] sm:$0xff] %vm1980, %v1927
        %1985 = vst.msk [vmem:[#allocation2 + $0x31] sm:$0xff] %vm1980, %v1929
        %1986 = vst.msk [vmem:[#allocation2 + $0x39] sm:$0xff] %vm1980, %v1931
        %1987 = vst.msk [vmem:[#allocation2 + $0x49] sm:$0xff] %vm1980, %v1933
        %1988 = vst.msk [vmem:[#allocation2 + $0x51] sm:$0xff] %vm1980, %v1935
        %1989 = vst.msk [vmem:[#allocation2 + $0x61] sm:$0xff] %vm1980, %v1937
        %1990 = vst.msk [vmem:[#allocation2 + $0x69] sm:$0xff] %vm1980, %v1939
        %1991 = vst.msk [vmem:[#allocation2 + $0x79] sm:$0xff] %vm1980, %v1941
        %1992 = vst.msk [vmem:[#allocation2 + $0x81] sm:$0xff] %vm1980, %v1943
        %1993 = vst.msk [vmem:[#allocation2 + $0x91] sm:$0xff] %vm1980, %v1945
        %1994 = vst.msk [vmem:[#allocation2 + $0x99] sm:$0xff] %vm1980, %v1947
        %1995 = vst.msk [vmem:[#allocation2 + $0xa9] sm:$0xff] %vm1980, %v1949
        %1996 = vst.msk [vmem:[#allocation2 + $0xb1] sm:$0xff] %vm1980, %v1951
        %1997 = vst.msk [vmem:[#allocation2 + $0xc1] sm:$0xff] %vm1980, %v1953
        %1998 = vst.msk [vmem:[#allocation2 + $0xc9] sm:$0xff] %vm1980, %v1955
        %1999 = vst.msk [vmem:[#allocation2 + $0xd9] sm:$0xff] %vm1980, %v1957
        %2000 = vst.msk [vmem:[#allocation2 + $0xe1] sm:$0xff] %vm1980, %v1959
        %v2001 = vld [vmem:[#allocation2] sm:$0xff]
        %v2002 = vld [vmem:[#allocation2 + $0x8] sm:$0xff]
        %v2003 = vld [vmem:[#allocation2 + $0x18] sm:$0xff]
        %v2004 = vld [vmem:[#allocation2 + $0x20] sm:$0xff]
        %v2005 = vld [vmem:[#allocation2 + $0x30] sm:$0xff]
        %v2006 = vld [vmem:[#allocation2 + $0x38] sm:$0xff]
        %v2007 = vld [vmem:[#allocation2 + $0x48] sm:$0xff]
        %v2008 = vld [vmem:[#allocation2 + $0x50] sm:$0xff]
        %v2009 = vld [vmem:[#allocation2 + $0x60] sm:$0xff]
        %v2010 = vld [vmem:[#allocation2 + $0x68] sm:$0xff]
        %v2011 = vld [vmem:[#allocation2 + $0x78] sm:$0xff]
        %v2012 = vld [vmem:[#allocation2 + $0x80] sm:$0xff]
        %v2013 = vld [vmem:[#allocation2 + $0x90] sm:$0xff]
        %v2014 = vld [vmem:[#allocation2 + $0x98] sm:$0xff]
        %v2015 = vld [vmem:[#allocation2 + $0xa8] sm:$0xff]
        %v2016 = vld [vmem:[#allocation2 + $0xb0] sm:$0xff]
        %2017 = vst.msk [vmem:[#allocation3] sm:$0xff] %vm1980, %v2001
        %2018 = vst.msk [vmem:[#allocation3 + $0x18] sm:$0xff] %vm1980, %v2002
        %2019 = vst.msk [vmem:[#allocation3 + $0x30] sm:$0xff] %vm1980, %v2003
        %2020 = vst.msk [vmem:[#allocation3 + $0x48] sm:$0xff] %vm1980, %v2004
        %2021 = vst.msk [vmem:[#allocation3 + $0x60] sm:$0xff] %vm1980, %v2005
        %2022 = vst.msk [vmem:[#allocation3 + $0x78] sm:$0xff] %vm1980, %v2006
        %2023 = vst.msk [vmem:[#allocation3 + $0x90] sm:$0xff] %vm1980, %v2007
        %2024 = vst.msk [vmem:[#allocation3 + $0xa8] sm:$0xff] %vm1980, %v2008
        %2025 = vst.msk [vmem:[#allocation3 + $0xc0] sm:$0xff] %vm1980, %v2009
        %2026 = vst.msk [vmem:[#allocation3 + $0xd8] sm:$0xff] %vm1980, %v2010
        %2027 = vst.msk [vmem:[#allocation3 + $0xf0] sm:$0xff] %vm1980, %v2011
        %2028 = vst.msk [vmem:[#allocation3 + $0x108] sm:$0xff] %vm1980, %v2012
        %2029 = vst.msk [vmem:[#allocation3 + $0x120] sm:$0xff] %vm1980, %v2013
        %2030 = vst.msk [vmem:[#allocation3 + $0x138] sm:$0xff] %vm1980, %v2014
        %2031 = vst.msk [vmem:[#allocation3 + $0x150] sm:$0xff] %vm1980, %v2015
        %2032 = vst.msk [vmem:[#allocation3 + $0x168] sm:$0xff] %vm1980, %v2016
        %v2033 = vld [vmem:[#allocation2 + $0x1] sm:$0xff]
        %v2034 = vld [vmem:[#allocation2 + $0x9] sm:$0xff]
        %v2035 = vld [vmem:[#allocation2 + $0x19] sm:$0xff]
        %v2036 = vld [vmem:[#allocation2 + $0x21] sm:$0xff]
        %v2037 = vld [vmem:[#allocation2 + $0x31] sm:$0xff]
        %v2038 = vld [vmem:[#allocation2 + $0x39] sm:$0xff]
        %v2039 = vld [vmem:[#allocation2 + $0x49] sm:$0xff]
        %v2040 = vld [vmem:[#allocation2 + $0x51] sm:$0xff]
        %v2041 = vld [vmem:[#allocation2 + $0x61] sm:$0xff]
        %v2042 = vld [vmem:[#allocation2 + $0x69] sm:$0xff]
        %v2043 = vld [vmem:[#allocation2 + $0x79] sm:$0xff]
        %v2044 = vld [vmem:[#allocation2 + $0x81] sm:$0xff]
        %v2045 = vld [vmem:[#allocation2 + $0x91] sm:$0xff]
        %v2046 = vld [vmem:[#allocation2 + $0x99] sm:$0xff]
        %v2047 = vld [vmem:[#allocation2 + $0xa9] sm:$0xff]
        %v2048 = vld [vmem:[#allocation2 + $0xb1] sm:$0xff]
        %2065 = vrot.lane.b32.xlu0 %v2033, 32
        %v2066 = vpop.permute.xlu0 %2065
        %2067 = vrot.lane.b32.xlu0 %v2034, 32
        %v2068 = vpop.permute.xlu0 %2067
        %2069 = vrot.lane.b32.xlu0 %v2035, 32
        %v2070 = vpop.permute.xlu0 %2069
        %2071 = vrot.lane.b32.xlu0 %v2036, 32
        %v2072 = vpop.permute.xlu0 %2071
        %2073 = vrot.lane.b32.xlu0 %v2037, 32
        %v2074 = vpop.permute.xlu0 %2073
        %2075 = vrot.lane.b32.xlu0 %v2038, 32
        %v2076 = vpop.permute.xlu0 %2075
        %2077 = vrot.lane.b32.xlu0 %v2039, 32
        %v2078 = vpop.permute.xlu0 %2077
        %2079 = vrot.lane.b32.xlu0 %v2040, 32
        %v2080 = vpop.permute.xlu0 %2079
        %2081 = vrot.lane.b32.xlu0 %v2041, 32
        %v2082 = vpop.permute.xlu0 %2081
        %2083 = vrot.lane.b32.xlu0 %v2042, 32
        %v2084 = vpop.permute.xlu0 %2083
        %2085 = vrot.lane.b32.xlu0 %v2043, 32
        %v2086 = vpop.permute.xlu0 %2085
        %2087 = vrot.lane.b32.xlu0 %v2044, 32
        %v2088 = vpop.permute.xlu0 %2087
        %2089 = vrot.lane.b32.xlu0 %v2045, 32
        %v2090 = vpop.permute.xlu0 %2089
        %2091 = vrot.lane.b32.xlu0 %v2046, 32
        %v2092 = vpop.permute.xlu0 %2091
        %2093 = vrot.lane.b32.xlu0 %v2047, 32
        %v2094 = vpop.permute.xlu0 %2093
        %2095 = vrot.lane.b32.xlu0 %v2048, 32
        %v2096 = vpop.permute.xlu0 %2095
        %vm2113 = vcmask 523520
        %2114 = vst.msk [vmem:[#allocation3] sm:$0xff] %vm2113, %v2066
        %2115 = vst.msk [vmem:[#allocation3 + $0x18] sm:$0xff] %vm2113, %v2068
        %2116 = vst.msk [vmem:[#allocation3 + $0x30] sm:$0xff] %vm2113, %v2070
        %2117 = vst.msk [vmem:[#allocation3 + $0x48] sm:$0xff] %vm2113, %v2072
        %2118 = vst.msk [vmem:[#allocation3 + $0x60] sm:$0xff] %vm2113, %v2074
        %2119 = vst.msk [vmem:[#allocation3 + $0x78] sm:$0xff] %vm2113, %v2076
        %2120 = vst.msk [vmem:[#allocation3 + $0x90] sm:$0xff] %vm2113, %v2078
        %2121 = vst.msk [vmem:[#allocation3 + $0xa8] sm:$0xff] %vm2113, %v2080
        %2122 = vst.msk [vmem:[#allocation3 + $0xc0] sm:$0xff] %vm2113, %v2082
        %2123 = vst.msk [vmem:[#allocation3 + $0xd8] sm:$0xff] %vm2113, %v2084
        %2124 = vst.msk [vmem:[#allocation3 + $0xf0] sm:$0xff] %vm2113, %v2086
        %2125 = vst.msk [vmem:[#allocation3 + $0x108] sm:$0xff] %vm2113, %v2088
        %2126 = vst.msk [vmem:[#allocation3 + $0x120] sm:$0xff] %vm2113, %v2090
        %2127 = vst.msk [vmem:[#allocation3 + $0x138] sm:$0xff] %vm2113, %v2092
        %2128 = vst.msk [vmem:[#allocation3 + $0x150] sm:$0xff] %vm2113, %v2094
        %2129 = vst.msk [vmem:[#allocation3 + $0x168] sm:$0xff] %vm2113, %v2096
        %v2130 = vld [vmem:[#allocation2 + $0x2] sm:$0xff]
        %v2131 = vld [vmem:[#allocation2 + $0xa] sm:$0xff]
        %v2132 = vld [vmem:[#allocation2 + $0x1a] sm:$0xff]
        %v2133 = vld [vmem:[#allocation2 + $0x22] sm:$0xff]
        %v2134 = vld [vmem:[#allocation2 + $0x32] sm:$0xff]
        %v2135 = vld [vmem:[#allocation2 + $0x3a] sm:$0xff]
        %v2136 = vld [vmem:[#allocation2 + $0x4a] sm:$0xff]
        %v2137 = vld [vmem:[#allocation2 + $0x52] sm:$0xff]
        %v2138 = vld [vmem:[#allocation2 + $0x62] sm:$0xff]
        %v2139 = vld [vmem:[#allocation2 + $0x6a] sm:$0xff]
        %v2140 = vld [vmem:[#allocation2 + $0x7a] sm:$0xff]
        %v2141 = vld [vmem:[#allocation2 + $0x82] sm:$0xff]
        %v2142 = vld [vmem:[#allocation2 + $0x92] sm:$0xff]
        %v2143 = vld [vmem:[#allocation2 + $0x9a] sm:$0xff]
        %v2144 = vld [vmem:[#allocation2 + $0xaa] sm:$0xff]
        %v2145 = vld [vmem:[#allocation2 + $0xb2] sm:$0xff]
        %2162 = vrot.lane.b32.xlu0 %v2130, 64
        %v2163 = vpop.permute.xlu0 %2162
        %2164 = vrot.lane.b32.xlu0 %v2131, 64
        %v2165 = vpop.permute.xlu0 %2164
        %2166 = vrot.lane.b32.xlu0 %v2132, 64
        %v2167 = vpop.permute.xlu0 %2166
        %2168 = vrot.lane.b32.xlu0 %v2133, 64
        %v2169 = vpop.permute.xlu0 %2168
        %2170 = vrot.lane.b32.xlu0 %v2134, 64
        %v2171 = vpop.permute.xlu0 %2170
        %2172 = vrot.lane.b32.xlu0 %v2135, 64
        %v2173 = vpop.permute.xlu0 %2172
        %2174 = vrot.lane.b32.xlu0 %v2136, 64
        %v2175 = vpop.permute.xlu0 %2174
        %2176 = vrot.lane.b32.xlu0 %v2137, 64
        %v2177 = vpop.permute.xlu0 %2176
        %2178 = vrot.lane.b32.xlu0 %v2138, 64
        %v2179 = vpop.permute.xlu0 %2178
        %2180 = vrot.lane.b32.xlu0 %v2139, 64
        %v2181 = vpop.permute.xlu0 %2180
        %2182 = vrot.lane.b32.xlu0 %v2140, 64
        %v2183 = vpop.permute.xlu0 %2182
        %2184 = vrot.lane.b32.xlu0 %v2141, 64
        %v2185 = vpop.permute.xlu0 %2184
        %2186 = vrot.lane.b32.xlu0 %v2142, 64
        %v2187 = vpop.permute.xlu0 %2186
        %2188 = vrot.lane.b32.xlu0 %v2143, 64
        %v2189 = vpop.permute.xlu0 %2188
        %2190 = vrot.lane.b32.xlu0 %v2144, 64
        %v2191 = vpop.permute.xlu0 %2190
        %2192 = vrot.lane.b32.xlu0 %v2145, 64
        %v2193 = vpop.permute.xlu0 %2192
        %vm2210 = vcmask 785920
        %2211 = vst.msk [vmem:[#allocation3] sm:$0xff] %vm2210, %v2163
        %2212 = vst.msk [vmem:[#allocation3 + $0x18] sm:$0xff] %vm2210, %v2165
        %2213 = vst.msk [vmem:[#allocation3 + $0x30] sm:$0xff] %vm2210, %v2167
        %2214 = vst.msk [vmem:[#allocation3 + $0x48] sm:$0xff] %vm2210, %v2169
        %2215 = vst.msk [vmem:[#allocation3 + $0x60] sm:$0xff] %vm2210, %v2171
        %2216 = vst.msk [vmem:[#allocation3 + $0x78] sm:$0xff] %vm2210, %v2173
        %2217 = vst.msk [vmem:[#allocation3 + $0x90] sm:$0xff] %vm2210, %v2175
        %2218 = vst.msk [vmem:[#allocation3 + $0xa8] sm:$0xff] %vm2210, %v2177
        %2219 = vst.msk [vmem:[#allocation3 + $0xc0] sm:$0xff] %vm2210, %v2179
        %2220 = vst.msk [vmem:[#allocation3 + $0xd8] sm:$0xff] %vm2210, %v2181
        %2221 = vst.msk [vmem:[#allocation3 + $0xf0] sm:$0xff] %vm2210, %v2183
        %2222 = vst.msk [vmem:[#allocation3 + $0x108] sm:$0xff] %vm2210, %v2185
        %2223 = vst.msk [vmem:[#allocation3 + $0x120] sm:$0xff] %vm2210, %v2187
        %2224 = vst.msk [vmem:[#allocation3 + $0x138] sm:$0xff] %vm2210, %v2189
        %2225 = vst.msk [vmem:[#allocation3 + $0x150] sm:$0xff] %vm2210, %v2191
        %2226 = vst.msk [vmem:[#allocation3 + $0x168] sm:$0xff] %vm2210, %v2193
        %s2227 = scalar_lea.vmem [#allocation2], 24
        %v2228 = vld [vmem:[%s2227] sm:$0xff]
        %v2229 = vld [vmem:[%s2227 + $0x8] sm:$0xff]
        %v2230 = vld [vmem:[%s2227 + $0x18] sm:$0xff]
        %v2231 = vld [vmem:[%s2227 + $0x20] sm:$0xff]
        %v2232 = vld [vmem:[%s2227 + $0x30] sm:$0xff]
        %v2233 = vld [vmem:[%s2227 + $0x38] sm:$0xff]
        %v2234 = vld [vmem:[%s2227 + $0x48] sm:$0xff]
        %v2235 = vld [vmem:[%s2227 + $0x50] sm:$0xff]
        %v2236 = vld [vmem:[%s2227 + $0x60] sm:$0xff]
        %v2237 = vld [vmem:[%s2227 + $0x68] sm:$0xff]
        %v2238 = vld [vmem:[%s2227 + $0x78] sm:$0xff]
        %v2239 = vld [vmem:[%s2227 + $0x80] sm:$0xff]
        %v2240 = vld [vmem:[%s2227 + $0x90] sm:$0xff]
        %v2241 = vld [vmem:[%s2227 + $0x98] sm:$0xff]
        %v2242 = vld [vmem:[%s2227 + $0xa8] sm:$0xff]
        %v2243 = vld [vmem:[%s2227 + $0xb0] sm:$0xff]
        %2260 = vrot.lane.b32.xlu0 %v2228, 96
        %v2261 = vpop.permute.xlu0 %2260
        %2262 = vrot.lane.b32.xlu0 %v2229, 96
        %v2263 = vpop.permute.xlu0 %2262
        %2264 = vrot.lane.b32.xlu0 %v2230, 96
        %v2265 = vpop.permute.xlu0 %2264
        %2266 = vrot.lane.b32.xlu0 %v2231, 96
        %v2267 = vpop.permute.xlu0 %2266
        %2268 = vrot.lane.b32.xlu0 %v2232, 96
        %v2269 = vpop.permute.xlu0 %2268
        %2270 = vrot.lane.b32.xlu0 %v2233, 96
        %v2271 = vpop.permute.xlu0 %2270
        %2272 = vrot.lane.b32.xlu0 %v2234, 96
        %v2273 = vpop.permute.xlu0 %2272
        %2274 = vrot.lane.b32.xlu0 %v2235, 96
        %v2275 = vpop.permute.xlu0 %2274
        %2276 = vrot.lane.b32.xlu0 %v2236, 96
        %v2277 = vpop.permute.xlu0 %2276
        %2278 = vrot.lane.b32.xlu0 %v2237, 96
        %v2279 = vpop.permute.xlu0 %2278
        %2280 = vrot.lane.b32.xlu0 %v2238, 96
        %v2281 = vpop.permute.xlu0 %2280
        %2282 = vrot.lane.b32.xlu0 %v2239, 96
        %v2283 = vpop.permute.xlu0 %2282
        %2284 = vrot.lane.b32.xlu0 %v2240, 96
        %v2285 = vpop.permute.xlu0 %2284
        %2286 = vrot.lane.b32.xlu0 %v2241, 96
        %v2287 = vpop.permute.xlu0 %2286
        %2288 = vrot.lane.b32.xlu0 %v2242, 96
        %v2289 = vpop.permute.xlu0 %2288
        %2290 = vrot.lane.b32.xlu0 %v2243, 96
        %v2291 = vpop.permute.xlu0 %2290
        %vm2308 = vcmask 1048320
        %2309 = vst.msk [vmem:[#allocation3] sm:$0xff] %vm2308, %v2261
        %2310 = vst.msk [vmem:[#allocation3 + $0x18] sm:$0xff] %vm2308, %v2263
        %2311 = vst.msk [vmem:[#allocation3 + $0x30] sm:$0xff] %vm2308, %v2265
        %2312 = vst.msk [vmem:[#allocation3 + $0x48] sm:$0xff] %vm2308, %v2267
        %2313 = vst.msk [vmem:[#allocation3 + $0x60] sm:$0xff] %vm2308, %v2269
        %2314 = vst.msk [vmem:[#allocation3 + $0x78] sm:$0xff] %vm2308, %v2271
        %2315 = vst.msk [vmem:[#allocation3 + $0x90] sm:$0xff] %vm2308, %v2273
        %2316 = vst.msk [vmem:[#allocation3 + $0xa8] sm:$0xff] %vm2308, %v2275
        %2317 = vst.msk [vmem:[#allocation3 + $0xc0] sm:$0xff] %vm2308, %v2277
        %2318 = vst.msk [vmem:[#allocation3 + $0xd8] sm:$0xff] %vm2308, %v2279
        %2319 = vst.msk [vmem:[#allocation3 + $0xf0] sm:$0xff] %vm2308, %v2281
        %2320 = vst.msk [vmem:[#allocation3 + $0x108] sm:$0xff] %vm2308, %v2283
        %2321 = vst.msk [vmem:[#allocation3 + $0x120] sm:$0xff] %vm2308, %v2285
        %2322 = vst.msk [vmem:[#allocation3 + $0x138] sm:$0xff] %vm2308, %v2287
        %2323 = vst.msk [vmem:[#allocation3 + $0x150] sm:$0xff] %vm2308, %v2289
        %2324 = vst.msk [vmem:[#allocation3 + $0x168] sm:$0xff] %vm2308, %v2291
        %v2325 = vld [vmem:[%s2227 + $0x1] sm:$0xff]
        %v2326 = vld [vmem:[%s2227 + $0x9] sm:$0xff]
        %v2327 = vld [vmem:[%s2227 + $0x19] sm:$0xff]
        %v2328 = vld [vmem:[%s2227 + $0x21] sm:$0xff]
        %v2329 = vld [vmem:[%s2227 + $0x31] sm:$0xff]
        %v2330 = vld [vmem:[%s2227 + $0x39] sm:$0xff]
        %v2331 = vld [vmem:[%s2227 + $0x49] sm:$0xff]
        %v2332 = vld [vmem:[%s2227 + $0x51] sm:$0xff]
        %v2333 = vld [vmem:[%s2227 + $0x61] sm:$0xff]
        %v2334 = vld [vmem:[%s2227 + $0x69] sm:$0xff]
        %v2335 = vld [vmem:[%s2227 + $0x79] sm:$0xff]
        %v2336 = vld [vmem:[%s2227 + $0x81] sm:$0xff]
        %v2337 = vld [vmem:[%s2227 + $0x91] sm:$0xff]
        %v2338 = vld [vmem:[%s2227 + $0x99] sm:$0xff]
        %v2339 = vld [vmem:[%s2227 + $0xa9] sm:$0xff]
        %v2340 = vld [vmem:[%s2227 + $0xb1] sm:$0xff]
        %2341 = vst.msk [vmem:[#allocation3 + $0x8] sm:$0xff] %vm1980, %v2325
        %2342 = vst.msk [vmem:[#allocation3 + $0x20] sm:$0xff] %vm1980, %v2326
        %2343 = vst.msk [vmem:[#allocation3 + $0x38] sm:$0xff] %vm1980, %v2327
        %2344 = vst.msk [vmem:[#allocation3 + $0x50] sm:$0xff] %vm1980, %v2328
        %2345 = vst.msk [vmem:[#allocation3 + $0x68] sm:$0xff] %vm1980, %v2329
        %2346 = vst.msk [vmem:[#allocation3 + $0x80] sm:$0xff] %vm1980, %v2330
        %2347 = vst.msk [vmem:[#allocation3 + $0x98] sm:$0xff] %vm1980, %v2331
        %2348 = vst.msk [vmem:[#allocation3 + $0xb0] sm:$0xff] %vm1980, %v2332
        %2349 = vst.msk [vmem:[#allocation3 + $0xc8] sm:$0xff] %vm1980, %v2333
        %2350 = vst.msk [vmem:[#allocation3 + $0xe0] sm:$0xff] %vm1980, %v2334
        %2351 = vst.msk [vmem:[#allocation3 + $0xf8] sm:$0xff] %vm1980, %v2335
        %2352 = vst.msk [vmem:[#allocation3 + $0x110] sm:$0xff] %vm1980, %v2336
        %2353 = vst.msk [vmem:[#allocation3 + $0x128] sm:$0xff] %vm1980, %v2337
        %2354 = vst.msk [vmem:[#allocation3 + $0x140] sm:$0xff] %vm1980, %v2338
        %2355 = vst.msk [vmem:[#allocation3 + $0x158] sm:$0xff] %vm1980, %v2339
        %2356 = vst.msk [vmem:[#allocation3 + $0x170] sm:$0xff] %vm1980, %v2340
        %v2357 = vld [vmem:[%s2227 + $0x2] sm:$0xff]
        %v2358 = vld [vmem:[%s2227 + $0xa] sm:$0xff]
        %v2359 = vld [vmem:[%s2227 + $0x1a] sm:$0xff]
        %v2360 = vld [vmem:[%s2227 + $0x22] sm:$0xff]
        %v2361 = vld [vmem:[%s2227 + $0x32] sm:$0xff]
        %v2362 = vld [vmem:[%s2227 + $0x3a] sm:$0xff]
        %v2363 = vld [vmem:[%s2227 + $0x4a] sm:$0xff]
        %v2364 = vld [vmem:[%s2227 + $0x52] sm:$0xff]
        %v2365 = vld [vmem:[%s2227 + $0x62] sm:$0xff]
        %v2366 = vld [vmem:[%s2227 + $0x6a] sm:$0xff]
        %v2367 = vld [vmem:[%s2227 + $0x7a] sm:$0xff]
        %v2368 = vld [vmem:[%s2227 + $0x82] sm:$0xff]
        %v2369 = vld [vmem:[%s2227 + $0x92] sm:$0xff]
        %v2370 = vld [vmem:[%s2227 + $0x9a] sm:$0xff]
        %v2371 = vld [vmem:[%s2227 + $0xaa] sm:$0xff]
        %v2372 = vld [vmem:[%s2227 + $0xb2] sm:$0xff]
        %2389 = vrot.lane.b32.xlu0 %v2357, 32
        %v2390 = vpop.permute.xlu0 %2389
        %2391 = vrot.lane.b32.xlu0 %v2358, 32
        %v2392 = vpop.permute.xlu0 %2391
        %2393 = vrot.lane.b32.xlu0 %v2359, 32
        %v2394 = vpop.permute.xlu0 %2393
        %2395 = vrot.lane.b32.xlu0 %v2360, 32
        %v2396 = vpop.permute.xlu0 %2395
        %2397 = vrot.lane.b32.xlu0 %v2361, 32
        %v2398 = vpop.permute.xlu0 %2397
        %2399 = vrot.lane.b32.xlu0 %v2362, 32
        %v2400 = vpop.permute.xlu0 %2399
        %2401 = vrot.lane.b32.xlu0 %v2363, 32
        %v2402 = vpop.permute.xlu0 %2401
        %2403 = vrot.lane.b32.xlu0 %v2364, 32
        %v2404 = vpop.permute.xlu0 %2403
        %2405 = vrot.lane.b32.xlu0 %v2365, 32
        %v2406 = vpop.permute.xlu0 %2405
        %2407 = vrot.lane.b32.xlu0 %v2366, 32
        %v2408 = vpop.permute.xlu0 %2407
        %2409 = vrot.lane.b32.xlu0 %v2367, 32
        %v2410 = vpop.permute.xlu0 %2409
        %2411 = vrot.lane.b32.xlu0 %v2368, 32
        %v2412 = vpop.permute.xlu0 %2411
        %2413 = vrot.lane.b32.xlu0 %v2369, 32
        %v2414 = vpop.permute.xlu0 %2413
        %2415 = vrot.lane.b32.xlu0 %v2370, 32
        %v2416 = vpop.permute.xlu0 %2415
        %2417 = vrot.lane.b32.xlu0 %v2371, 32
        %v2418 = vpop.permute.xlu0 %2417
        %2419 = vrot.lane.b32.xlu0 %v2372, 32
        %v2420 = vpop.permute.xlu0 %2419
        %2437 = vst.msk [vmem:[#allocation3 + $0x8] sm:$0xff] %vm2113, %v2390
        %2438 = vst.msk [vmem:[#allocation3 + $0x20] sm:$0xff] %vm2113, %v2392
        %2439 = vst.msk [vmem:[#allocation3 + $0x38] sm:$0xff] %vm2113, %v2394
        %2440 = vst.msk [vmem:[#allocation3 + $0x50] sm:$0xff] %vm2113, %v2396
        %2441 = vst.msk [vmem:[#allocation3 + $0x68] sm:$0xff] %vm2113, %v2398
        %2442 = vst.msk [vmem:[#allocation3 + $0x80] sm:$0xff] %vm2113, %v2400
        %2443 = vst.msk [vmem:[#allocation3 + $0x98] sm:$0xff] %vm2113, %v2402
        %2444 = vst.msk [vmem:[#allocation3 + $0xb0] sm:$0xff] %vm2113, %v2404
        %2445 = vst.msk [vmem:[#allocation3 + $0xc8] sm:$0xff] %vm2113, %v2406
        %2446 = vst.msk [vmem:[#allocation3 + $0xe0] sm:$0xff] %vm2113, %v2408
        %2447 = vst.msk [vmem:[#allocation3 + $0xf8] sm:$0xff] %vm2113, %v2410
        %2448 = vst.msk [vmem:[#allocation3 + $0x110] sm:$0xff] %vm2113, %v2412
        %2449 = vst.msk [vmem:[#allocation3 + $0x128] sm:$0xff] %vm2113, %v2414
        %2450 = vst.msk [vmem:[#allocation3 + $0x140] sm:$0xff] %vm2113, %v2416
        %2451 = vst.msk [vmem:[#allocation3 + $0x158] sm:$0xff] %vm2113, %v2418
        %2452 = vst.msk [vmem:[#allocation3 + $0x170] sm:$0xff] %vm2113, %v2420
        %s2453 = scalar_lea.vmem [#allocation2], 48
        %v2454 = vld [vmem:[%s2453] sm:$0xff]
        %v2455 = vld [vmem:[%s2453 + $0x8] sm:$0xff]
        %v2456 = vld [vmem:[%s2453 + $0x18] sm:$0xff]
        %v2457 = vld [vmem:[%s2453 + $0x20] sm:$0xff]
        %v2458 = vld [vmem:[%s2453 + $0x30] sm:$0xff]
        %v2459 = vld [vmem:[%s2453 + $0x38] sm:$0xff]
        %v2460 = vld [vmem:[%s2453 + $0x48] sm:$0xff]
        %v2461 = vld [vmem:[%s2453 + $0x50] sm:$0xff]
        %v2462 = vld [vmem:[%s2453 + $0x60] sm:$0xff]
        %v2463 = vld [vmem:[%s2453 + $0x68] sm:$0xff]
        %v2464 = vld [vmem:[%s2453 + $0x78] sm:$0xff]
        %v2465 = vld [vmem:[%s2453 + $0x80] sm:$0xff]
        %v2466 = vld [vmem:[%s2453 + $0x90] sm:$0xff]
        %v2467 = vld [vmem:[%s2453 + $0x98] sm:$0xff]
        %v2468 = vld [vmem:[%s2453 + $0xa8] sm:$0xff]
        %v2469 = vld [vmem:[%s2453 + $0xb0] sm:$0xff]
        %2486 = vrot.lane.b32.xlu0 %v2454, 64
        %v2487 = vpop.permute.xlu0 %2486
        %2488 = vrot.lane.b32.xlu0 %v2455, 64
        %v2489 = vpop.permute.xlu0 %2488
        %2490 = vrot.lane.b32.xlu0 %v2456, 64
        %v2491 = vpop.permute.xlu0 %2490
        %2492 = vrot.lane.b32.xlu0 %v2457, 64
        %v2493 = vpop.permute.xlu0 %2492
        %2494 = vrot.lane.b32.xlu0 %v2458, 64
        %v2495 = vpop.permute.xlu0 %2494
        %2496 = vrot.lane.b32.xlu0 %v2459, 64
        %v2497 = vpop.permute.xlu0 %2496
        %2498 = vrot.lane.b32.xlu0 %v2460, 64
        %v2499 = vpop.permute.xlu0 %2498
        %2500 = vrot.lane.b32.xlu0 %v2461, 64
        %v2501 = vpop.permute.xlu0 %2500
        %2502 = vrot.lane.b32.xlu0 %v2462, 64
        %v2503 = vpop.permute.xlu0 %2502
        %2504 = vrot.lane.b32.xlu0 %v2463, 64
        %v2505 = vpop.permute.xlu0 %2504
        %2506 = vrot.lane.b32.xlu0 %v2464, 64
        %v2507 = vpop.permute.xlu0 %2506
        %2508 = vrot.lane.b32.xlu0 %v2465, 64
        %v2509 = vpop.permute.xlu0 %2508
        %2510 = vrot.lane.b32.xlu0 %v2466, 64
        %v2511 = vpop.permute.xlu0 %2510
        %2512 = vrot.lane.b32.xlu0 %v2467, 64
        %v2513 = vpop.permute.xlu0 %2512
        %2514 = vrot.lane.b32.xlu0 %v2468, 64
        %v2515 = vpop.permute.xlu0 %2514
        %2516 = vrot.lane.b32.xlu0 %v2469, 64
        %v2517 = vpop.permute.xlu0 %2516
        %2534 = vst.msk [vmem:[#allocation3 + $0x8] sm:$0xff] %vm2210, %v2487
        %2535 = vst.msk [vmem:[#allocation3 + $0x20] sm:$0xff] %vm2210, %v2489
        %2536 = vst.msk [vmem:[#allocation3 + $0x38] sm:$0xff] %vm2210, %v2491
        %2537 = vst.msk [vmem:[#allocation3 + $0x50] sm:$0xff] %vm2210, %v2493
        %2538 = vst.msk [vmem:[#allocation3 + $0x68] sm:$0xff] %vm2210, %v2495
        %2539 = vst.msk [vmem:[#allocation3 + $0x80] sm:$0xff] %vm2210, %v2497
        %2540 = vst.msk [vmem:[#allocation3 + $0x98] sm:$0xff] %vm2210, %v2499
        %2541 = vst.msk [vmem:[#allocation3 + $0xb0] sm:$0xff] %vm2210, %v2501
        %2542 = vst.msk [vmem:[#allocation3 + $0xc8] sm:$0xff] %vm2210, %v2503
        %2543 = vst.msk [vmem:[#allocation3 + $0xe0] sm:$0xff] %vm2210, %v2505
        %2544 = vst.msk [vmem:[#allocation3 + $0xf8] sm:$0xff] %vm2210, %v2507
        %2545 = vst.msk [vmem:[#allocation3 + $0x110] sm:$0xff] %vm2210, %v2509
        %2546 = vst.msk [vmem:[#allocation3 + $0x128] sm:$0xff] %vm2210, %v2511
        %2547 = vst.msk [vmem:[#allocation3 + $0x140] sm:$0xff] %vm2210, %v2513
        %2548 = vst.msk [vmem:[#allocation3 + $0x158] sm:$0xff] %vm2210, %v2515
        %2549 = vst.msk [vmem:[#allocation3 + $0x170] sm:$0xff] %vm2210, %v2517
        %v2550 = vld [vmem:[%s2453 + $0x1] sm:$0xff]
        %v2551 = vld [vmem:[%s2453 + $0x9] sm:$0xff]
        %v2552 = vld [vmem:[%s2453 + $0x19] sm:$0xff]
        %v2553 = vld [vmem:[%s2453 + $0x21] sm:$0xff]
        %v2554 = vld [vmem:[%s2453 + $0x31] sm:$0xff]
        %v2555 = vld [vmem:[%s2453 + $0x39] sm:$0xff]
        %v2556 = vld [vmem:[%s2453 + $0x49] sm:$0xff]
        %v2557 = vld [vmem:[%s2453 + $0x51] sm:$0xff]
        %v2558 = vld [vmem:[%s2453 + $0x61] sm:$0xff]
        %v2559 = vld [vmem:[%s2453 + $0x69] sm:$0xff]
        %v2560 = vld [vmem:[%s2453 + $0x79] sm:$0xff]
        %v2561 = vld [vmem:[%s2453 + $0x81] sm:$0xff]
        %v2562 = vld [vmem:[%s2453 + $0x91] sm:$0xff]
        %v2563 = vld [vmem:[%s2453 + $0x99] sm:$0xff]
        %v2564 = vld [vmem:[%s2453 + $0xa9] sm:$0xff]
        %v2565 = vld [vmem:[%s2453 + $0xb1] sm:$0xff]
        %2582 = vrot.lane.b32.xlu0 %v2550, 96
        %v2583 = vpop.permute.xlu0 %2582
        %2584 = vrot.lane.b32.xlu0 %v2551, 96
        %v2585 = vpop.permute.xlu0 %2584
        %2586 = vrot.lane.b32.xlu0 %v2552, 96
        %v2587 = vpop.permute.xlu0 %2586
        %2588 = vrot.lane.b32.xlu0 %v2553, 96
        %v2589 = vpop.permute.xlu0 %2588
        %2590 = vrot.lane.b32.xlu0 %v2554, 96
        %v2591 = vpop.permute.xlu0 %2590
        %2592 = vrot.lane.b32.xlu0 %v2555, 96
        %v2593 = vpop.permute.xlu0 %2592
        %2594 = vrot.lane.b32.xlu0 %v2556, 96
        %v2595 = vpop.permute.xlu0 %2594
        %2596 = vrot.lane.b32.xlu0 %v2557, 96
        %v2597 = vpop.permute.xlu0 %2596
        %2598 = vrot.lane.b32.xlu0 %v2558, 96
        %v2599 = vpop.permute.xlu0 %2598
        %2600 = vrot.lane.b32.xlu0 %v2559, 96
        %v2601 = vpop.permute.xlu0 %2600
        %2602 = vrot.lane.b32.xlu0 %v2560, 96
        %v2603 = vpop.permute.xlu0 %2602
        %2604 = vrot.lane.b32.xlu0 %v2561, 96
        %v2605 = vpop.permute.xlu0 %2604
        %2606 = vrot.lane.b32.xlu0 %v2562, 96
        %v2607 = vpop.permute.xlu0 %2606
        %2608 = vrot.lane.b32.xlu0 %v2563, 96
        %v2609 = vpop.permute.xlu0 %2608
        %2610 = vrot.lane.b32.xlu0 %v2564, 96
        %v2611 = vpop.permute.xlu0 %2610
        %2612 = vrot.lane.b32.xlu0 %v2565, 96
        %v2613 = vpop.permute.xlu0 %2612
        %2630 = vst.msk [vmem:[#allocation3 + $0x8] sm:$0xff] %vm2308, %v2583
        %2631 = vst.msk [vmem:[#allocation3 + $0x20] sm:$0xff] %vm2308, %v2585
        %2632 = vst.msk [vmem:[#allocation3 + $0x38] sm:$0xff] %vm2308, %v2587
        %2633 = vst.msk [vmem:[#allocation3 + $0x50] sm:$0xff] %vm2308, %v2589
        %2634 = vst.msk [vmem:[#allocation3 + $0x68] sm:$0xff] %vm2308, %v2591
        %2635 = vst.msk [vmem:[#allocation3 + $0x80] sm:$0xff] %vm2308, %v2593
        %2636 = vst.msk [vmem:[#allocation3 + $0x98] sm:$0xff] %vm2308, %v2595
        %2637 = vst.msk [vmem:[#allocation3 + $0xb0] sm:$0xff] %vm2308, %v2597
        %2638 = vst.msk [vmem:[#allocation3 + $0xc8] sm:$0xff] %vm2308, %v2599
        %2639 = vst.msk [vmem:[#allocation3 + $0xe0] sm:$0xff] %vm2308, %v2601
        %2640 = vst.msk [vmem:[#allocation3 + $0xf8] sm:$0xff] %vm2308, %v2603
        %2641 = vst.msk [vmem:[#allocation3 + $0x110] sm:$0xff] %vm2308, %v2605
        %2642 = vst.msk [vmem:[#allocation3 + $0x128] sm:$0xff] %vm2308, %v2607
        %2643 = vst.msk [vmem:[#allocation3 + $0x140] sm:$0xff] %vm2308, %v2609
        %2644 = vst.msk [vmem:[#allocation3 + $0x158] sm:$0xff] %vm2308, %v2611
        %2645 = vst.msk [vmem:[#allocation3 + $0x170] sm:$0xff] %vm2308, %v2613
        %v2646 = vld [vmem:[%s2453 + $0x2] sm:$0xff]
        %v2647 = vld [vmem:[%s2453 + $0xa] sm:$0xff]
        %v2648 = vld [vmem:[%s2453 + $0x1a] sm:$0xff]
        %v2649 = vld [vmem:[%s2453 + $0x22] sm:$0xff]
        %v2650 = vld [vmem:[%s2453 + $0x32] sm:$0xff]
        %v2651 = vld [vmem:[%s2453 + $0x3a] sm:$0xff]
        %v2652 = vld [vmem:[%s2453 + $0x4a] sm:$0xff]
        %v2653 = vld [vmem:[%s2453 + $0x52] sm:$0xff]
        %v2654 = vld [vmem:[%s2453 + $0x62] sm:$0xff]
        %v2655 = vld [vmem:[%s2453 + $0x6a] sm:$0xff]
        %v2656 = vld [vmem:[%s2453 + $0x7a] sm:$0xff]
        %v2657 = vld [vmem:[%s2453 + $0x82] sm:$0xff]
        %v2658 = vld [vmem:[%s2453 + $0x92] sm:$0xff]
        %v2659 = vld [vmem:[%s2453 + $0x9a] sm:$0xff]
        %v2660 = vld [vmem:[%s2453 + $0xaa] sm:$0xff]
        %v2661 = vld [vmem:[%s2453 + $0xb2] sm:$0xff]
        %2662 = vst.msk [vmem:[#allocation3 + $0x10] sm:$0xff] %vm1980, %v2646
        %2663 = vst.msk [vmem:[#allocation3 + $0x28] sm:$0xff] %vm1980, %v2647
        %2664 = vst.msk [vmem:[#allocation3 + $0x40] sm:$0xff] %vm1980, %v2648
        %2665 = vst.msk [vmem:[#allocation3 + $0x58] sm:$0xff] %vm1980, %v2649
        %2666 = vst.msk [vmem:[#allocation3 + $0x70] sm:$0xff] %vm1980, %v2650
        %2667 = vst.msk [vmem:[#allocation3 + $0x88] sm:$0xff] %vm1980, %v2651
        %2668 = vst.msk [vmem:[#allocation3 + $0xa0] sm:$0xff] %vm1980, %v2652
        %2669 = vst.msk [vmem:[#allocation3 + $0xb8] sm:$0xff] %vm1980, %v2653
        %2670 = vst.msk [vmem:[#allocation3 + $0xd0] sm:$0xff] %vm1980, %v2654
        %2671 = vst.msk [vmem:[#allocation3 + $0xe8] sm:$0xff] %vm1980, %v2655
        %2672 = vst.msk [vmem:[#allocation3 + $0x100] sm:$0xff] %vm1980, %v2656
        %2673 = vst.msk [vmem:[#allocation3 + $0x118] sm:$0xff] %vm1980, %v2657
        %2674 = vst.msk [vmem:[#allocation3 + $0x130] sm:$0xff] %vm1980, %v2658
        %2675 = vst.msk [vmem:[#allocation3 + $0x148] sm:$0xff] %vm1980, %v2659
        %2676 = vst.msk [vmem:[#allocation3 + $0x160] sm:$0xff] %vm1980, %v2660
        %2677 = vst.msk [vmem:[#allocation3 + $0x178] sm:$0xff] %vm1980, %v2661
        %v2678 = vld [vmem:[#allocation3] sm:$0xff]
        %v2679 = vld [vmem:[#allocation3 + $0x8] sm:$0xff]
        %v2680 = vld [vmem:[#allocation3 + $0x10] sm:$0xff]
        %v2681 = vld [vmem:[#allocation3 + $0x18] sm:$0xff]
        %v2682 = vld [vmem:[#allocation3 + $0x20] sm:$0xff]
        %v2683 = vld [vmem:[#allocation3 + $0x28] sm:$0xff]
        %v2684 = vld [vmem:[#allocation3 + $0x30] sm:$0xff]
        %v2685 = vld [vmem:[#allocation3 + $0x38] sm:$0xff]
        %v2686 = vld [vmem:[#allocation3 + $0x40] sm:$0xff]
        %v2687 = vld [vmem:[#allocation3 + $0x48] sm:$0xff]
        %v2688 = vld [vmem:[#allocation3 + $0x50] sm:$0xff]
        %v2689 = vld [vmem:[#allocation3 + $0x58] sm:$0xff]
        %v2690 = vld [vmem:[#allocation3 + $0x60] sm:$0xff]
        %v2691 = vld [vmem:[#allocation3 + $0x68] sm:$0xff]
        %v2692 = vld [vmem:[#allocation3 + $0x70] sm:$0xff]
        %v2693 = vld [vmem:[#allocation3 + $0x78] sm:$0xff]
        %v2694 = vld [vmem:[#allocation3 + $0x80] sm:$0xff]
        %v2695 = vld [vmem:[#allocation3 + $0x88] sm:$0xff]
        %v2696 = vld [vmem:[#allocation3 + $0x90] sm:$0xff]
        %v2697 = vld [vmem:[#allocation3 + $0x98] sm:$0xff]
        %v2698 = vld [vmem:[#allocation3 + $0xa0] sm:$0xff]
        %v2699 = vld [vmem:[#allocation3 + $0xa8] sm:$0xff]
        %v2700 = vld [vmem:[#allocation3 + $0xb0] sm:$0xff]
        %v2701 = vld [vmem:[#allocation3 + $0xb8] sm:$0xff]
        %v2702 = vld [vmem:[#allocation3 + $0xc0] sm:$0xff]
        %v2703 = vld [vmem:[#allocation3 + $0xc8] sm:$0xff]
        %v2704 = vld [vmem:[#allocation3 + $0xd0] sm:$0xff]
        %v2705 = vld [vmem:[#allocation3 + $0xd8] sm:$0xff]
        %v2706 = vld [vmem:[#allocation3 + $0xe0] sm:$0xff]
        %v2707 = vld [vmem:[#allocation3 + $0xe8] sm:$0xff]
        %v2708 = vld [vmem:[#allocation3 + $0xf0] sm:$0xff]
        %v2709 = vld [vmem:[#allocation3 + $0xf8] sm:$0xff]
        %v2710 = vld [vmem:[#allocation3 + $0x100] sm:$0xff]
        %v2711 = vld [vmem:[#allocation3 + $0x108] sm:$0xff]
        %v2712 = vld [vmem:[#allocation3 + $0x110] sm:$0xff]
        %v2713 = vld [vmem:[#allocation3 + $0x118] sm:$0xff]
        %v2714 = vld [vmem:[#allocation3 + $0x120] sm:$0xff]
        %v2715 = vld [vmem:[#allocation3 + $0x128] sm:$0xff]
        %v2716 = vld [vmem:[#allocation3 + $0x130] sm:$0xff]
        %v2717 = vld [vmem:[#allocation3 + $0x138] sm:$0xff]
        %v2718 = vld [vmem:[#allocation3 + $0x140] sm:$0xff]
        %v2719 = vld [vmem:[#allocation3 + $0x148] sm:$0xff]
        %v2720 = vld [vmem:[#allocation3 + $0x150] sm:$0xff]
        %v2721 = vld [vmem:[#allocation3 + $0x158] sm:$0xff]
        %v2722 = vld [vmem:[#allocation3 + $0x160] sm:$0xff]
        %v2723 = vld [vmem:[#allocation3 + $0x168] sm:$0xff]
        %v2724 = vld [vmem:[#allocation3 + $0x170] sm:$0xff]
        %v2725 = vld [vmem:[#allocation3 + $0x178] sm:$0xff]
        %v2726 = vpack.c.bf16 %v2681, %v2678
        %v2727 = vpack.c.bf16 %v2682, %v2679
        %v2728 = vpack.c.bf16 %v2683, %v2680
        %v2729 = vpack.c.bf16 %v2687, %v2684
        %v2730 = vpack.c.bf16 %v2688, %v2685
        %v2731 = vpack.c.bf16 %v2689, %v2686
        %v2732 = vpack.c.bf16 %v2693, %v2690
        %v2733 = vpack.c.bf16 %v2694, %v2691
        %v2734 = vpack.c.bf16 %v2695, %v2692
        %v2735 = vpack.c.bf16 %v2699, %v2696
        %v2736 = vpack.c.bf16 %v2700, %v2697
        %v2737 = vpack.c.bf16 %v2701, %v2698
        %v2738 = vpack.c.bf16 %v2705, %v2702
        %v2739 = vpack.c.bf16 %v2706, %v2703
        %v2740 = vpack.c.bf16 %v2707, %v2704
        %v2741 = vpack.c.bf16 %v2711, %v2708
        %v2742 = vpack.c.bf16 %v2712, %v2709
        %v2743 = vpack.c.bf16 %v2713, %v2710
        %v2744 = vpack.c.bf16 %v2717, %v2714
        %v2745 = vpack.c.bf16 %v2718, %v2715
        %v2746 = vpack.c.bf16 %v2719, %v2716
        %v2747 = vpack.c.bf16 %v2723, %v2720
        %v2748 = vpack.c.bf16 %v2724, %v2721
        %v2749 = vpack.c.bf16 %v2725, %v2722
        %v2750 = vld [vmem:[%s4] sm:$0xf]
        %v2751 = vld [vmem:[%s4 + $0x4] sm:$0xf]
        %v2752 = vld [vmem:[%s4 + $0x8] sm:$0xf]
        %v2753 = vld [vmem:[%s4 + $0xc] sm:$0xf]
        %v2754 = vld [vmem:[%s4 + $0x10] sm:$0xf]
        %v2755 = vld [vmem:[%s4 + $0x14] sm:$0xf]
        %v2756 = vld [vmem:[%s4 + $0x18] sm:$0xf]
        %v2757 = vld [vmem:[%s4 + $0x1c] sm:$0xf]
        %v2758 = vld [vmem:[%s4 + $0x20] sm:$0xf]
        %v2759 = vld [vmem:[%s4 + $0x24] sm:$0xf]
        %v2760 = vld [vmem:[%s4 + $0x28] sm:$0xf]
        %v2761 = vld [vmem:[%s4 + $0x2c] sm:$0xf]
        %v2762 = vld [vmem:[%s4 + $0x30] sm:$0xf]
        %v2763 = vld [vmem:[%s4 + $0x34] sm:$0xf]
        %v2764 = vld [vmem:[%s4 + $0x38] sm:$0xf]
        %v2765 = vld [vmem:[%s4 + $0x3c] sm:$0xf]
        %v2766 = vld [vmem:[%s4 + $0x40] sm:$0xf]
        %v2767 = vld [vmem:[%s4 + $0x44] sm:$0xf]
        %v2768 = vld [vmem:[%s4 + $0x48] sm:$0xf]
        %v2769 = vld [vmem:[%s4 + $0x4c] sm:$0xf]
        %v2770 = vld [vmem:[%s4 + $0x50] sm:$0xf]
        %v2771 = vld [vmem:[%s4 + $0x54] sm:$0xf]
        %v2772 = vld [vmem:[%s4 + $0x58] sm:$0xf]
        %v2773 = vld [vmem:[%s4 + $0x5c] sm:$0xf]
        %v2774 = vld [vmem:[%s4 + $0x60] sm:$0xf]
        %v2775 = vld [vmem:[%s4 + $0x64] sm:$0xf]
        %v2776 = vld [vmem:[%s4 + $0x68] sm:$0xf]
        %v2777 = vld [vmem:[%s4 + $0x6c] sm:$0xf]
        %v2778 = vld [vmem:[%s4 + $0x70] sm:$0xf]
        %v2779 = vld [vmem:[%s4 + $0x74] sm:$0xf]
        %v2780 = vld [vmem:[%s4 + $0x78] sm:$0xf]
        %v2781 = vld [vmem:[%s4 + $0x7c] sm:$0xf]
        %v2782 = vld [vmem:[%s4 + $0x80] sm:$0xf]
        %v2783 = vld [vmem:[%s4 + $0x84] sm:$0xf]
        %v2784 = vld [vmem:[%s4 + $0x88] sm:$0xf]
        %v2785 = vld [vmem:[%s4 + $0x8c] sm:$0xf]
        %v2822 = vunpack.c.l.b16 %v2750
        %v2823 = vunpack.c.l.b16 %v2751
        %v2824 = vunpack.c.l.b16 %v2752
        %v2825 = vunpack.c.l.b16 %v2753
        %v2826 = vunpack.c.l.b16 %v2754
        %v2827 = vunpack.c.l.b16 %v2755
        %v2828 = vunpack.c.l.b16 %v2756
        %v2829 = vunpack.c.l.b16 %v2757
        %v2830 = vunpack.c.l.b16 %v2758
        %v2831 = vunpack.c.l.b16 %v2759
        %v2832 = vunpack.c.l.b16 %v2760
        %v2833 = vunpack.c.l.b16 %v2761
        %v2834 = vunpack.c.l.b16 %v2762
        %v2835 = vunpack.c.l.b16 %v2763
        %v2836 = vunpack.c.l.b16 %v2764
        %v2837 = vunpack.c.l.b16 %v2765
        %v2838 = vunpack.c.l.b16 %v2766
        %v2839 = vunpack.c.l.b16 %v2767
        %v2840 = vunpack.c.l.b16 %v2768
        %v2841 = vunpack.c.l.b16 %v2769
        %v2842 = vunpack.c.l.b16 %v2770
        %v2843 = vunpack.c.l.b16 %v2771
        %v2844 = vunpack.c.l.b16 %v2772
        %v2845 = vunpack.c.l.b16 %v2773
        %v2846 = vunpack.c.l.b16 %v2774
        %v2847 = vunpack.c.l.b16 %v2775
        %v2848 = vunpack.c.l.b16 %v2776
        %v2849 = vunpack.c.l.b16 %v2777
        %v2850 = vunpack.c.l.b16 %v2778
        %v2851 = vunpack.c.l.b16 %v2779
        %v2852 = vunpack.c.l.b16 %v2780
        %v2853 = vunpack.c.l.b16 %v2781
        %v2854 = vunpack.c.l.b16 %v2782
        %v2855 = vunpack.c.l.b16 %v2783
        %v2856 = vunpack.c.l.b16 %v2784
        %v2857 = vunpack.c.l.b16 %v2785
        %v2858 = vpack.c.b16 %v2823, %v2822
        %v2859 = vpack.c.b16 %v2825, %v2824
        %v2860 = vpack.c.b16 %v2827, %v2826
        %v2861 = vpack.c.b16 %v2829, %v2828
        %v2862 = vpack.c.b16 %v2831, %v2830
        %v2863 = vpack.c.b16 %v2833, %v2832
        %v2864 = vpack.c.b16 %v2835, %v2834
        %v2865 = vpack.c.b16 %v2837, %v2836
        %v2866 = vpack.c.b16 %v2839, %v2838
        %v2867 = vpack.c.b16 %v2841, %v2840
        %v2868 = vpack.c.b16 %v2843, %v2842
        %v2869 = vpack.c.b16 %v2845, %v2844
        %v2870 = vpack.c.b16 %v2847, %v2846
        %v2871 = vpack.c.b16 %v2849, %v2848
        %v2872 = vpack.c.b16 %v2851, %v2850
        %v2873 = vpack.c.b16 %v2853, %v2852
        %v2874 = vpack.c.b16 %v2855, %v2854
        %v2875 = vpack.c.b16 %v2857, %v2856
        %v2895 = vsel %vm1980, %v2728, 0
        %v2898 = vsel %vm1980, %v2731, 0
        %v2901 = vsel %vm1980, %v2734, 0
        %v2904 = vsel %vm1980, %v2737, 0
        %v2907 = vsel %vm1980, %v2740, 0
        %v2910 = vsel %vm1980, %v2743, 0
        %v2913 = vsel %vm1980, %v2746, 0
        %v2916 = vsel %vm1980, %v2749, 0
        %2918 = vmatprep.subr.bf16.mxu0 0
        %2919 = vmatpush1.bf16.msra.mxu0 %v2858
        %2920 = vmatprep.subr.bf16.mxu0 0
        %2921 = vmatpush1.bf16.msra.mxu0 %v2859
        %2922 = vmatprep.subr.bf16.mxu0 0
        %2923 = vmatpush1.bf16.msra.mxu0 %v2860
        %2924 = vmatprep.subr.bf16.mxu0 0
        %2925 = vmatpush1.bf16.msra.mxu0 %v2861
        %2926 = vmatprep.subr.bf16.mxu0 0
        %2927 = vmatpush1.bf16.msra.mxu0 %v2862
        %2928 = vmatprep.subr.bf16.mxu0 0
        %2929 = vmatpush1.bf16.msra.mxu0 %v2863
        %2930 = vmatprep.subr.bf16.mxu0 0
        %2931 = vmatpush1.bf16.msra.mxu0 %v2864
        %2932 = vmatprep.subr.bf16.mxu0 0
        %2933 = vmatpush1.bf16.msra.mxu0 %v2865
        %2934 = vmatprep.subr.bf16.mxu0 0
        %2935 = vmatpush1.bf16.msra.mxu0 %v2866
        %2936 = vmatprep.subr.bf16.mxu0 0
        %2937 = vmatpush1.bf16.msra.mxu0 %v2867
        %2938 = vmatprep.subr.bf16.mxu0 0
        %2939 = vmatpush1.bf16.msra.mxu0 %v2868
        %2940 = vmatprep.subr.bf16.mxu0 0
        %2941 = vmatpush1.bf16.msra.mxu0 %v2869
        %2942 = vmatprep.subr.bf16.mxu0 0
        %2943 = vmatpush1.bf16.msra.mxu0 %v2870
        %2944 = vmatprep.subr.bf16.mxu0 0
        %2945 = vmatpush1.bf16.msra.mxu0 %v2871
        %2946 = vmatprep.subr.bf16.mxu0 0
        %2947 = vmatpush1.bf16.msra.mxu0 %v2872
        %2948 = vmatprep.subr.bf16.mxu0 0
        %2949 = vmatpush1.bf16.msra.mxu0 %v2873
        %2950 = vmatprep.mubr.bf16.mxu0 %v2727
        %2951 = vmatmul.mubr.bf16.gmra.mrb[0].mxu0 %v2726
        %v2952 = vpop.f32.mrb[0].mxu0
        %v2953 = vadd.f32 0.0, %v2952
        %v2954 = vpop.f32.mrb[0].mxu0
        %v2955 = vpop.f32.mrb[0].mxu0
        %v2956 = vadd.f32 0.0, %v2955
        %v2957 = vpop.f32.mrb[0].mxu0
        %2958 = vmatprep.mubr.bf16.mxu0 %v2730
        %2959 = vmatmul.mubr.bf16.gmra.mrb[0].mxu0 %v2729
        %v2960 = vpop.f32.mrb[0].mxu0
        %v2961 = vadd.f32 0.0, %v2960
        %v2962 = vpop.f32.mrb[0].mxu0
        %v2963 = vpop.f32.mrb[0].mxu0
        %v2964 = vadd.f32 0.0, %v2963
        %v2965 = vpop.f32.mrb[0].mxu0
        %2966 = vmatprep.mubr.bf16.mxu0 %v2733
        %2967 = vmatmul.mubr.bf16.gmra.mrb[0].mxu0 %v2732
        %v2968 = vpop.f32.mrb[0].mxu0
        %v2969 = vadd.f32 0.0, %v2968
        %v2970 = vpop.f32.mrb[0].mxu0
        %v2971 = vpop.f32.mrb[0].mxu0
        %v2972 = vadd.f32 0.0, %v2971
        %v2973 = vpop.f32.mrb[0].mxu0
        %2974 = vmatprep.mubr.bf16.mxu0 %v2736
        %2975 = vmatmul.mubr.bf16.gmra.mrb[0].mxu0 %v2735
        %v2976 = vpop.f32.mrb[0].mxu0
        %v2977 = vadd.f32 0.0, %v2976
        %v2978 = vpop.f32.mrb[0].mxu0
        %v2979 = vpop.f32.mrb[0].mxu0
        %v2980 = vadd.f32 0.0, %v2979
        %v2981 = vpop.f32.mrb[0].mxu0
        %2982 = vmatprep.mubr.bf16.mxu0 %v2739
        %2983 = vmatmul.mubr.bf16.gmra.mrb[0].mxu0 %v2738
        %v2984 = vpop.f32.mrb[0].mxu0
        %v2985 = vadd.f32 0.0, %v2984
        %v2986 = vpop.f32.mrb[0].mxu0
        %v2987 = vpop.f32.mrb[0].mxu0
        %v2988 = vadd.f32 0.0, %v2987
        %v2989 = vpop.f32.mrb[0].mxu0
        %2990 = vmatprep.mubr.bf16.mxu0 %v2742
        %2991 = vmatmul.mubr.bf16.gmra.mrb[0].mxu0 %v2741
        %v2992 = vpop.f32.mrb[0].mxu0
        %v2993 = vadd.f32 0.0, %v2992
        %v2994 = vpop.f32.mrb[0].mxu0
        %v2995 = vpop.f32.mrb[0].mxu0
        %v2996 = vadd.f32 0.0, %v2995
        %v2997 = vpop.f32.mrb[0].mxu0
        %2998 = vmatprep.mubr.bf16.mxu0 %v2745
        %2999 = vmatmul.mubr.bf16.gmra.mrb[0].mxu0 %v2744
        %v3000 = vpop.f32.mrb[0].mxu0
        %v3001 = vadd.f32 0.0, %v3000
        %v3002 = vpop.f32.mrb[0].mxu0
        %v3003 = vpop.f32.mrb[0].mxu0
        %v3004 = vadd.f32 0.0, %v3003
        %v3005 = vpop.f32.mrb[0].mxu0
        %3006 = vmatprep.mubr.bf16.mxu0 %v2748
        %3007 = vmatmul.mubr.bf16.gmra.mrb[0].mxu0 %v2747
        %v3008 = vpop.f32.mrb[0].mxu0
        %v3009 = vadd.f32 0.0, %v3008
        %v3010 = vpop.f32.mrb[0].mxu0
        %v3011 = vpop.f32.mrb[0].mxu0
        %v3012 = vadd.f32 0.0, %v3011
        %v3013 = vpop.f32.mrb[0].mxu0
        %3014 = vdwg.mxu0
        %3015 = vmatprep.subr.bf16.mxu0 0
        %3016 = vmatpush1.bf16.msra.mxu0 %v2874
        %3017 = vmatprep.subr.bf16.mxu0 0
        %3018 = vmatpush1.bf16.msra.mxu0 %v2875
        %3019 = vmatprep.subr.bf16.mxu0 0
        %3020 = vmatpush1.bf16.msra.mxu0 0
        %3021 = vmatprep.subr.bf16.mxu0 0
        %3022 = vmatpush1.bf16.msra.mxu0 0
        %3023 = vmatprep.subr.bf16.mxu0 0
        %3024 = vmatpush1.bf16.msra.mxu0 0
        %3025 = vmatprep.subr.bf16.mxu0 0
        %3026 = vmatpush1.bf16.msra.mxu0 0
        %3027 = vmatprep.subr.bf16.mxu0 0
        %3028 = vmatpush1.bf16.msra.mxu0 0
        %3029 = vmatprep.subr.bf16.mxu0 0
        %3030 = vmatpush1.bf16.msra.mxu0 0
        %3031 = vmatprep.subr.bf16.mxu0 0
        %3032 = vmatpush1.bf16.msra.mxu0 0
        %3033 = vmatprep.subr.bf16.mxu0 0
        %3034 = vmatpush1.bf16.msra.mxu0 0
        %3035 = vmatprep.subr.bf16.mxu0 0
        %3036 = vmatpush1.bf16.msra.mxu0 0
        %3037 = vmatprep.subr.bf16.mxu0 0
        %3038 = vmatpush1.bf16.msra.mxu0 0
        %3039 = vmatprep.subr.bf16.mxu0 0
        %3040 = vmatpush1.bf16.msra.mxu0 0
        %3041 = vmatprep.subr.bf16.mxu0 0
        %3042 = vmatpush1.bf16.msra.mxu0 0
        %3043 = vmatprep.subr.bf16.mxu0 0
        %3044 = vmatpush1.bf16.msra.mxu0 0
        %3045 = vmatprep.subr.bf16.mxu0 0
        %3046 = vmatpush1.bf16.msra.mxu0 0
        %3047 = vmatprep.mubr.bf16.mxu0 0
        %3048 = vmatmul.mubr.bf16.gmra.mrb[0].mxu0 %v2895
        %v3049 = vpop.f32.mrb[0].mxu0
        %v3050 = vadd.f32 %v2953, %v3049
        %v3051 = vpop.f32.mrb[0].mxu0
        %v3052 = vpop.f32.mrb[0].mxu0
        %v3053 = vadd.f32 %v2956, %v3052
        %v3054 = vpop.f32.mrb[0].mxu0
        %3055 = vmatprep.mubr.bf16.mxu0 0
        %3056 = vmatmul.mubr.bf16.gmra.mrb[0].mxu0 %v2898
        %v3057 = vpop.f32.mrb[0].mxu0
        %v3058 = vadd.f32 %v2961, %v3057
        %v3059 = vpop.f32.mrb[0].mxu0
        %v3060 = vpop.f32.mrb[0].mxu0
        %v3061 = vadd.f32 %v2964, %v3060
        %v3062 = vpop.f32.mrb[0].mxu0
        %3063 = vmatprep.mubr.bf16.mxu0 0
        %3064 = vmatmul.mubr.bf16.gmra.mrb[0].mxu0 %v2901
        %v3065 = vpop.f32.mrb[0].mxu0
        %v3066 = vadd.f32 %v2969, %v3065
        %v3067 = vpop.f32.mrb[0].mxu0
        %v3068 = vpop.f32.mrb[0].mxu0
        %v3069 = vadd.f32 %v2972, %v3068
        %v3070 = vpop.f32.mrb[0].mxu0
        %3071 = vmatprep.mubr.bf16.mxu0 0
        %3072 = vmatmul.mubr.bf16.gmra.mrb[0].mxu0 %v2904
        %v3073 = vpop.f32.mrb[0].mxu0
        %v3074 = vadd.f32 %v2977, %v3073
        %v3075 = vpop.f32.mrb[0].mxu0
        %v3076 = vpop.f32.mrb[0].mxu0
        %v3077 = vadd.f32 %v2980, %v3076
        %v3078 = vpop.f32.mrb[0].mxu0
        %3079 = vmatprep.mubr.bf16.mxu0 0
        %3080 = vmatmul.mubr.bf16.gmra.mrb[0].mxu0 %v2907
        %v3081 = vpop.f32.mrb[0].mxu0
        %v3082 = vadd.f32 %v2985, %v3081
        %v3083 = vpop.f32.mrb[0].mxu0
        %v3084 = vpop.f32.mrb[0].mxu0
        %v3085 = vadd.f32 %v2988, %v3084
        %v3086 = vpop.f32.mrb[0].mxu0
        %3087 = vmatprep.mubr.bf16.mxu0 0
        %3088 = vmatmul.mubr.bf16.gmra.mrb[0].mxu0 %v2910
        %v3089 = vpop.f32.mrb[0].mxu0
        %v3090 = vadd.f32 %v2993, %v3089
        %v3091 = vpop.f32.mrb[0].mxu0
        %v3092 = vpop.f32.mrb[0].mxu0
        %v3093 = vadd.f32 %v2996, %v3092
        %v3094 = vpop.f32.mrb[0].mxu0
        %3095 = vmatprep.mubr.bf16.mxu0 0
        %3096 = vmatmul.mubr.bf16.gmra.mrb[0].mxu0 %v2913
        %v3097 = vpop.f32.mrb[0].mxu0
        %v3098 = vadd.f32 %v3001, %v3097
        %v3099 = vpop.f32.mrb[0].mxu0
        %v3100 = vpop.f32.mrb[0].mxu0
        %v3101 = vadd.f32 %v3004, %v3100
        %v3102 = vpop.f32.mrb[0].mxu0
        %3103 = vmatprep.mubr.bf16.mxu0 0
        %3104 = vmatmul.mubr.bf16.gmra.mrb[0].mxu0 %v2916
        %v3105 = vpop.f32.mrb[0].mxu0
        %v3106 = vadd.f32 %v3009, %v3105
        %v3107 = vpop.f32.mrb[0].mxu0
        %v3108 = vpop.f32.mrb[0].mxu0
        %v3109 = vadd.f32 %v3012, %v3108
        %v3110 = vpop.f32.mrb[0].mxu0
        %3111 = vdwg.mxu0
        %3128 = vrot.lane.b32.xlu0 %v3050, 64
        %v3129 = vpop.permute.xlu0 %3128
        %3130 = vrot.lane.b32.xlu0 %v3053, 64
        %v3131 = vpop.permute.xlu0 %3130
        %3132 = vrot.lane.b32.xlu0 %v3058, 64
        %v3133 = vpop.permute.xlu0 %3132
        %3134 = vrot.lane.b32.xlu0 %v3061, 64
        %v3135 = vpop.permute.xlu0 %3134
        %3136 = vrot.lane.b32.xlu0 %v3066, 64
        %v3137 = vpop.permute.xlu0 %3136
        %3138 = vrot.lane.b32.xlu0 %v3069, 64
        %v3139 = vpop.permute.xlu0 %3138
        %3140 = vrot.lane.b32.xlu0 %v3074, 64
        %v3141 = vpop.permute.xlu0 %3140
        %3142 = vrot.lane.b32.xlu0 %v3077, 64
        %v3143 = vpop.permute.xlu0 %3142
        %3144 = vrot.lane.b32.xlu0 %v3082, 64
        %v3145 = vpop.permute.xlu0 %3144
        %3146 = vrot.lane.b32.xlu0 %v3085, 64
        %v3147 = vpop.permute.xlu0 %3146
        %3148 = vrot.lane.b32.xlu0 %v3090, 64
        %v3149 = vpop.permute.xlu0 %3148
        %3150 = vrot.lane.b32.xlu0 %v3093, 64
        %v3151 = vpop.permute.xlu0 %3150
        %3152 = vrot.lane.b32.xlu0 %v3098, 64
        %v3153 = vpop.permute.xlu0 %3152
        %3154 = vrot.lane.b32.xlu0 %v3101, 64
        %v3155 = vpop.permute.xlu0 %3154
        %3156 = vrot.lane.b32.xlu0 %v3106, 64
        %v3157 = vpop.permute.xlu0 %3156
        %3158 = vrot.lane.b32.xlu0 %v3109, 64
        %v3159 = vpop.permute.xlu0 %3158
        %v3176 = vadd.f32 %v1569, %v3129
        %v3177 = vadd.f32 %v1572, %v3131
        %v3178 = vadd.f32 %v1577, %v3133
        %v3179 = vadd.f32 %v1580, %v3135
        %v3180 = vadd.f32 %v1585, %v3137
        %v3181 = vadd.f32 %v1588, %v3139
        %v3182 = vadd.f32 %v1593, %v3141
        %v3183 = vadd.f32 %v1596, %v3143
        %v3184 = vadd.f32 %v1601, %v3145
        %v3185 = vadd.f32 %v1604, %v3147
        %v3186 = vadd.f32 %v1609, %v3149
        %v3187 = vadd.f32 %v1612, %v3151
        %v3188 = vadd.f32 %v1617, %v3153
        %v3189 = vadd.f32 %v1620, %v3155
        %v3190 = vadd.f32 %v1625, %v3157
        %v3191 = vadd.f32 %v1628, %v3159
        %v3192 = vtanh.pop %v3176
        %v3193 = vtanh.pop %v3177
        %v3194 = vtanh.pop %v3178
        %v3195 = vtanh.pop %v3179
        %v3196 = vtanh.pop %v3180
        %v3197 = vtanh.pop %v3181
        %v3198 = vtanh.pop %v3182
        %v3199 = vtanh.pop %v3183
        %v3200 = vtanh.pop %v3184
        %v3201 = vtanh.pop %v3185
        %v3202 = vtanh.pop %v3186
        %v3203 = vtanh.pop %v3187
        %v3204 = vtanh.pop %v3188
        %v3205 = vtanh.pop %v3189
        %v3206 = vtanh.pop %v3190
        %v3207 = vtanh.pop %v3191
        %3208 = vrot.lane.b32.xlu0 %v1761, 64
        %v3209 = vpop.permute.xlu0 %3208
        %3210 = vrot.lane.b32.xlu0 %v1762, 64
        %v3211 = vpop.permute.xlu0 %3210
        %3212 = vrot.lane.b32.xlu0 %v1763, 64
        %v3213 = vpop.permute.xlu0 %3212
        %3214 = vrot.lane.b32.xlu0 %v1764, 64
        %v3215 = vpop.permute.xlu0 %3214
        %3216 = vrot.lane.b32.xlu0 %v1765, 64
        %v3217 = vpop.permute.xlu0 %3216
        %3218 = vrot.lane.b32.xlu0 %v1766, 64
        %v3219 = vpop.permute.xlu0 %3218
        %3220 = vrot.lane.b32.xlu0 %v1767, 64
        %v3221 = vpop.permute.xlu0 %3220
        %3222 = vrot.lane.b32.xlu0 %v1768, 64
        %v3223 = vpop.permute.xlu0 %3222
        %3224 = vrot.lane.b32.xlu0 %v1769, 64
        %v3225 = vpop.permute.xlu0 %3224
        %3226 = vrot.lane.b32.xlu0 %v1770, 64
        %v3227 = vpop.permute.xlu0 %3226
        %3228 = vrot.lane.b32.xlu0 %v1771, 64
        %v3229 = vpop.permute.xlu0 %3228
        %3230 = vrot.lane.b32.xlu0 %v1772, 64
        %v3231 = vpop.permute.xlu0 %3230
        %3232 = vrot.lane.b32.xlu0 %v1773, 64
        %v3233 = vpop.permute.xlu0 %3232
        %3234 = vrot.lane.b32.xlu0 %v1774, 64
        %v3235 = vpop.permute.xlu0 %3234
        %3236 = vrot.lane.b32.xlu0 %v1775, 64
        %v3237 = vpop.permute.xlu0 %3236
        %3238 = vrot.lane.b32.xlu0 %v1776, 64
        %v3239 = vpop.permute.xlu0 %3238
        %v3256 = vsub.f32 %v3192, %v3209
        %v3257 = vsub.f32 %v3193, %v3211
        %v3258 = vsub.f32 %v3194, %v3213
        %v3259 = vsub.f32 %v3195, %v3215
        %v3260 = vsub.f32 %v3196, %v3217
        %v3261 = vsub.f32 %v3197, %v3219
        %v3262 = vsub.f32 %v3198, %v3221
        %v3263 = vsub.f32 %v3199, %v3223
        %v3264 = vsub.f32 %v3200, %v3225
        %v3265 = vsub.f32 %v3201, %v3227
        %v3266 = vsub.f32 %v3202, %v3229
        %v3267 = vsub.f32 %v3203, %v3231
        %v3268 = vsub.f32 %v3204, %v3233
        %v3269 = vsub.f32 %v3205, %v3235
        %v3270 = vsub.f32 %v3206, %v3237
        %v3271 = vsub.f32 %v3207, %v3239
        %3288 = vrot.lane.b32.xlu0 %v3256, 64
        %v3289 = vpop.permute.xlu0 %3288
        %3290 = vrot.lane.b32.xlu0 %v3257, 64
        %v3291 = vpop.permute.xlu0 %3290
        %3292 = vrot.lane.b32.xlu0 %v3258, 64
        %v3293 = vpop.permute.xlu0 %3292
        %3294 = vrot.lane.b32.xlu0 %v3259, 64
        %v3295 = vpop.permute.xlu0 %3294
        %3296 = vrot.lane.b32.xlu0 %v3260, 64
        %v3297 = vpop.permute.xlu0 %3296
        %3298 = vrot.lane.b32.xlu0 %v3261, 64
        %v3299 = vpop.permute.xlu0 %3298
        %3300 = vrot.lane.b32.xlu0 %v3262, 64
        %v3301 = vpop.permute.xlu0 %3300
        %3302 = vrot.lane.b32.xlu0 %v3263, 64
        %v3303 = vpop.permute.xlu0 %3302
        %3304 = vrot.lane.b32.xlu0 %v3264, 64
        %v3305 = vpop.permute.xlu0 %3304
        %3306 = vrot.lane.b32.xlu0 %v3265, 64
        %v3307 = vpop.permute.xlu0 %3306
        %3308 = vrot.lane.b32.xlu0 %v3266, 64
        %v3309 = vpop.permute.xlu0 %3308
        %3310 = vrot.lane.b32.xlu0 %v3267, 64
        %v3311 = vpop.permute.xlu0 %3310
        %3312 = vrot.lane.b32.xlu0 %v3268, 64
        %v3313 = vpop.permute.xlu0 %3312
        %3314 = vrot.lane.b32.xlu0 %v3269, 64
        %v3315 = vpop.permute.xlu0 %3314
        %3316 = vrot.lane.b32.xlu0 %v3270, 64
        %v3317 = vpop.permute.xlu0 %3316
        %3318 = vrot.lane.b32.xlu0 %v3271, 64
        %v3319 = vpop.permute.xlu0 %3318
        %v3336 = vmul.f32 %v1724, %v3289
        %v3337 = vmul.f32 %v1726, %v3291
        %v3338 = vmul.f32 %v1728, %v3293
        %v3339 = vmul.f32 %v1730, %v3295
        %v3340 = vmul.f32 %v1732, %v3297
        %v3341 = vmul.f32 %v1734, %v3299
        %v3342 = vmul.f32 %v1736, %v3301
        %v3343 = vmul.f32 %v1738, %v3303
        %v3344 = vmul.f32 %v1740, %v3305
        %v3345 = vmul.f32 %v1742, %v3307
        %v3346 = vmul.f32 %v1744, %v3309
        %v3347 = vmul.f32 %v1746, %v3311
        %v3348 = vmul.f32 %v1748, %v3313
        %v3349 = vmul.f32 %v1750, %v3315
        %v3350 = vmul.f32 %v1752, %v3317
        %v3351 = vmul.f32 %v1754, %v3319
        %v3352 = vadd.f32 %v1761, %v3336
        %v3353 = vadd.f32 %v1762, %v3337
        %v3354 = vadd.f32 %v1763, %v3338
        %v3355 = vadd.f32 %v1764, %v3339
        %v3356 = vadd.f32 %v1765, %v3340
        %v3357 = vadd.f32 %v1766, %v3341
        %v3358 = vadd.f32 %v1767, %v3342
        %v3359 = vadd.f32 %v1768, %v3343
        %v3360 = vadd.f32 %v1769, %v3344
        %v3361 = vadd.f32 %v1770, %v3345
        %v3362 = vadd.f32 %v1771, %v3346
        %v3363 = vadd.f32 %v1772, %v3347
        %v3364 = vadd.f32 %v1773, %v3348
        %v3365 = vadd.f32 %v1774, %v3349
        %v3366 = vadd.f32 %v1775, %v3350
        %v3367 = vadd.f32 %v1776, %v3351
        %3368 = vst.msk [vmem:[%s266] sm:$0xff] %vm1980, %v3352
        %3369 = vst.msk [vmem:[%s266 + $0x8] sm:$0xff] %vm1980, %v3353
        %3370 = vst.msk [vmem:[%s266 + $0x10] sm:$0xff] %vm1980, %v3354
        %3371 = vst.msk [vmem:[%s266 + $0x18] sm:$0xff] %vm1980, %v3355
        %3372 = vst.msk [vmem:[%s266 + $0x20] sm:$0xff] %vm1980, %v3356
        %3373 = vst.msk [vmem:[%s266 + $0x28] sm:$0xff] %vm1980, %v3357
        %3374 = vst.msk [vmem:[%s266 + $0x30] sm:$0xff] %vm1980, %v3358
        %3375 = vst.msk [vmem:[%s266 + $0x38] sm:$0xff] %vm1980, %v3359
        %3376 = vst.msk [vmem:[%s266 + $0x40] sm:$0xff] %vm1980, %v3360
        %3377 = vst.msk [vmem:[%s266 + $0x48] sm:$0xff] %vm1980, %v3361
        %3378 = vst.msk [vmem:[%s266 + $0x50] sm:$0xff] %vm1980, %v3362
        %3379 = vst.msk [vmem:[%s266 + $0x58] sm:$0xff] %vm1980, %v3363
        %3380 = vst.msk [vmem:[%s266 + $0x60] sm:$0xff] %vm1980, %v3364
        %3381 = vst.msk [vmem:[%s266 + $0x68] sm:$0xff] %vm1980, %v3365
        %3382 = vst.msk [vmem:[%s266 + $0x70] sm:$0xff] %vm1980, %v3366
        %3383 = vst.msk [vmem:[%s266 + $0x78] sm:$0xff] %vm1980, %v3367
        %s3384 = sand.u32 %s160, 1
        %s3385 = scalar_lea.sflag [#allocation5], %s3384
        %s3386 = sand.u32 %s160, 1
        %s3387 = smul.addr %s3386, 128
        %s3388 = scalar_lea.vmem [#allocation4], %s3387
        // Predicated region
        $region41: #{convgru_base.1} parent=39 // pred_check
          %p3389 = pneg %p170
        $region42: #{convgru_base.1} parent=39 // pred_check_branch
          %3391 = sbr.rel (%p3389) target = $region44
        $region43: #{convgru_base.1} parent=39 // pred_region
          %s3392 = smul.u32 8, %s24
          %s3394 = ssub.s32 2048, 2048
          %3395 = vsyncadd %s3385, %s3394
          %s3396 = smul.addr %s3392, 2
          %s3397 = smul.addr %s23, 32
          %s3398 = sadd.s32 %s3396, %s3397
          %s3399 = smul.addr %s3398, 128
          %s3400 = scalar_lea.hbm %s5, %s3399
          %s3401 = sshll.u32 %s3388, 4
          %s3402 = int_to_ptr.vmem [resolvable:$true] %s3401
          %3407 = dma.vmem_to_hbm [thread:$0]  %s3402, 2048, %s3400, %s3385, 128, 128, 8
        $region44: #{convgru_base.1} parent=39 // pred_fallthru
          _
      $region40: #{convgru_base.1} parent=5 // pred_fallthru
        _
      %p3408 = scmp.le.s32.totalorder 2, %s14
      // Predicated region
      $region45: #{convgru_base.1} parent=5 // pred_check
        %p3409 = pneg %p3408
      $region46: #{convgru_base.1} parent=5 // pred_check_branch
        %3411 = sbr.rel (%p3409) target = $region48
      $region47: #{convgru_base.1} parent=5 // pred_region
        %s3412 = ssub.s32 %s14, 2
        // Predicated region
        $region49: #{convgru_base.1} parent=47 // pred_check
          %p3413 = pneg %p176
        $region50: #{convgru_base.1} parent=47 // pred_check_branch
          %3415 = sbr.rel (%p3413) target = $region52
        $region51: #{convgru_base.1} parent=47 // pred_region
          %s3416 = sand.u32 %s161, 1
          %s3417 = scalar_lea.sflag [#allocation5], %s3416
          %s3418 = sand.u32 %s161, 1
          %s3419 = smul.addr %s3418, 128
          %s3420 = scalar_lea.vmem [#allocation4], %s3419
          %3421 = dma.done %s3417, 2048
        $region52: #{convgru_base.1} parent=47 // pred_fallthru
          _
      $region48: #{convgru_base.1} parent=5 // pred_fallthru
        _
    $region6: #{convgru_base.1} parent=1 // loop_footer
      %s18 = sadd.s32 1, %s14
    $region7: #{convgru_base.1} parent=1 // loop_footer_branch
      %13 = sbr.rel target = $region3
    $region8: #{convgru_base.1} parent=1 // loop_exit
      _
    %3422 = vsyncpa [#allocation5], 1
    %s3423 = scalar_lea.sflag [#allocation5], 1
    %3424 = vsyncpa %s3423, 1

</llo_original>
